<compile_context>
chip_gen: v5e
topology: v5e:2x2
jax: 0.10.0
libtpu: 0.0.40
codegen_flags: <defaults>
</compile_context>

<pallas_src>
import math
import numpy as np
import jax
import jax.numpy as jnp
from jax.experimental import pallas as pl
from jax.experimental.pallas import tpu as pltpu


# ---------------------------------------------------------------------------
# Clenshaw-Curtis quadrature constants (UMNN ParallelNeuralIntegral.integrate)
# ---------------------------------------------------------------------------
def compute_cc_weights(nb_steps):
    lam = np.arange(0, nb_steps + 1, 1).reshape(-1, 1)
    lam = np.cos((lam @ lam.T) * math.pi / nb_steps)
    lam[:, 0] = 0.5
    lam[:, -1] = 0.5 * lam[:, -1]
    lam = lam * 2.0 / nb_steps
    W = np.arange(0, nb_steps + 1, 1).reshape(-1, 1)
    W[np.arange(1, nb_steps + 1, 2)] = 0
    W = 2.0 / (1 - W ** 2)
    W[0] = 1
    W[np.arange(1, nb_steps + 1, 2)] = 0
    cc_weights = (lam.T @ W).astype(np.float32)                      # [S, 1]
    steps = np.cos(np.arange(0, nb_steps + 1, 1).reshape(-1, 1)
                   * math.pi / nb_steps).astype(np.float32)          # [S, 1]
    return cc_weights, steps


def _round_up(a, b):
    return ((a + b - 1) // b) * b


# ---------------------------------------------------------------------------
# Main kernel factory: one batch tile per grid step, all quadrature nodes in
# one shot.  Everything is kept transposed ([features, batch]) so the batch
# sits on the 128-lane axis; the node axis is folded into the lane axis
# (node-major, batch-minor) so L2/L3 are single shared-weight matmuls.
# ---------------------------------------------------------------------------
def _dplp_mnn_kernel_factory(S, TB, half_nodes, ccw):
    half_nodes = [float(v) for v in half_nodes]   # compile-time constants
    ccw = [float(v) for v in ccw]                 # compile-time constants

    def kernel(
        scal_ref,    # SMEM [4]  : bqq, bi3, offset, 0.5*exp(scaling)
        xT_ref,      # [D, TB]   : x^T batch tile (batch on lanes)
        wqq_ref,     # [1, D]    : pre_trained.qq weight row
        wi1x_ref,    # [H, 1]    : integrand L1 x-column weights
        bi1_ref,     # [H, 1]    : integrand L1 bias
        w2_ref,      # [H, H]    : integrand L2 weight (out, in)
        bi2_ref,     # [H, 1]    : integrand L2 bias
        w3_ref,      # [1, H]    : integrand L3 weight row
        o_ref,       # [1, TB]   : output row
        a1_ref,      # VMEM scratch [H, S*TB]
    ):
        bqq = scal_ref[0]
        bi3 = scal_ref[1]
        off = scal_ref[2]
        hscale = scal_ref[3]        # 0.5 * exp(scaling), folds the (xT-x0)/2

        # y^T = pre_trained(x)^T : one lane-dense row [1, TB].
        yT = jnp.dot(wqq_ref[...], xT_ref[...],
                     preferred_element_type=jnp.float32) + bqq

        # Integrand L1 for every node: a1[h, s*TB+b] = relu(w1x[h]*hn[s]*y[b] + b1[h]).
        # half_nodes[s] are literals -> each block is one scalar mul + one
        # broadcast FMA + ReLU into a 128-aligned lane slice of the scratch.
        wi1x = wi1x_ref[...]                     # [H, 1]
        bi1 = bi1_ref[...]                       # [H, 1]
        for s in range(S):
            a1_ref[:, s * TB:(s + 1) * TB] = jnp.maximum(
                wi1x * (yT * half_nodes[s]) + bi1, 0.0)

        # Integrand L2/L3: shared-weight matmuls, N = S*TB streaming (one MXU
        # weight push each instead of 2*S tiny matmuls).
        a2 = jnp.maximum(
            jnp.dot(w2_ref[...], a1_ref[...],
                    preferred_element_type=jnp.float32) + bi2_ref[...],
            0.0)                                                     # [H, S*TB]
        pre = jnp.dot(w3_ref[...], a2,
                      preferred_element_type=jnp.float32) + bi3      # [1, S*TB]

        # ELU + 1, with the exp argument clamped (no inf in the dead branch).
        g = jnp.where(pre > 0.0, pre,
                      jnp.exp(jnp.minimum(pre, 0.0)) - 1.0) + 1.0

        # Clenshaw-Curtis reduction over nodes: 128-aligned lane slices with
        # compile-time weights, accumulated into one lane-dense [1, TB] row.
        z = jnp.zeros((1, TB), jnp.float32)
        for s in range(S):
            z = z + ccw[s] * g[:, s * TB:(s + 1) * TB]

        # out = exp(scaling) * (y/2) * sum_s ccw[s]*g[s] + offset
        o_ref[...] = (yT * z * hscale + off).astype(o_ref.dtype)

    return kernel


# ---------------------------------------------------------------------------
# Tiny kernel for the trivial branch:  sum(pre_trained.qq.weight)
# ---------------------------------------------------------------------------
def _wsum_kernel(w_ref, o_ref):
    o_ref[...] = jnp.sum(w_ref[...], keepdims=True)


def _weight_sum(w):
    r = pl.pallas_call(
        _wsum_kernel,
        out_shape=jax.ShapeDtypeStruct((1, 1), jnp.float32),
    )(w)
    return r[0, 0]


# ---------------------------------------------------------------------------
# Wrapper: host-side constant folding + parameter plumbing + pallas_call
# ---------------------------------------------------------------------------
def dplp_mnn_forward(x, params, nb_steps=50, block_b=512):
    # Trivial branch of the PyTorch forward (static shape check at trace time).
    if x.shape[0] + x.shape[1] <= 2:
        return _weight_sum(params["wqq_t"])

    B, D = x.shape
    H = params["wi2_t"].shape[0]
    assert H % 8 == 0, "hidden width must be a multiple of 8"
    assert block_b % 128 == 0, "batch tile must be a multiple of 128 lanes"
    S = nb_steps + 1

    # ---- host-side constant folding (input-independent) --------------------
    # Scaling/offset head runs on h = 0*xout -> pure function of the params.
    t = jnp.maximum(params["b1"], 0.0)                       # relu(0 @ w1 + b1)
    t = jnp.maximum(t @ params["w2_t"] + params["b2"], 0.0)
    so = t @ params["w3_t"] + params["b3"]                   # [1, 2]
    offset = so[0, 0]
    half_scaling = 0.5 * jnp.exp(so[0, 1])                   # folds (xT-x0)/2

    ccw_np, steps_np = compute_cc_weights(nb_steps)
    half_nodes = (steps_np.reshape(-1) + 1.0) * 0.5          # numpy, compile-time

    scalars = jnp.stack(
        [params["bqq"][0, 0], params["bi3"][0, 0], offset, half_scaling]
    ).astype(jnp.float32)                                    # [4] -> SMEM

    # Small, lane-friendly weight operands (no per-node replication).
    wqq_r = params["wqq_t"].reshape(1, D).astype(jnp.float32)
    wi1x_c = params["wi1x"].reshape(H, 1).astype(jnp.float32)
    bi1_c = params["bi1"].reshape(H, 1).astype(jnp.float32)
    w2_o = params["wi2_t"].T.astype(jnp.float32)             # (out, in)
    bi2_c = params["bi2"].reshape(H, 1).astype(jnp.float32)
    w3_r = params["wi3_t"].reshape(1, H).astype(jnp.float32)

    # ---- batch tiling -------------------------------------------------------
    B128 = _round_up(B, 128)
    TB = min(block_b, B128)
    if B128 // TB < 2 and B128 >= 256:
        # keep >=2 independent tiles so v7x's two TensorCores both get work
        TB = max(128, _round_up(B128 // 2, 128))
    B_pad = _round_up(B128, TB)

    xT = x.T.astype(jnp.float32)                             # [D, B]
    if B_pad != B:
        xT = jnp.pad(xT, ((0, 0), (0, B_pad - B)))

    kernel = _dplp_mnn_kernel_factory(S, TB, half_nodes, ccw_np.reshape(-1))

    def cspec(shape):
        return pl.BlockSpec(shape, lambda i: (0,) * len(shape))  # grid-constant

    outT = pl.pallas_call(
        kernel,
        out_shape=jax.ShapeDtypeStruct((1, B_pad), jnp.float32),
        grid=(B_pad // TB,),
        in_specs=[
            pl.BlockSpec(memory_space=pltpu.MemorySpace.SMEM),   # scalars
            pl.BlockSpec((D, TB), lambda i: (0, i)),             # x^T tile
            cspec((1, D)),                                       # qq weight row
            cspec((H, 1)),                                       # wi1x column
            cspec((H, 1)),                                       # bi1 column
            cspec((H, H)),                                       # L2 weight
            cspec((H, 1)),                                       # bi2 column
            cspec((1, H)),                                       # L3 weight row
        ],
        out_specs=pl.BlockSpec((1, TB), lambda i: (0, i)),       # lane-dense out
        scratch_shapes=[pltpu.VMEM((H, S * TB), jnp.float32)],   # a1 staging
        compiler_params=pltpu.CompilerParams(
            # Batch tiles are independent; >=2 tiles shard across v7x's 2 TCs.
            dimension_semantics=("parallel",)),
    )(scalars, xT, wqq_r, wi1x_c, bi1_c, w2_o, bi2_c, w3_r)

    return outT[0, :B].reshape(B, 1)


# ---------------------------------------------------------------------------
# Pure-JAX reference (mirrors the PyTorch semantics) for a correctness check.
# ---------------------------------------------------------------------------
def reference_forward(x, p, nb_steps=50):
    if x.shape[0] + x.shape[1] <= 2:
        return jnp.sum(p["wqq_t"])
    ccw_np, steps_np = compute_cc_weights(nb_steps)
    ccw = jnp.asarray(ccw_np.reshape(1, -1))
    steps = jnp.asarray(steps_np.reshape(1, -1))

    y = x @ p["wqq_t"] + p["bqq"]
    h = 0.0 * y
    t = jnp.maximum(h @ p["w1_t"] + p["b1"], 0.0)
    t = jnp.maximum(t @ p["w2_t"] + p["b2"], 0.0)
    so = t @ p["w3_t"] + p["b3"]
    offset, scaling = so[:, 0:1], jnp.exp(so[:, 1:2])

    X = y * (steps + 1.0) * 0.5                            # [B, S]
    Hb = jnp.broadcast_to(h, X.shape)
    wi1 = jnp.concatenate([p["wi1x"], p["wi1h"]], axis=0)  # [2, H]
    inp = jnp.stack([X, Hb], axis=-1).reshape(-1, 2)       # [B*S, 2]
    a = jnp.maximum(inp @ wi1 + p["bi1"], 0.0)
    a = jnp.maximum(a @ p["wi2_t"] + p["bi2"], 0.0)
    g = a @ p["wi3_t"] + p["bi3"]
    g = jnp.where(g > 0.0, g, jnp.exp(g) - 1.0) + 1.0
    g = g.reshape(x.shape[0], -1)                          # [B, S]
    z = jnp.sum(g * ccw, axis=1, keepdims=True) * (y * 0.5)
    return scaling * z + offset


if __name__ == "__main__":
    B, D, H, NB_STEPS = 16, 16, 32, 50    # in_d=2, hidden_layers=[32, 32]

    key = jax.random.PRNGKey(0)
    keys = jax.random.split(key, 8)

    def lin(k, fin, fout):
        kw, kb = jax.random.split(k)
        w = (jax.random.normal(kw, (fin, fout), jnp.float32) / np.sqrt(fin)).astype(jnp.float32)
        b = (0.1 * jax.random.normal(kb, (1, fout), jnp.float32)).astype(jnp.float32)
        return w, b

    wqq_t, bqq = lin(keys[0], D, 1)       # pre_trained.qq : Linear(D, 1)
    w1_t, b1 = lin(keys[1], 1, H)         # MNN scaling/offset net: [1, H, H, 2]
    w2_t, b2 = lin(keys[2], H, H)
    w3_t, b3 = lin(keys[3], H, 2)
    wi1_t, bi1 = lin(keys[4], 2, H)       # IntegrandNN: [2, H, H, 1]
    wi2_t, bi2 = lin(keys[5], H, H)
    wi3_t, bi3 = lin(keys[6], H, 1)

    params = dict(
        wqq_t=wqq_t, bqq=bqq,
        w1_t=w1_t, b1=b1, w2_t=w2_t, b2=b2, w3_t=w3_t, b3=b3,
        wi1x=wi1_t[0:1, :], wi1h=wi1_t[1:2, :], bi1=bi1,
        wi2_t=wi2_t, bi2=bi2, wi3_t=wi3_t, bi3=bi3,
    )

    x = jax.random.normal(keys[7], (B, D), jnp.float32)

    out = jax.block_until_ready(dplp_mnn_forward(x, params, nb_steps=NB_STEPS))
    ref = reference_forward(x, params, nb_steps=NB_STEPS)
    np.testing.assert_allclose(np.asarray(out), np.asarray(ref), rtol=2e-3, atol=2e-3)

    # Exercise the trivial branch (x.shape[0] + x.shape[1] <= 2) once.
    tiny = jnp.zeros((1, 1), jnp.float32)
    tiny_out = jax.block_until_ready(dplp_mnn_forward(tiny, params))
    np.testing.assert_allclose(np.asarray(tiny_out), np.asarray(jnp.sum(wqq_t)),
                               rtol=1e-5, atol=1e-5)

    print("KERNEL_OK")
</pallas_src>

<mosaic_0001>
module attributes {stable_mosaic.version = 11 : i64} {
  func.func @kernel(%arg0: i32, %arg1: memref<4xf32, #tpu.memory_space<smem>>, %arg2: memref<16x128xf32, #tpu.memory_space<vmem>>, %arg3: memref<1x16xf32, #tpu.memory_space<vmem>>, %arg4: memref<32x1xf32, #tpu.memory_space<vmem>>, %arg5: memref<32x1xf32, #tpu.memory_space<vmem>>, %arg6: memref<32x32xf32, #tpu.memory_space<vmem>>, %arg7: memref<32x1xf32, #tpu.memory_space<vmem>>, %arg8: memref<1x32xf32, #tpu.memory_space<vmem>>, %arg9: memref<1x128xf32, #tpu.memory_space<vmem>>, %arg10: memref<32x6528xf32, #tpu.memory_space<vmem>>) attributes {dimension_semantics = [#tpu.dimension_semantics<parallel>], iteration_bounds = array<i64: 1>, scalar_prefetch = 0 : i64, scratch_operands = 1 : i64, tpu.core_type = #tpu.core_type<tc>, window_params = [{transform_indices = @transform_0, window_bounds = array<i64: 4>}, {transform_indices = @transform_1, window_bounds = array<i64: 16, 128>}, {pipeline_mode = #tpu.pipeline_mode<synchronous>, transform_indices = @transform_2, window_bounds = array<i64: 1, 16>}, {pipeline_mode = #tpu.pipeline_mode<synchronous>, transform_indices = @transform_3, window_bounds = array<i64: 32, 1>}, {pipeline_mode = #tpu.pipeline_mode<synchronous>, transform_indices = @transform_4, window_bounds = array<i64: 32, 1>}, {pipeline_mode = #tpu.pipeline_mode<synchronous>, transform_indices = @transform_5, window_bounds = array<i64: 32, 32>}, {pipeline_mode = #tpu.pipeline_mode<synchronous>, transform_indices = @transform_6, window_bounds = array<i64: 32, 1>}, {pipeline_mode = #tpu.pipeline_mode<synchronous>, transform_indices = @transform_7, window_bounds = array<i64: 1, 32>}, {transform_indices = @transform_8, window_bounds = array<i64: 1, 128>}]} {
    %c0 = arith.constant 0 : index
    %0 = memref.load %arg1[%c0] : memref<4xf32, #tpu.memory_space<smem>>
    %c1 = arith.constant 1 : index
    %1 = memref.load %arg1[%c1] : memref<4xf32, #tpu.memory_space<smem>>
    %c2 = arith.constant 2 : index
    %2 = memref.load %arg1[%c2] : memref<4xf32, #tpu.memory_space<smem>>
    %c3 = arith.constant 3 : index
    %3 = memref.load %arg1[%c3] : memref<4xf32, #tpu.memory_space<smem>>
    %c0_0 = arith.constant 0 : index
    %c0_1 = arith.constant 0 : index
    %4 = vector.load %arg3[%c0_0, %c0_1] : memref<1x16xf32, #tpu.memory_space<vmem>>, vector<1x16xf32>
    %c0_2 = arith.constant 0 : index
    %c0_3 = arith.constant 0 : index
    %5 = vector.load %arg2[%c0_2, %c0_3] : memref<16x128xf32, #tpu.memory_space<vmem>>, vector<16x128xf32>
    %cst = arith.constant dense<0.000000e+00> : vector<1x128xf32>
    %6 = tpu.matmul %4, %5, %cst {dimension_numbers = #tpu.dot_dimension_numbers<[1], [0], [0], [1], [0, 0, 1, 1], [], []>} : vector<1x16xf32>, vector<16x128xf32>, vector<1x128xf32> -> vector<1x128xf32>
    %7 = vector.broadcast %0 : f32 to vector<1x128xf32>
    %8 = arith.addf %6, %7 : vector<1x128xf32>
    %c0_4 = arith.constant 0 : index
    %c0_5 = arith.constant 0 : index
    %9 = vector.load %arg4[%c0_4, %c0_5] : memref<32x1xf32, #tpu.memory_space<vmem>>, vector<32x1xf32>
    %c0_6 = arith.constant 0 : index
    %c0_7 = arith.constant 0 : index
    %10 = vector.load %arg5[%c0_6, %c0_7] : memref<32x1xf32, #tpu.memory_space<vmem>>, vector<32x1xf32>
    %cst_8 = arith.constant 1.000000e+00 : f32
    %11 = vector.broadcast %cst_8 : f32 to vector<1x128xf32>
    %12 = arith.mulf %8, %11 : vector<1x128xf32>
    %13 = vector.broadcast %9 : vector<32x1xf32> to vector<32x128xf32>
    %14 = vector.broadcast %12 : vector<1x128xf32> to vector<32x128xf32>
    %15 = arith.mulf %13, %14 : vector<32x128xf32>
    %16 = vector.broadcast %10 : vector<32x1xf32> to vector<32x128xf32>
    %17 = arith.addf %15, %16 : vector<32x128xf32>
    %cst_9 = arith.constant 0.000000e+00 : f32
    %18 = vector.broadcast %cst_9 : f32 to vector<32x128xf32>
    %19 = arith.maximumf %17, %18 : vector<32x128xf32>
    %c0_10 = arith.constant 0 : index
    %c0_11 = arith.constant 0 : index
    %20 = vector.load %arg10[%c0_10, %c0_11] : memref<32x6528xf32, #tpu.memory_space<vmem>>, vector<32x128xf32>
    tpu.vector_store %arg10[%c0_10, %c0_11], %19 {strides = array<i32>} : memref<32x6528xf32, #tpu.memory_space<vmem>>, vector<32x128xf32>,
    %cst_12 = arith.constant 0.999013364 : f32
    %21 = vector.broadcast %cst_12 : f32 to vector<1x128xf32>
    %22 = arith.mulf %8, %21 : vector<1x128xf32>
    %23 = vector.broadcast %9 : vector<32x1xf32> to vector<32x128xf32>
    %24 = vector.broadcast %22 : vector<1x128xf32> to vector<32x128xf32>
    %25 = arith.mulf %23, %24 : vector<32x128xf32>
    %26 = vector.broadcast %10 : vector<32x1xf32> to vector<32x128xf32>
    %27 = arith.addf %25, %26 : vector<32x128xf32>
    %cst_13 = arith.constant 0.000000e+00 : f32
    %28 = vector.broadcast %cst_13 : f32 to vector<32x128xf32>
    %29 = arith.maximumf %27, %28 : vector<32x128xf32>
    %c0_14 = arith.constant 0 : index
    %c128 = arith.constant 128 : index
    %30 = vector.load %arg10[%c0_14, %c128] : memref<32x6528xf32, #tpu.memory_space<vmem>>, vector<32x128xf32>
    tpu.vector_store %arg10[%c0_14, %c128], %29 {strides = array<i32>} : memref<32x6528xf32, #tpu.memory_space<vmem>>, vector<32x128xf32>,
    %cst_15 = arith.constant 0.996057391 : f32
    %31 = vector.broadcast %cst_15 : f32 to vector<1x128xf32>
    %32 = arith.mulf %8, %31 : vector<1x128xf32>
    %33 = vector.broadcast %9 : vector<32x1xf32> to vector<32x128xf32>
    %34 = vector.broadcast %32 : vector<1x128xf32> to vector<32x128xf32>
    %35 = arith.mulf %33, %34 : vector<32x128xf32>
    %36 = vector.broadcast %10 : vector<32x1xf32> to vector<32x128xf32>
    %37 = arith.addf %35, %36 : vector<32x128xf32>
    %cst_16 = arith.constant 0.000000e+00 : f32
    %38 = vector.broadcast %cst_16 : f32 to vector<32x128xf32>
    %39 = arith.maximumf %37, %38 : vector<32x128xf32>
    %c0_17 = arith.constant 0 : index
    %c256 = arith.constant 256 : index
    %40 = vector.load %arg10[%c0_17, %c256] : memref<32x6528xf32, #tpu.memory_space<vmem>>, vector<32x128xf32>
    tpu.vector_store %arg10[%c0_17, %c256], %39 {strides = array<i32>} : memref<32x6528xf32, #tpu.memory_space<vmem>>, vector<32x128xf32>,
    %cst_18 = arith.constant 0.991143584 : f32
    %41 = vector.broadcast %cst_18 : f32 to vector<1x128xf32>
    %42 = arith.mulf %8, %41 : vector<1x128xf32>
    %43 = vector.broadcast %9 : vector<32x1xf32> to vector<32x128xf32>
    %44 = vector.broadcast %42 : vector<1x128xf32> to vector<32x128xf32>
    %45 = arith.mulf %43, %44 : vector<32x128xf32>
    %46 = vector.broadcast %10 : vector<32x1xf32> to vector<32x128xf32>
    %47 = arith.addf %45, %46 : vector<32x128xf32>
    %cst_19 = arith.constant 0.000000e+00 : f32
    %48 = vector.broadcast %cst_19 : f32 to vector<32x128xf32>
    %49 = arith.maximumf %47, %48 : vector<32x128xf32>
    %c0_20 = arith.constant 0 : index
    %c384 = arith.constant 384 : index
    %50 = vector.load %arg10[%c0_20, %c384] : memref<32x6528xf32, #tpu.memory_space<vmem>>, vector<32x128xf32>
    tpu.vector_store %arg10[%c0_20, %c384], %49 {strides = array<i32>} : memref<32x6528xf32, #tpu.memory_space<vmem>>, vector<32x128xf32>,
    %cst_21 = arith.constant 0.984291553 : f32
    %51 = vector.broadcast %cst_21 : f32 to vector<1x128xf32>
    %52 = arith.mulf %8, %51 : vector<1x128xf32>
    %53 = vector.broadcast %9 : vector<32x1xf32> to vector<32x128xf32>
    %54 = vector.broadcast %52 : vector<1x128xf32> to vector<32x128xf32>
    %55 = arith.mulf %53, %54 : vector<32x128xf32>
    %56 = vector.broadcast %10 : vector<32x1xf32> to vector<32x128xf32>
    %57 = arith.addf %55, %56 : vector<32x128xf32>
    %cst_22 = arith.constant 0.000000e+00 : f32
    %58 = vector.broadcast %cst_22 : f32 to vector<32x128xf32>
    %59 = arith.maximumf %57, %58 : vector<32x128xf32>
    %c0_23 = arith.constant 0 : index
    %c512 = arith.constant 512 : index
    %60 = vector.load %arg10[%c0_23, %c512] : memref<32x6528xf32, #tpu.memory_space<vmem>>, vector<32x128xf32>
    tpu.vector_store %arg10[%c0_23, %c512], %59 {strides = array<i32>} : memref<32x6528xf32, #tpu.memory_space<vmem>>, vector<32x128xf32>,
    %cst_24 = arith.constant 0.97552824 : f32
    %61 = vector.broadcast %cst_24 : f32 to vector<1x128xf32>
    %62 = arith.mulf %8, %61 : vector<1x128xf32>
    %63 = vector.broadcast %9 : vector<32x1xf32> to vector<32x128xf32>
    %64 = vector.broadcast %62 : vector<1x128xf32> to vector<32x128xf32>
    %65 = arith.mulf %63, %64 : vector<32x128xf32>
    %66 = vector.broadcast %10 : vector<32x1xf32> to vector<32x128xf32>
    %67 = arith.addf %65, %66 : vector<32x128xf32>
    %cst_25 = arith.constant 0.000000e+00 : f32
    %68 = vector.broadcast %cst_25 : f32 to vector<32x128xf32>
    %69 = arith.maximumf %67, %68 : vector<32x128xf32>
    %c0_26 = arith.constant 0 : index
    %c640 = arith.constant 640 : index
    %70 = vector.load %arg10[%c0_26, %c640] : memref<32x6528xf32, #tpu.memory_space<vmem>>, vector<32x128xf32>
    tpu.vector_store %arg10[%c0_26, %c640], %69 {strides = array<i32>} : memref<32x6528xf32, #tpu.memory_space<vmem>>, vector<32x128xf32>,
    %cst_27 = arith.constant 0.964888215 : f32
    %71 = vector.broadcast %cst_27 : f32 to vector<1x128xf32>
    %72 = arith.mulf %8, %71 : vector<1x128xf32>
    %73 = vector.broadcast %9 : vector<32x1xf32> to vector<32x128xf32>
    %74 = vector.broadcast %72 : vector<1x128xf32> to vector<32x128xf32>
    %75 = arith.mulf %73, %74 : vector<32x128xf32>
    %76 = vector.broadcast %10 : vector<32x1xf32> to vector<32x128xf32>
    %77 = arith.addf %75, %76 : vector<32x128xf32>
    %cst_28 = arith.constant 0.000000e+00 : f32
    %78 = vector.broadcast %cst_28 : f32 to vector<32x128xf32>
    %79 = arith.maximumf %77, %78 : vector<32x128xf32>
    %c0_29 = arith.constant 0 : index
    %c768 = arith.constant 768 : index
    %80 = vector.load %arg10[%c0_29, %c768] : memref<32x6528xf32, #tpu.memory_space<vmem>>, vector<32x128xf32>
    tpu.vector_store %arg10[%c0_29, %c768], %79 {strides = array<i32>} : memref<32x6528xf32, #tpu.memory_space<vmem>>, vector<32x128xf32>,
    %cst_30 = arith.constant 0.952413558 : f32
    %81 = vector.broadcast %cst_30 : f32 to vector<1x128xf32>
    %82 = arith.mulf %8, %81 : vector<1x128xf32>
    %83 = vector.broadcast %9 : vector<32x1xf32> to vector<32x128xf32>
    %84 = vector.broadcast %82 : vector<1x128xf32> to vector<32x128xf32>
    %85 = arith.mulf %83, %84 : vector<32x128xf32>
    %86 = vector.broadcast %10 : vector<32x1xf32> to vector<32x128xf32>
    %87 = arith.addf %85, %86 : vector<32x128xf32>
    %cst_31 = arith.constant 0.000000e+00 : f32
    %88 = vector.broadcast %cst_31 : f32 to vector<32x128xf32>
    %89 = arith.maximumf %87, %88 : vector<32x128xf32>
    %c0_32 = arith.constant 0 : index
    %c896 = arith.constant 896 : index
    %90 = vector.load %arg10[%c0_32, %c896] : memref<32x6528xf32, #tpu.memory_space<vmem>>, vector<32x128xf32>
    tpu.vector_store %arg10[%c0_32, %c896], %89 {strides = array<i32>} : memref<32x6528xf32, #tpu.memory_space<vmem>>, vector<32x128xf32>,
    %cst_33 = arith.constant 0.938153326 : f32
    %91 = vector.broadcast %cst_33 : f32 to vector<1x128xf32>
    %92 = arith.mulf %8, %91 : vector<1x128xf32>
    %93 = vector.broadcast %9 : vector<32x1xf32> to vector<32x128xf32>
    %94 = vector.broadcast %92 : vector<1x128xf32> to vector<32x128xf32>
    %95 = arith.mulf %93, %94 : vector<32x128xf32>
    %96 = vector.broadcast %10 : vector<32x1xf32> to vector<32x128xf32>
    %97 = arith.addf %95, %96 : vector<32x128xf32>
    %cst_34 = arith.constant 0.000000e+00 : f32
    %98 = vector.broadcast %cst_34 : f32 to vector<32x128xf32>
    %99 = arith.maximumf %97, %98 : vector<32x128xf32>
    %c0_35 = arith.constant 0 : index
    %c1024 = arith.constant 1024 : index
    %100 = vector.load %arg10[%c0_35, %c1024] : memref<32x6528xf32, #tpu.memory_space<vmem>>, vector<32x128xf32>
    tpu.vector_store %arg10[%c0_35, %c1024], %99 {strides = array<i32>} : memref<32x6528xf32, #tpu.memory_space<vmem>>, vector<32x128xf32>,
    %cst_36 = arith.constant 0.922163963 : f32
    %101 = vector.broadcast %cst_36 : f32 to vector<1x128xf32>
    %102 = arith.mulf %8, %101 : vector<1x128xf32>
    %103 = vector.broadcast %9 : vector<32x1xf32> to vector<32x128xf32>
    %104 = vector.broadcast %102 : vector<1x128xf32> to vector<32x128xf32>
    %105 = arith.mulf %103, %104 : vector<32x128xf32>
    %106 = vector.broadcast %10 : vector<32x1xf32> to vector<32x128xf32>
    %107 = arith.addf %105, %106 : vector<32x128xf32>
    %cst_37 = arith.constant 0.000000e+00 : f32
    %108 = vector.broadcast %cst_37 : f32 to vector<32x128xf32>
    %109 = arith.maximumf %107, %108 : vector<32x128xf32>
    %c0_38 = arith.constant 0 : index
    %c1152 = arith.constant 1152 : index
    %110 = vector.load %arg10[%c0_38, %c1152] : memref<32x6528xf32, #tpu.memory_space<vmem>>, vector<32x128xf32>
    tpu.vector_store %arg10[%c0_38, %c1152], %109 {strides = array<i32>} : memref<32x6528xf32, #tpu.memory_space<vmem>>, vector<32x128xf32>,
    %cst_39 = arith.constant 0.904508471 : f32
    %111 = vector.broadcast %cst_39 : f32 to vector<1x128xf32>
    %112 = arith.mulf %8, %111 : vector<1x128xf32>
    %113 = vector.broadcast %9 : vector<32x1xf32> to vector<32x128xf32>
    %114 = vector.broadcast %112 : vector<1x128xf32> to vector<32x128xf32>
    %115 = arith.mulf %113, %114 : vector<32x128xf32>
    %116 = vector.broadcast %10 : vector<32x1xf32> to vector<32x128xf32>
    %117 = arith.addf %115, %116 : vector<32x128xf32>
    %cst_40 = arith.constant 0.000000e+00 : f32
    %118 = vector.broadcast %cst_40 : f32 to vector<32x128xf32>
    %119 = arith.maximumf %117, %118 : vector<32x128xf32>
    %c0_41 = arith.constant 0 : index
    %c1280 = arith.constant 1280 : index
    %120 = vector.load %arg10[%c0_41, %c1280] : memref<32x6528xf32, #tpu.memory_space<vmem>>, vector<32x128xf32>
    tpu.vector_store %arg10[%c0_41, %c1280], %119 {strides = array<i32>} : memref<32x6528xf32, #tpu.memory_space<vmem>>, vector<32x128xf32>,
    %cst_42 = arith.constant 0.885256648 : f32
    %121 = vector.broadcast %cst_42 : f32 to vector<1x128xf32>
    %122 = arith.mulf %8, %121 : vector<1x128xf32>
    %123 = vector.broadcast %9 : vector<32x1xf32> to vector<32x128xf32>
    %124 = vector.broadcast %122 : vector<1x128xf32> to vector<32x128xf32>
    %125 = arith.mulf %123, %124 : vector<32x128xf32>
    %126 = vector.broadcast %10 : vector<32x1xf32> to vector<32x128xf32>
    %127 = arith.addf %125, %126 : vector<32x128xf32>
    %cst_43 = arith.constant 0.000000e+00 : f32
    %128 = vector.broadcast %cst_43 : f32 to vector<32x128xf32>
    %129 = arith.maximumf %127, %128 : vector<32x128xf32>
    %c0_44 = arith.constant 0 : index
    %c1408 = arith.constant 1408 : index
    %130 = vector.load %arg10[%c0_44, %c1408] : memref<32x6528xf32, #tpu.memory_space<vmem>>, vector<32x128xf32>
    tpu.vector_store %arg10[%c0_44, %c1408], %129 {strides = array<i32>} : memref<32x6528xf32, #tpu.memory_space<vmem>>, vector<32x128xf32>,
    %cst_45 = arith.constant 0.86448431 : f32
    %131 = vector.broadcast %cst_45 : f32 to vector<1x128xf32>
    %132 = arith.mulf %8, %131 : vector<1x128xf32>
    %133 = vector.broadcast %9 : vector<32x1xf32> to vector<32x128xf32>
    %134 = vector.broadcast %132 : vector<1x128xf32> to vector<32x128xf32>
    %135 = arith.mulf %133, %134 : vector<32x128xf32>
    %136 = vector.broadcast %10 : vector<32x1xf32> to vector<32x128xf32>
    %137 = arith.addf %135, %136 : vector<32x128xf32>
    %cst_46 = arith.constant 0.000000e+00 : f32
    %138 = vector.broadcast %cst_46 : f32 to vector<32x128xf32>
    %139 = arith.maximumf %137, %138 : vector<32x128xf32>
    %c0_47 = arith.constant 0 : index
    %c1536 = arith.constant 1536 : index
    %140 = vector.load %arg10[%c0_47, %c1536] : memref<32x6528xf32, #tpu.memory_space<vmem>>, vector<32x128xf32>
    tpu.vector_store %arg10[%c0_47, %c1536], %139 {strides = array<i32>} : memref<32x6528xf32, #tpu.memory_space<vmem>>, vector<32x128xf32>,
    %cst_48 = arith.constant 0.842273592 : f32
    %141 = vector.broadcast %cst_48 : f32 to vector<1x128xf32>
    %142 = arith.mulf %8, %141 : vector<1x128xf32>
    %143 = vector.broadcast %9 : vector<32x1xf32> to vector<32x128xf32>
    %144 = vector.broadcast %142 : vector<1x128xf32> to vector<32x128xf32>
    %145 = arith.mulf %143, %144 : vector<32x128xf32>
    %146 = vector.broadcast %10 : vector<32x1xf32> to vector<32x128xf32>
    %147 = arith.addf %145, %146 : vector<32x128xf32>
    %cst_49 = arith.constant 0.000000e+00 : f32
    %148 = vector.broadcast %cst_49 : f32 to vector<32x128xf32>
    %149 = arith.maximumf %147, %148 : vector<32x128xf32>
    %c0_50 = arith.constant 0 : index
    %c1664 = arith.constant 1664 : index
    %150 = vector.load %arg10[%c0_50, %c1664] : memref<32x6528xf32, #tpu.memory_space<vmem>>, vector<32x128xf32>
    tpu.vector_store %arg10[%c0_50, %c1664], %149 {strides = array<i32>} : memref<32x6528xf32, #tpu.memory_space<vmem>>, vector<32x128xf32>,
    %cst_51 = arith.constant 8.187120e-01 : f32
    %151 = vector.broadcast %cst_51 : f32 to vector<1x128xf32>
    %152 = arith.mulf %8, %151 : vector<1x128xf32>
    %153 = vector.broadcast %9 : vector<32x1xf32> to vector<32x128xf32>
    %154 = vector.broadcast %152 : vector<1x128xf32> to vector<32x128xf32>
    %155 = arith.mulf %153, %154 : vector<32x128xf32>
    %156 = vector.broadcast %10 : vector<32x1xf32> to vector<32x128xf32>
    %157 = arith.addf %155, %156 : vector<32x128xf32>
    %cst_52 = arith.constant 0.000000e+00 : f32
    %158 = vector.broadcast %cst_52 : f32 to vector<32x128xf32>
    %159 = arith.maximumf %157, %158 : vector<32x128xf32>
    %c0_53 = arith.constant 0 : index
    %c1792 = arith.constant 1792 : index
    %160 = vector.load %arg10[%c0_53, %c1792] : memref<32x6528xf32, #tpu.memory_space<vmem>>, vector<32x128xf32>
    tpu.vector_store %arg10[%c0_53, %c1792], %159 {strides = array<i32>} : memref<32x6528xf32, #tpu.memory_space<vmem>>, vector<32x128xf32>,
    %cst_54 = arith.constant 0.793892622 : f32
    %161 = vector.broadcast %cst_54 : f32 to vector<1x128xf32>
    %162 = arith.mulf %8, %161 : vector<1x128xf32>
    %163 = vector.broadcast %9 : vector<32x1xf32> to vector<32x128xf32>
    %164 = vector.broadcast %162 : vector<1x128xf32> to vector<32x128xf32>
    %165 = arith.mulf %163, %164 : vector<32x128xf32>
    %166 = vector.broadcast %10 : vector<32x1xf32> to vector<32x128xf32>
    %167 = arith.addf %165, %166 : vector<32x128xf32>
    %cst_55 = arith.constant 0.000000e+00 : f32
    %168 = vector.broadcast %cst_55 : f32 to vector<32x128xf32>
    %169 = arith.maximumf %167, %168 : vector<32x128xf32>
    %c0_56 = arith.constant 0 : index
    %c1920 = arith.constant 1920 : index
    %170 = vector.load %arg10[%c0_56, %c1920] : memref<32x6528xf32, #tpu.memory_space<vmem>>, vector<32x128xf32>
    tpu.vector_store %arg10[%c0_56, %c1920], %169 {strides = array<i32>} : memref<32x6528xf32, #tpu.memory_space<vmem>>, vector<32x128xf32>,
    %cst_57 = arith.constant 0.767913401 : f32
    %171 = vector.broadcast %cst_57 : f32 to vector<1x128xf32>
    %172 = arith.mulf %8, %171 : vector<1x128xf32>
    %173 = vector.broadcast %9 : vector<32x1xf32> to vector<32x128xf32>
    %174 = vector.broadcast %172 : vector<1x128xf32> to vector<32x128xf32>
    %175 = arith.mulf %173, %174 : vector<32x128xf32>
    %176 = vector.broadcast %10 : vector<32x1xf32> to vector<32x128xf32>
    %177 = arith.addf %175, %176 : vector<32x128xf32>
    %cst_58 = arith.constant 0.000000e+00 : f32
    %178 = vector.broadcast %cst_58 : f32 to vector<32x128xf32>
    %179 = arith.maximumf %177, %178 : vector<32x128xf32>
    %c0_59 = arith.constant 0 : index
    %c2048 = arith.constant 2048 : index
    %180 = vector.load %arg10[%c0_59, %c2048] : memref<32x6528xf32, #tpu.memory_space<vmem>>, vector<32x128xf32>
    tpu.vector_store %arg10[%c0_59, %c2048], %179 {strides = array<i32>} : memref<32x6528xf32, #tpu.memory_space<vmem>>, vector<32x128xf32>,
    %cst_60 = arith.constant 0.740876853 : f32
    %181 = vector.broadcast %cst_60 : f32 to vector<1x128xf32>
    %182 = arith.mulf %8, %181 : vector<1x128xf32>
    %183 = vector.broadcast %9 : vector<32x1xf32> to vector<32x128xf32>
    %184 = vector.broadcast %182 : vector<1x128xf32> to vector<32x128xf32>
    %185 = arith.mulf %183, %184 : vector<32x128xf32>
    %186 = vector.broadcast %10 : vector<32x1xf32> to vector<32x128xf32>
    %187 = arith.addf %185, %186 : vector<32x128xf32>
    %cst_61 = arith.constant 0.000000e+00 : f32
    %188 = vector.broadcast %cst_61 : f32 to vector<32x128xf32>
    %189 = arith.maximumf %187, %188 : vector<32x128xf32>
    %c0_62 = arith.constant 0 : index
    %c2176 = arith.constant 2176 : index
    %190 = vector.load %arg10[%c0_62, %c2176] : memref<32x6528xf32, #tpu.memory_space<vmem>>, vector<32x128xf32>
    tpu.vector_store %arg10[%c0_62, %c2176], %189 {strides = array<i32>} : memref<32x6528xf32, #tpu.memory_space<vmem>>, vector<32x128xf32>,
    %cst_63 = arith.constant 0.712889671 : f32
    %191 = vector.broadcast %cst_63 : f32 to vector<1x128xf32>
    %192 = arith.mulf %8, %191 : vector<1x128xf32>
    %193 = vector.broadcast %9 : vector<32x1xf32> to vector<32x128xf32>
    %194 = vector.broadcast %192 : vector<1x128xf32> to vector<32x128xf32>
    %195 = arith.mulf %193, %194 : vector<32x128xf32>
    %196 = vector.broadcast %10 : vector<32x1xf32> to vector<32x128xf32>
    %197 = arith.addf %195, %196 : vector<32x128xf32>
    %cst_64 = arith.constant 0.000000e+00 : f32
    %198 = vector.broadcast %cst_64 : f32 to vector<32x128xf32>
    %199 = arith.maximumf %197, %198 : vector<32x128xf32>
    %c0_65 = arith.constant 0 : index
    %c2304 = arith.constant 2304 : index
    %200 = vector.load %arg10[%c0_65, %c2304] : memref<32x6528xf32, #tpu.memory_space<vmem>>, vector<32x128xf32>
    tpu.vector_store %arg10[%c0_65, %c2304], %199 {strides = array<i32>} : memref<32x6528xf32, #tpu.memory_space<vmem>>, vector<32x128xf32>,
    %cst_66 = arith.constant 0.684062243 : f32
    %201 = vector.broadcast %cst_66 : f32 to vector<1x128xf32>
    %202 = arith.mulf %8, %201 : vector<1x128xf32>
    %203 = vector.broadcast %9 : vector<32x1xf32> to vector<32x128xf32>
    %204 = vector.broadcast %202 : vector<1x128xf32> to vector<32x128xf32>
    %205 = arith.mulf %203, %204 : vector<32x128xf32>
    %206 = vector.broadcast %10 : vector<32x1xf32> to vector<32x128xf32>
    %207 = arith.addf %205, %206 : vector<32x128xf32>
    %cst_67 = arith.constant 0.000000e+00 : f32
    %208 = vector.broadcast %cst_67 : f32 to vector<32x128xf32>
    %209 = arith.maximumf %207, %208 : vector<32x128xf32>
    %c0_68 = arith.constant 0 : index
    %c2432 = arith.constant 2432 : index
    %210 = vector.load %arg10[%c0_68, %c2432] : memref<32x6528xf32, #tpu.memory_space<vmem>>, vector<32x128xf32>
    tpu.vector_store %arg10[%c0_68, %c2432], %209 {strides = array<i32>} : memref<32x6528xf32, #tpu.memory_space<vmem>>, vector<32x128xf32>,
    %cst_69 = arith.constant 0.654508471 : f32
    %211 = vector.broadcast %cst_69 : f32 to vector<1x128xf32>
    %212 = arith.mulf %8, %211 : vector<1x128xf32>
    %213 = vector.broadcast %9 : vector<32x1xf32> to vector<32x128xf32>
    %214 = vector.broadcast %212 : vector<1x128xf32> to vector<32x128xf32>
    %215 = arith.mulf %213, %214 : vector<32x128xf32>
    %216 = vector.broadcast %10 : vector<32x1xf32> to vector<32x128xf32>
    %217 = arith.addf %215, %216 : vector<32x128xf32>
    %cst_70 = arith.constant 0.000000e+00 : f32
    %218 = vector.broadcast %cst_70 : f32 to vector<32x128xf32>
    %219 = arith.maximumf %217, %218 : vector<32x128xf32>
    %c0_71 = arith.constant 0 : index
    %c2560 = arith.constant 2560 : index
    %220 = vector.load %arg10[%c0_71, %c2560] : memref<32x6528xf32, #tpu.memory_space<vmem>>, vector<32x128xf32>
    tpu.vector_store %arg10[%c0_71, %c2560], %219 {strides = array<i32>} : memref<32x6528xf32, #tpu.memory_space<vmem>>, vector<32x128xf32>,
    %cst_72 = arith.constant 0.624344945 : f32
    %221 = vector.broadcast %cst_72 : f32 to vector<1x128xf32>
    %222 = arith.mulf %8, %221 : vector<1x128xf32>
    %223 = vector.broadcast %9 : vector<32x1xf32> to vector<32x128xf32>
    %224 = vector.broadcast %222 : vector<1x128xf32> to vector<32x128xf32>
    %225 = arith.mulf %223, %224 : vector<32x128xf32>
    %226 = vector.broadcast %10 : vector<32x1xf32> to vector<32x128xf32>
    %227 = arith.addf %225, %226 : vector<32x128xf32>
    %cst_73 = arith.constant 0.000000e+00 : f32
    %228 = vector.broadcast %cst_73 : f32 to vector<32x128xf32>
    %229 = arith.maximumf %227, %228 : vector<32x128xf32>
    %c0_74 = arith.constant 0 : index
    %c2688 = arith.constant 2688 : index
    %230 = vector.load %arg10[%c0_74, %c2688] : memref<32x6528xf32, #tpu.memory_space<vmem>>, vector<32x128xf32>
    tpu.vector_store %arg10[%c0_74, %c2688], %229 {strides = array<i32>} : memref<32x6528xf32, #tpu.memory_space<vmem>>, vector<32x128xf32>,
    %cst_75 = arith.constant 0.593690634 : f32
    %231 = vector.broadcast %cst_75 : f32 to vector<1x128xf32>
    %232 = arith.mulf %8, %231 : vector<1x128xf32>
    %233 = vector.broadcast %9 : vector<32x1xf32> to vector<32x128xf32>
    %234 = vector.broadcast %232 : vector<1x128xf32> to vector<32x128xf32>
    %235 = arith.mulf %233, %234 : vector<32x128xf32>
    %236 = vector.broadcast %10 : vector<32x1xf32> to vector<32x128xf32>
    %237 = arith.addf %235, %236 : vector<32x128xf32>
    %cst_76 = arith.constant 0.000000e+00 : f32
    %238 = vector.broadcast %cst_76 : f32 to vector<32x128xf32>
    %239 = arith.maximumf %237, %238 : vector<32x128xf32>
    %c0_77 = arith.constant 0 : index
    %c2816 = arith.constant 2816 : index
    %240 = vector.load %arg10[%c0_77, %c2816] : memref<32x6528xf32, #tpu.memory_space<vmem>>, vector<32x128xf32>
    tpu.vector_store %arg10[%c0_77, %c2816], %239 {strides = array<i32>} : memref<32x6528xf32, #tpu.memory_space<vmem>>, vector<32x128xf32>,
    %cst_78 = arith.constant 0.562666595 : f32
    %241 = vector.broadcast %cst_78 : f32 to vector<1x128xf32>
    %242 = arith.mulf %8, %241 : vector<1x128xf32>
    %243 = vector.broadcast %9 : vector<32x1xf32> to vector<32x128xf32>
    %244 = vector.broadcast %242 : vector<1x128xf32> to vector<32x128xf32>
    %245 = arith.mulf %243, %244 : vector<32x128xf32>
    %246 = vector.broadcast %10 : vector<32x1xf32> to vector<32x128xf32>
    %247 = arith.addf %245, %246 : vector<32x128xf32>
    %cst_79 = arith.constant 0.000000e+00 : f32
    %248 = vector.broadcast %cst_79 : f32 to vector<32x128xf32>
    %249 = arith.maximumf %247, %248 : vector<32x128xf32>
    %c0_80 = arith.constant 0 : index
    %c2944 = arith.constant 2944 : index
    %250 = vector.load %arg10[%c0_80, %c2944] : memref<32x6528xf32, #tpu.memory_space<vmem>>, vector<32x128xf32>
    tpu.vector_store %arg10[%c0_80, %c2944], %249 {strides = array<i32>} : memref<32x6528xf32, #tpu.memory_space<vmem>>, vector<32x128xf32>,
    %cst_81 = arith.constant 0.531395257 : f32
    %251 = vector.broadcast %cst_81 : f32 to vector<1x128xf32>
    %252 = arith.mulf %8, %251 : vector<1x128xf32>
    %253 = vector.broadcast %9 : vector<32x1xf32> to vector<32x128xf32>
    %254 = vector.broadcast %252 : vector<1x128xf32> to vector<32x128xf32>
    %255 = arith.mulf %253, %254 : vector<32x128xf32>
    %256 = vector.broadcast %10 : vector<32x1xf32> to vector<32x128xf32>
    %257 = arith.addf %255, %256 : vector<32x128xf32>
    %cst_82 = arith.constant 0.000000e+00 : f32
    %258 = vector.broadcast %cst_82 : f32 to vector<32x128xf32>
    %259 = arith.maximumf %257, %258 : vector<32x128xf32>
    %c0_83 = arith.constant 0 : index
    %c3072 = arith.constant 3072 : index
    %260 = vector.load %arg10[%c0_83, %c3072] : memref<32x6528xf32, #tpu.memory_space<vmem>>, vector<32x128xf32>
    tpu.vector_store %arg10[%c0_83, %c3072], %259 {strides = array<i32>} : memref<32x6528xf32, #tpu.memory_space<vmem>>, vector<32x128xf32>,
    %cst_84 = arith.constant 5.000000e-01 : f32
    %261 = vector.broadcast %cst_84 : f32 to vector<1x128xf32>
    %262 = arith.mulf %8, %261 : vector<1x128xf32>
    %263 = vector.broadcast %9 : vector<32x1xf32> to vector<32x128xf32>
    %264 = vector.broadcast %262 : vector<1x128xf32> to vector<32x128xf32>
    %265 = arith.mulf %263, %264 : vector<32x128xf32>
    %266 = vector.broadcast %10 : vector<32x1xf32> to vector<32x128xf32>
    %267 = arith.addf %265, %266 : vector<32x128xf32>
    %cst_85 = arith.constant 0.000000e+00 : f32
    %268 = vector.broadcast %cst_85 : f32 to vector<32x128xf32>
    %269 = arith.maximumf %267, %268 : vector<32x128xf32>
    %c0_86 = arith.constant 0 : index
    %c3200 = arith.constant 3200 : index
    %270 = vector.load %arg10[%c0_86, %c3200] : memref<32x6528xf32, #tpu.memory_space<vmem>>, vector<32x128xf32>
    tpu.vector_store %arg10[%c0_86, %c3200], %269 {strides = array<i32>} : memref<32x6528xf32, #tpu.memory_space<vmem>>, vector<32x128xf32>,
    %cst_87 = arith.constant 0.468604743 : f32
    %271 = vector.broadcast %cst_87 : f32 to vector<1x128xf32>
    %272 = arith.mulf %8, %271 : vector<1x128xf32>
    %273 = vector.broadcast %9 : vector<32x1xf32> to vector<32x128xf32>
    %274 = vector.broadcast %272 : vector<1x128xf32> to vector<32x128xf32>
    %275 = arith.mulf %273, %274 : vector<32x128xf32>
    %276 = vector.broadcast %10 : vector<32x1xf32> to vector<32x128xf32>
    %277 = arith.addf %275, %276 : vector<32x128xf32>
    %cst_88 = arith.constant 0.000000e+00 : f32
    %278 = vector.broadcast %cst_88 : f32 to vector<32x128xf32>
    %279 = arith.maximumf %277, %278 : vector<32x128xf32>
    %c0_89 = arith.constant 0 : index
    %c3328 = arith.constant 3328 : index
    %280 = vector.load %arg10[%c0_89, %c3328] : memref<32x6528xf32, #tpu.memory_space<vmem>>, vector<32x128xf32>
    tpu.vector_store %arg10[%c0_89, %c3328], %279 {strides = array<i32>} : memref<32x6528xf32, #tpu.memory_space<vmem>>, vector<32x128xf32>,
    %cst_90 = arith.constant 0.437333375 : f32
    %281 = vector.broadcast %cst_90 : f32 to vector<1x128xf32>
    %282 = arith.mulf %8, %281 : vector<1x128xf32>
    %283 = vector.broadcast %9 : vector<32x1xf32> to vector<32x128xf32>
    %284 = vector.broadcast %282 : vector<1x128xf32> to vector<32x128xf32>
    %285 = arith.mulf %283, %284 : vector<32x128xf32>
    %286 = vector.broadcast %10 : vector<32x1xf32> to vector<32x128xf32>
    %287 = arith.addf %285, %286 : vector<32x128xf32>
    %cst_91 = arith.constant 0.000000e+00 : f32
    %288 = vector.broadcast %cst_91 : f32 to vector<32x128xf32>
    %289 = arith.maximumf %287, %288 : vector<32x128xf32>
    %c0_92 = arith.constant 0 : index
    %c3456 = arith.constant 3456 : index
    %290 = vector.load %arg10[%c0_92, %c3456] : memref<32x6528xf32, #tpu.memory_space<vmem>>, vector<32x128xf32>
    tpu.vector_store %arg10[%c0_92, %c3456], %289 {strides = array<i32>} : memref<32x6528xf32, #tpu.memory_space<vmem>>, vector<32x128xf32>,
    %cst_93 = arith.constant 0.406309336 : f32
    %291 = vector.broadcast %cst_93 : f32 to vector<1x128xf32>
    %292 = arith.mulf %8, %291 : vector<1x128xf32>
    %293 = vector.broadcast %9 : vector<32x1xf32> to vector<32x128xf32>
    %294 = vector.broadcast %292 : vector<1x128xf32> to vector<32x128xf32>
    %295 = arith.mulf %293, %294 : vector<32x128xf32>
    %296 = vector.broadcast %10 : vector<32x1xf32> to vector<32x128xf32>
    %297 = arith.addf %295, %296 : vector<32x128xf32>
    %cst_94 = arith.constant 0.000000e+00 : f32
    %298 = vector.broadcast %cst_94 : f32 to vector<32x128xf32>
    %299 = arith.maximumf %297, %298 : vector<32x128xf32>
    %c0_95 = arith.constant 0 : index
    %c3584 = arith.constant 3584 : index
    %300 = vector.load %arg10[%c0_95, %c3584] : memref<32x6528xf32, #tpu.memory_space<vmem>>, vector<32x128xf32>
    tpu.vector_store %arg10[%c0_95, %c3584], %299 {strides = array<i32>} : memref<32x6528xf32, #tpu.memory_space<vmem>>, vector<32x128xf32>,
    %cst_96 = arith.constant 0.375655055 : f32
    %301 = vector.broadcast %cst_96 : f32 to vector<1x128xf32>
    %302 = arith.mulf %8, %301 : vector<1x128xf32>
    %303 = vector.broadcast %9 : vector<32x1xf32> to vector<32x128xf32>
    %304 = vector.broadcast %302 : vector<1x128xf32> to vector<32x128xf32>
    %305 = arith.mulf %303, %304 : vector<32x128xf32>
    %306 = vector.broadcast %10 : vector<32x1xf32> to vector<32x128xf32>
    %307 = arith.addf %305, %306 : vector<32x128xf32>
    %cst_97 = arith.constant 0.000000e+00 : f32
    %308 = vector.broadcast %cst_97 : f32 to vector<32x128xf32>
    %309 = arith.maximumf %307, %308 : vector<32x128xf32>
    %c0_98 = arith.constant 0 : index
    %c3712 = arith.constant 3712 : index
    %310 = vector.load %arg10[%c0_98, %c3712] : memref<32x6528xf32, #tpu.memory_space<vmem>>, vector<32x128xf32>
    tpu.vector_store %arg10[%c0_98, %c3712], %309 {strides = array<i32>} : memref<32x6528xf32, #tpu.memory_space<vmem>>, vector<32x128xf32>,
    %cst_99 = arith.constant 0.345491499 : f32
    %311 = vector.broadcast %cst_99 : f32 to vector<1x128xf32>
    %312 = arith.mulf %8, %311 : vector<1x128xf32>
    %313 = vector.broadcast %9 : vector<32x1xf32> to vector<32x128xf32>
    %314 = vector.broadcast %312 : vector<1x128xf32> to vector<32x128xf32>
    %315 = arith.mulf %313, %314 : vector<32x128xf32>
    %316 = vector.broadcast %10 : vector<32x1xf32> to vector<32x128xf32>
    %317 = arith.addf %315, %316 : vector<32x128xf32>
    %cst_100 = arith.constant 0.000000e+00 : f32
    %318 = vector.broadcast %cst_100 : f32 to vector<32x128xf32>
    %319 = arith.maximumf %317, %318 : vector<32x128xf32>
    %c0_101 = arith.constant 0 : index
    %c3840 = arith.constant 3840 : index
    %320 = vector.load %arg10[%c0_101, %c3840] : memref<32x6528xf32, #tpu.memory_space<vmem>>, vector<32x128xf32>
    tpu.vector_store %arg10[%c0_101, %c3840], %319 {strides = array<i32>} : memref<32x6528xf32, #tpu.memory_space<vmem>>, vector<32x128xf32>,
    %cst_102 = arith.constant 0.315937728 : f32
    %321 = vector.broadcast %cst_102 : f32 to vector<1x128xf32>
    %322 = arith.mulf %8, %321 : vector<1x128xf32>
    %323 = vector.broadcast %9 : vector<32x1xf32> to vector<32x128xf32>
    %324 = vector.broadcast %322 : vector<1x128xf32> to vector<32x128xf32>
    %325 = arith.mulf %323, %324 : vector<32x128xf32>
    %326 = vector.broadcast %10 : vector<32x1xf32> to vector<32x128xf32>
    %327 = arith.addf %325, %326 : vector<32x128xf32>
    %cst_103 = arith.constant 0.000000e+00 : f32
    %328 = vector.broadcast %cst_103 : f32 to vector<32x128xf32>
    %329 = arith.maximumf %327, %328 : vector<32x128xf32>
    %c0_104 = arith.constant 0 : index
    %c3968 = arith.constant 3968 : index
    %330 = vector.load %arg10[%c0_104, %c3968] : memref<32x6528xf32, #tpu.memory_space<vmem>>, vector<32x128xf32>
    tpu.vector_store %arg10[%c0_104, %c3968], %329 {strides = array<i32>} : memref<32x6528xf32, #tpu.memory_space<vmem>>, vector<32x128xf32>,
    %cst_105 = arith.constant 0.287110358 : f32
    %331 = vector.broadcast %cst_105 : f32 to vector<1x128xf32>
    %332 = arith.mulf %8, %331 : vector<1x128xf32>
    %333 = vector.broadcast %9 : vector<32x1xf32> to vector<32x128xf32>
    %334 = vector.broadcast %332 : vector<1x128xf32> to vector<32x128xf32>
    %335 = arith.mulf %333, %334 : vector<32x128xf32>
    %336 = vector.broadcast %10 : vector<32x1xf32> to vector<32x128xf32>
    %337 = arith.addf %335, %336 : vector<32x128xf32>
    %cst_106 = arith.constant 0.000000e+00 : f32
    %338 = vector.broadcast %cst_106 : f32 to vector<32x128xf32>
    %339 = arith.maximumf %337, %338 : vector<32x128xf32>
    %c0_107 = arith.constant 0 : index
    %c4096 = arith.constant 4096 : index
    %340 = vector.load %arg10[%c0_107, %c4096] : memref<32x6528xf32, #tpu.memory_space<vmem>>, vector<32x128xf32>
    tpu.vector_store %arg10[%c0_107, %c4096], %339 {strides = array<i32>} : memref<32x6528xf32, #tpu.memory_space<vmem>>, vector<32x128xf32>,
    %cst_108 = arith.constant 0.259123147 : f32
    %341 = vector.broadcast %cst_108 : f32 to vector<1x128xf32>
    %342 = arith.mulf %8, %341 : vector<1x128xf32>
    %343 = vector.broadcast %9 : vector<32x1xf32> to vector<32x128xf32>
    %344 = vector.broadcast %342 : vector<1x128xf32> to vector<32x128xf32>
    %345 = arith.mulf %343, %344 : vector<32x128xf32>
    %346 = vector.broadcast %10 : vector<32x1xf32> to vector<32x128xf32>
    %347 = arith.addf %345, %346 : vector<32x128xf32>
    %cst_109 = arith.constant 0.000000e+00 : f32
    %348 = vector.broadcast %cst_109 : f32 to vector<32x128xf32>
    %349 = arith.maximumf %347, %348 : vector<32x128xf32>
    %c0_110 = arith.constant 0 : index
    %c4224 = arith.constant 4224 : index
    %350 = vector.load %arg10[%c0_110, %c4224] : memref<32x6528xf32, #tpu.memory_space<vmem>>, vector<32x128xf32>
    tpu.vector_store %arg10[%c0_110, %c4224], %349 {strides = array<i32>} : memref<32x6528xf32, #tpu.memory_space<vmem>>, vector<32x128xf32>,
    %cst_111 = arith.constant 0.232086599 : f32
    %351 = vector.broadcast %cst_111 : f32 to vector<1x128xf32>
    %352 = arith.mulf %8, %351 : vector<1x128xf32>
    %353 = vector.broadcast %9 : vector<32x1xf32> to vector<32x128xf32>
    %354 = vector.broadcast %352 : vector<1x128xf32> to vector<32x128xf32>
    %355 = arith.mulf %353, %354 : vector<32x128xf32>
    %356 = vector.broadcast %10 : vector<32x1xf32> to vector<32x128xf32>
    %357 = arith.addf %355, %356 : vector<32x128xf32>
    %cst_112 = arith.constant 0.000000e+00 : f32
    %358 = vector.broadcast %cst_112 : f32 to vector<32x128xf32>
    %359 = arith.maximumf %357, %358 : vector<32x128xf32>
    %c0_113 = arith.constant 0 : index
    %c4352 = arith.constant 4352 : index
    %360 = vector.load %arg10[%c0_113, %c4352] : memref<32x6528xf32, #tpu.memory_space<vmem>>, vector<32x128xf32>
    tpu.vector_store %arg10[%c0_113, %c4352], %359 {strides = array<i32>} : memref<32x6528xf32, #tpu.memory_space<vmem>>, vector<32x128xf32>,
    %cst_114 = arith.constant 0.206107378 : f32
    %361 = vector.broadcast %cst_114 : f32 to vector<1x128xf32>
    %362 = arith.mulf %8, %361 : vector<1x128xf32>
    %363 = vector.broadcast %9 : vector<32x1xf32> to vector<32x128xf32>
    %364 = vector.broadcast %362 : vector<1x128xf32> to vector<32x128xf32>
    %365 = arith.mulf %363, %364 : vector<32x128xf32>
    %366 = vector.broadcast %10 : vector<32x1xf32> to vector<32x128xf32>
    %367 = arith.addf %365, %366 : vector<32x128xf32>
    %cst_115 = arith.constant 0.000000e+00 : f32
    %368 = vector.broadcast %cst_115 : f32 to vector<32x128xf32>
    %369 = arith.maximumf %367, %368 : vector<32x128xf32>
    %c0_116 = arith.constant 0 : index
    %c4480 = arith.constant 4480 : index
    %370 = vector.load %arg10[%c0_116, %c4480] : memref<32x6528xf32, #tpu.memory_space<vmem>>, vector<32x128xf32>
    tpu.vector_store %arg10[%c0_116, %c4480], %369 {strides = array<i32>} : memref<32x6528xf32, #tpu.memory_space<vmem>>, vector<32x128xf32>,
    %cst_117 = arith.constant 1.812880e-01 : f32
    %371 = vector.broadcast %cst_117 : f32 to vector<1x128xf32>
    %372 = arith.mulf %8, %371 : vector<1x128xf32>
    %373 = vector.broadcast %9 : vector<32x1xf32> to vector<32x128xf32>
    %374 = vector.broadcast %372 : vector<1x128xf32> to vector<32x128xf32>
    %375 = arith.mulf %373, %374 : vector<32x128xf32>
    %376 = vector.broadcast %10 : vector<32x1xf32> to vector<32x128xf32>
    %377 = arith.addf %375, %376 : vector<32x128xf32>
    %cst_118 = arith.constant 0.000000e+00 : f32
    %378 = vector.broadcast %cst_118 : f32 to vector<32x128xf32>
    %379 = arith.maximumf %377, %378 : vector<32x128xf32>
    %c0_119 = arith.constant 0 : index
    %c4608 = arith.constant 4608 : index
    %380 = vector.load %arg10[%c0_119, %c4608] : memref<32x6528xf32, #tpu.memory_space<vmem>>, vector<32x128xf32>
    tpu.vector_store %arg10[%c0_119, %c4608], %379 {strides = array<i32>} : memref<32x6528xf32, #tpu.memory_space<vmem>>, vector<32x128xf32>,
    %cst_120 = arith.constant 0.157726437 : f32
    %381 = vector.broadcast %cst_120 : f32 to vector<1x128xf32>
    %382 = arith.mulf %8, %381 : vector<1x128xf32>
    %383 = vector.broadcast %9 : vector<32x1xf32> to vector<32x128xf32>
    %384 = vector.broadcast %382 : vector<1x128xf32> to vector<32x128xf32>
    %385 = arith.mulf %383, %384 : vector<32x128xf32>
    %386 = vector.broadcast %10 : vector<32x1xf32> to vector<32x128xf32>
    %387 = arith.addf %385, %386 : vector<32x128xf32>
    %cst_121 = arith.constant 0.000000e+00 : f32
    %388 = vector.broadcast %cst_121 : f32 to vector<32x128xf32>
    %389 = arith.maximumf %387, %388 : vector<32x128xf32>
    %c0_122 = arith.constant 0 : index
    %c4736 = arith.constant 4736 : index
    %390 = vector.load %arg10[%c0_122, %c4736] : memref<32x6528xf32, #tpu.memory_space<vmem>>, vector<32x128xf32>
    tpu.vector_store %arg10[%c0_122, %c4736], %389 {strides = array<i32>} : memref<32x6528xf32, #tpu.memory_space<vmem>>, vector<32x128xf32>,
    %cst_123 = arith.constant 0.13551569 : f32
    %391 = vector.broadcast %cst_123 : f32 to vector<1x128xf32>
    %392 = arith.mulf %8, %391 : vector<1x128xf32>
    %393 = vector.broadcast %9 : vector<32x1xf32> to vector<32x128xf32>
    %394 = vector.broadcast %392 : vector<1x128xf32> to vector<32x128xf32>
    %395 = arith.mulf %393, %394 : vector<32x128xf32>
    %396 = vector.broadcast %10 : vector<32x1xf32> to vector<32x128xf32>
    %397 = arith.addf %395, %396 : vector<32x128xf32>
    %cst_124 = arith.constant 0.000000e+00 : f32
    %398 = vector.broadcast %cst_124 : f32 to vector<32x128xf32>
    %399 = arith.maximumf %397, %398 : vector<32x128xf32>
    %c0_125 = arith.constant 0 : index
    %c4864 = arith.constant 4864 : index
    %400 = vector.load %arg10[%c0_125, %c4864] : memref<32x6528xf32, #tpu.memory_space<vmem>>, vector<32x128xf32>
    tpu.vector_store %arg10[%c0_125, %c4864], %399 {strides = array<i32>} : memref<32x6528xf32, #tpu.memory_space<vmem>>, vector<32x128xf32>,
    %cst_126 = arith.constant 0.114743382 : f32
    %401 = vector.broadcast %cst_126 : f32 to vector<1x128xf32>
    %402 = arith.mulf %8, %401 : vector<1x128xf32>
    %403 = vector.broadcast %9 : vector<32x1xf32> to vector<32x128xf32>
    %404 = vector.broadcast %402 : vector<1x128xf32> to vector<32x128xf32>
    %405 = arith.mulf %403, %404 : vector<32x128xf32>
    %406 = vector.broadcast %10 : vector<32x1xf32> to vector<32x128xf32>
    %407 = arith.addf %405, %406 : vector<32x128xf32>
    %cst_127 = arith.constant 0.000000e+00 : f32
    %408 = vector.broadcast %cst_127 : f32 to vector<32x128xf32>
    %409 = arith.maximumf %407, %408 : vector<32x128xf32>
    %c0_128 = arith.constant 0 : index
    %c4992 = arith.constant 4992 : index
    %410 = vector.load %arg10[%c0_128, %c4992] : memref<32x6528xf32, #tpu.memory_space<vmem>>, vector<32x128xf32>
    tpu.vector_store %arg10[%c0_128, %c4992], %409 {strides = array<i32>} : memref<32x6528xf32, #tpu.memory_space<vmem>>, vector<32x128xf32>,
    %cst_129 = arith.constant 0.0954914987 : f32
    %411 = vector.broadcast %cst_129 : f32 to vector<1x128xf32>
    %412 = arith.mulf %8, %411 : vector<1x128xf32>
    %413 = vector.broadcast %9 : vector<32x1xf32> to vector<32x128xf32>
    %414 = vector.broadcast %412 : vector<1x128xf32> to vector<32x128xf32>
    %415 = arith.mulf %413, %414 : vector<32x128xf32>
    %416 = vector.broadcast %10 : vector<32x1xf32> to vector<32x128xf32>
    %417 = arith.addf %415, %416 : vector<32x128xf32>
    %cst_130 = arith.constant 0.000000e+00 : f32
    %418 = vector.broadcast %cst_130 : f32 to vector<32x128xf32>
    %419 = arith.maximumf %417, %418 : vector<32x128xf32>
    %c0_131 = arith.constant 0 : index
    %c5120 = arith.constant 5120 : index
    %420 = vector.load %arg10[%c0_131, %c5120] : memref<32x6528xf32, #tpu.memory_space<vmem>>, vector<32x128xf32>
    tpu.vector_store %arg10[%c0_131, %c5120], %419 {strides = array<i32>} : memref<32x6528xf32, #tpu.memory_space<vmem>>, vector<32x128xf32>,
    %cst_132 = arith.constant 0.0778360367 : f32
    %421 = vector.broadcast %cst_132 : f32 to vector<1x128xf32>
    %422 = arith.mulf %8, %421 : vector<1x128xf32>
    %423 = vector.broadcast %9 : vector<32x1xf32> to vector<32x128xf32>
    %424 = vector.broadcast %422 : vector<1x128xf32> to vector<32x128xf32>
    %425 = arith.mulf %423, %424 : vector<32x128xf32>
    %426 = vector.broadcast %10 : vector<32x1xf32> to vector<32x128xf32>
    %427 = arith.addf %425, %426 : vector<32x128xf32>
    %cst_133 = arith.constant 0.000000e+00 : f32
    %428 = vector.broadcast %cst_133 : f32 to vector<32x128xf32>
    %429 = arith.maximumf %427, %428 : vector<32x128xf32>
    %c0_134 = arith.constant 0 : index
    %c5248 = arith.constant 5248 : index
    %430 = vector.load %arg10[%c0_134, %c5248] : memref<32x6528xf32, #tpu.memory_space<vmem>>, vector<32x128xf32>
    tpu.vector_store %arg10[%c0_134, %c5248], %429 {strides = array<i32>} : memref<32x6528xf32, #tpu.memory_space<vmem>>, vector<32x128xf32>,
    %cst_135 = arith.constant 0.0618466735 : f32
    %431 = vector.broadcast %cst_135 : f32 to vector<1x128xf32>
    %432 = arith.mulf %8, %431 : vector<1x128xf32>
    %433 = vector.broadcast %9 : vector<32x1xf32> to vector<32x128xf32>
    %434 = vector.broadcast %432 : vector<1x128xf32> to vector<32x128xf32>
    %435 = arith.mulf %433, %434 : vector<32x128xf32>
    %436 = vector.broadcast %10 : vector<32x1xf32> to vector<32x128xf32>
    %437 = arith.addf %435, %436 : vector<32x128xf32>
    %cst_136 = arith.constant 0.000000e+00 : f32
    %438 = vector.broadcast %cst_136 : f32 to vector<32x128xf32>
    %439 = arith.maximumf %437, %438 : vector<32x128xf32>
    %c0_137 = arith.constant 0 : index
    %c5376 = arith.constant 5376 : index
    %440 = vector.load %arg10[%c0_137, %c5376] : memref<32x6528xf32, #tpu.memory_space<vmem>>, vector<32x128xf32>
    tpu.vector_store %arg10[%c0_137, %c5376], %439 {strides = array<i32>} : memref<32x6528xf32, #tpu.memory_space<vmem>>, vector<32x128xf32>,
    %cst_138 = arith.constant 0.0475864708 : f32
    %441 = vector.broadcast %cst_138 : f32 to vector<1x128xf32>
    %442 = arith.mulf %8, %441 : vector<1x128xf32>
    %443 = vector.broadcast %9 : vector<32x1xf32> to vector<32x128xf32>
    %444 = vector.broadcast %442 : vector<1x128xf32> to vector<32x128xf32>
    %445 = arith.mulf %443, %444 : vector<32x128xf32>
    %446 = vector.broadcast %10 : vector<32x1xf32> to vector<32x128xf32>
    %447 = arith.addf %445, %446 : vector<32x128xf32>
    %cst_139 = arith.constant 0.000000e+00 : f32
    %448 = vector.broadcast %cst_139 : f32 to vector<32x128xf32>
    %449 = arith.maximumf %447, %448 : vector<32x128xf32>
    %c0_140 = arith.constant 0 : index
    %c5504 = arith.constant 5504 : index
    %450 = vector.load %arg10[%c0_140, %c5504] : memref<32x6528xf32, #tpu.memory_space<vmem>>, vector<32x128xf32>
    tpu.vector_store %arg10[%c0_140, %c5504], %449 {strides = array<i32>} : memref<32x6528xf32, #tpu.memory_space<vmem>>, vector<32x128xf32>,
    %cst_141 = arith.constant 0.0351117551 : f32
    %451 = vector.broadcast %cst_141 : f32 to vector<1x128xf32>
    %452 = arith.mulf %8, %451 : vector<1x128xf32>
    %453 = vector.broadcast %9 : vector<32x1xf32> to vector<32x128xf32>
    %454 = vector.broadcast %452 : vector<1x128xf32> to vector<32x128xf32>
    %455 = arith.mulf %453, %454 : vector<32x128xf32>
    %456 = vector.broadcast %10 : vector<32x1xf32> to vector<32x128xf32>
    %457 = arith.addf %455, %456 : vector<32x128xf32>
    %cst_142 = arith.constant 0.000000e+00 : f32
    %458 = vector.broadcast %cst_142 : f32 to vector<32x128xf32>
    %459 = arith.maximumf %457, %458 : vector<32x128xf32>
    %c0_143 = arith.constant 0 : index
    %c5632 = arith.constant 5632 : index
    %460 = vector.load %arg10[%c0_143, %c5632] : memref<32x6528xf32, #tpu.memory_space<vmem>>, vector<32x128xf32>
    tpu.vector_store %arg10[%c0_143, %c5632], %459 {strides = array<i32>} : memref<32x6528xf32, #tpu.memory_space<vmem>>, vector<32x128xf32>,
    %cst_144 = arith.constant 0.02447173 : f32
    %461 = vector.broadcast %cst_144 : f32 to vector<1x128xf32>
    %462 = arith.mulf %8, %461 : vector<1x128xf32>
    %463 = vector.broadcast %9 : vector<32x1xf32> to vector<32x128xf32>
    %464 = vector.broadcast %462 : vector<1x128xf32> to vector<32x128xf32>
    %465 = arith.mulf %463, %464 : vector<32x128xf32>
    %466 = vector.broadcast %10 : vector<32x1xf32> to vector<32x128xf32>
    %467 = arith.addf %465, %466 : vector<32x128xf32>
    %cst_145 = arith.constant 0.000000e+00 : f32
    %468 = vector.broadcast %cst_145 : f32 to vector<32x128xf32>
    %469 = arith.maximumf %467, %468 : vector<32x128xf32>
    %c0_146 = arith.constant 0 : index
    %c5760 = arith.constant 5760 : index
    %470 = vector.load %arg10[%c0_146, %c5760] : memref<32x6528xf32, #tpu.memory_space<vmem>>, vector<32x128xf32>
    tpu.vector_store %arg10[%c0_146, %c5760], %469 {strides = array<i32>} : memref<32x6528xf32, #tpu.memory_space<vmem>>, vector<32x128xf32>,
    %cst_147 = arith.constant 0.0157084167 : f32
    %471 = vector.broadcast %cst_147 : f32 to vector<1x128xf32>
    %472 = arith.mulf %8, %471 : vector<1x128xf32>
    %473 = vector.broadcast %9 : vector<32x1xf32> to vector<32x128xf32>
    %474 = vector.broadcast %472 : vector<1x128xf32> to vector<32x128xf32>
    %475 = arith.mulf %473, %474 : vector<32x128xf32>
    %476 = vector.broadcast %10 : vector<32x1xf32> to vector<32x128xf32>
    %477 = arith.addf %475, %476 : vector<32x128xf32>
    %cst_148 = arith.constant 0.000000e+00 : f32
    %478 = vector.broadcast %cst_148 : f32 to vector<32x128xf32>
    %479 = arith.maximumf %477, %478 : vector<32x128xf32>
    %c0_149 = arith.constant 0 : index
    %c5888 = arith.constant 5888 : index
    %480 = vector.load %arg10[%c0_149, %c5888] : memref<32x6528xf32, #tpu.memory_space<vmem>>, vector<32x128xf32>
    tpu.vector_store %arg10[%c0_149, %c5888], %479 {strides = array<i32>} : memref<32x6528xf32, #tpu.memory_space<vmem>>, vector<32x128xf32>,
    %cst_150 = arith.constant 0.00885638594 : f32
    %481 = vector.broadcast %cst_150 : f32 to vector<1x128xf32>
    %482 = arith.mulf %8, %481 : vector<1x128xf32>
    %483 = vector.broadcast %9 : vector<32x1xf32> to vector<32x128xf32>
    %484 = vector.broadcast %482 : vector<1x128xf32> to vector<32x128xf32>
    %485 = arith.mulf %483, %484 : vector<32x128xf32>
    %486 = vector.broadcast %10 : vector<32x1xf32> to vector<32x128xf32>
    %487 = arith.addf %485, %486 : vector<32x128xf32>
    %cst_151 = arith.constant 0.000000e+00 : f32
    %488 = vector.broadcast %cst_151 : f32 to vector<32x128xf32>
    %489 = arith.maximumf %487, %488 : vector<32x128xf32>
    %c0_152 = arith.constant 0 : index
    %c6016 = arith.constant 6016 : index
    %490 = vector.load %arg10[%c0_152, %c6016] : memref<32x6528xf32, #tpu.memory_space<vmem>>, vector<32x128xf32>
    tpu.vector_store %arg10[%c0_152, %c6016], %489 {strides = array<i32>} : memref<32x6528xf32, #tpu.memory_space<vmem>>, vector<32x128xf32>,
    %cst_153 = arith.constant 0.00394263864 : f32
    %491 = vector.broadcast %cst_153 : f32 to vector<1x128xf32>
    %492 = arith.mulf %8, %491 : vector<1x128xf32>
    %493 = vector.broadcast %9 : vector<32x1xf32> to vector<32x128xf32>
    %494 = vector.broadcast %492 : vector<1x128xf32> to vector<32x128xf32>
    %495 = arith.mulf %493, %494 : vector<32x128xf32>
    %496 = vector.broadcast %10 : vector<32x1xf32> to vector<32x128xf32>
    %497 = arith.addf %495, %496 : vector<32x128xf32>
    %cst_154 = arith.constant 0.000000e+00 : f32
    %498 = vector.broadcast %cst_154 : f32 to vector<32x128xf32>
    %499 = arith.maximumf %497, %498 : vector<32x128xf32>
    %c0_155 = arith.constant 0 : index
    %c6144 = arith.constant 6144 : index
    %500 = vector.load %arg10[%c0_155, %c6144] : memref<32x6528xf32, #tpu.memory_space<vmem>>, vector<32x128xf32>
    tpu.vector_store %arg10[%c0_155, %c6144], %499 {strides = array<i32>} : memref<32x6528xf32, #tpu.memory_space<vmem>>, vector<32x128xf32>,
    %cst_156 = arith.constant 9.86635684E-4 : f32
    %501 = vector.broadcast %cst_156 : f32 to vector<1x128xf32>
    %502 = arith.mulf %8, %501 : vector<1x128xf32>
    %503 = vector.broadcast %9 : vector<32x1xf32> to vector<32x128xf32>
    %504 = vector.broadcast %502 : vector<1x128xf32> to vector<32x128xf32>
    %505 = arith.mulf %503, %504 : vector<32x128xf32>
    %506 = vector.broadcast %10 : vector<32x1xf32> to vector<32x128xf32>
    %507 = arith.addf %505, %506 : vector<32x128xf32>
    %cst_157 = arith.constant 0.000000e+00 : f32
    %508 = vector.broadcast %cst_157 : f32 to vector<32x128xf32>
    %509 = arith.maximumf %507, %508 : vector<32x128xf32>
    %c0_158 = arith.constant 0 : index
    %c6272 = arith.constant 6272 : index
    %510 = vector.load %arg10[%c0_158, %c6272] : memref<32x6528xf32, #tpu.memory_space<vmem>>, vector<32x128xf32>
    tpu.vector_store %arg10[%c0_158, %c6272], %509 {strides = array<i32>} : memref<32x6528xf32, #tpu.memory_space<vmem>>, vector<32x128xf32>,
    %cst_159 = arith.constant 0.000000e+00 : f32
    %511 = vector.broadcast %cst_159 : f32 to vector<1x128xf32>
    %512 = arith.mulf %8, %511 : vector<1x128xf32>
    %513 = vector.broadcast %9 : vector<32x1xf32> to vector<32x128xf32>
    %514 = vector.broadcast %512 : vector<1x128xf32> to vector<32x128xf32>
    %515 = arith.mulf %513, %514 : vector<32x128xf32>
    %516 = vector.broadcast %10 : vector<32x1xf32> to vector<32x128xf32>
    %517 = arith.addf %515, %516 : vector<32x128xf32>
    %cst_160 = arith.constant 0.000000e+00 : f32
    %518 = vector.broadcast %cst_160 : f32 to vector<32x128xf32>
    %519 = arith.maximumf %517, %518 : vector<32x128xf32>
    %c0_161 = arith.constant 0 : index
    %c6400 = arith.constant 6400 : index
    %520 = vector.load %arg10[%c0_161, %c6400] : memref<32x6528xf32, #tpu.memory_space<vmem>>, vector<32x128xf32>
    tpu.vector_store %arg10[%c0_161, %c6400], %519 {strides = array<i32>} : memref<32x6528xf32, #tpu.memory_space<vmem>>, vector<32x128xf32>,
    %c0_162 = arith.constant 0 : index
    %c0_163 = arith.constant 0 : index
    %521 = vector.load %arg6[%c0_162, %c0_163] : memref<32x32xf32, #tpu.memory_space<vmem>>, vector<32x32xf32>
    %c0_164 = arith.constant 0 : index
    %c0_165 = arith.constant 0 : index
    %522 = vector.load %arg10[%c0_164, %c0_165] : memref<32x6528xf32, #tpu.memory_space<vmem>>, vector<32x6528xf32>
    %cst_166 = arith.constant dense<0.000000e+00> : vector<32x6528xf32>
    %523 = tpu.matmul %521, %522, %cst_166 {dimension_numbers = #tpu.dot_dimension_numbers<[1], [0], [0], [1], [0, 0, 1, 1], [], []>} : vector<32x32xf32>, vector<32x6528xf32>, vector<32x6528xf32> -> vector<32x6528xf32>
    %c0_167 = arith.constant 0 : index
    %c0_168 = arith.constant 0 : index
    %524 = vector.load %arg7[%c0_167, %c0_168] : memref<32x1xf32, #tpu.memory_space<vmem>>, vector<32x1xf32>
    %525 = vector.broadcast %524 : vector<32x1xf32> to vector<32x6528xf32>
    %526 = arith.addf %523, %525 : vector<32x6528xf32>
    %cst_169 = arith.constant 0.000000e+00 : f32
    %527 = vector.broadcast %cst_169 : f32 to vector<32x6528xf32>
    %528 = arith.maximumf %526, %527 : vector<32x6528xf32>
    %c0_170 = arith.constant 0 : index
    %c0_171 = arith.constant 0 : index
    %529 = vector.load %arg8[%c0_170, %c0_171] : memref<1x32xf32, #tpu.memory_space<vmem>>, vector<1x32xf32>
    %cst_172 = arith.constant dense<0.000000e+00> : vector<1x6528xf32>
    %530 = tpu.matmul %529, %528, %cst_172 {dimension_numbers = #tpu.dot_dimension_numbers<[1], [0], [0], [1], [0, 0, 1, 1], [], []>} : vector<1x32xf32>, vector<32x6528xf32>, vector<1x6528xf32> -> vector<1x6528xf32>
    %531 = vector.broadcast %1 : f32 to vector<1x6528xf32>
    %532 = arith.addf %530, %531 : vector<1x6528xf32>
    %cst_173 = arith.constant 0.000000e+00 : f32
    %533 = vector.broadcast %cst_173 : f32 to vector<1x6528xf32>
    %534 = arith.cmpf ogt, %532, %533 : vector<1x6528xf32>
    %cst_174 = arith.constant 0.000000e+00 : f32
    %535 = vector.broadcast %cst_174 : f32 to vector<1x6528xf32>
    %536 = arith.minimumf %532, %535 : vector<1x6528xf32>
    %537 = math.exp %536 : vector<1x6528xf32>
    %cst_175 = arith.constant 1.000000e+00 : f32
    %538 = vector.broadcast %cst_175 : f32 to vector<1x6528xf32>
    %539 = arith.subf %537, %538 : vector<1x6528xf32>
    %540 = arith.select %534, %532, %539 : vector<1x6528xi1>, vector<1x6528xf32>
    %cst_176 = arith.constant 1.000000e+00 : f32
    %541 = vector.broadcast %cst_176 : f32 to vector<1x6528xf32>
    %542 = arith.addf %540, %541 : vector<1x6528xf32>
    %cst_177 = arith.constant 0.000000e+00 : f32
    %543 = vector.broadcast %cst_177 : f32 to vector<1x128xf32>
    %544 = vector.extract_strided_slice %542 {offsets = [0, 0], sizes = [1, 128], strides = [1, 1]} : vector<1x6528xf32> to vector<1x128xf32>
    %cst_178 = arith.constant 3.92156857E-4 : f32
    %545 = vector.broadcast %cst_178 : f32 to vector<1x128xf32>
    %546 = arith.mulf %545, %544 : vector<1x128xf32>
    %547 = arith.addf %543, %546 : vector<1x128xf32>
    %548 = vector.extract_strided_slice %542 {offsets = [0, 128], sizes = [1, 128], strides = [1, 1]} : vector<1x6528xf32> to vector<1x128xf32>
    %cst_179 = arith.constant 0.0038675759 : f32
    %549 = vector.broadcast %cst_179 : f32 to vector<1x128xf32>
    %550 = arith.mulf %549, %548 : vector<1x128xf32>
    %551 = arith.addf %547, %550 : vector<1x128xf32>
    %552 = vector.extract_strided_slice %542 {offsets = [0, 256], sizes = [1, 128], strides = [1, 1]} : vector<1x6528xf32> to vector<1x128xf32>
    %cst_180 = arith.constant 0.00789187104 : f32
    %553 = vector.broadcast %cst_180 : f32 to vector<1x128xf32>
    %554 = arith.mulf %553, %552 : vector<1x128xf32>
    %555 = arith.addf %551, %554 : vector<1x128xf32>
    %556 = vector.extract_strided_slice %542 {offsets = [0, 384], sizes = [1, 128], strides = [1, 1]} : vector<1x6528xf32> to vector<1x128xf32>
    %cst_181 = arith.constant 0.0117731765 : f32
    %557 = vector.broadcast %cst_181 : f32 to vector<1x128xf32>
    %558 = arith.mulf %557, %556 : vector<1x128xf32>
    %559 = arith.addf %555, %558 : vector<1x128xf32>
    %560 = vector.extract_strided_slice %542 {offsets = [0, 512], sizes = [1, 128], strides = [1, 1]} : vector<1x6528xf32> to vector<1x128xf32>
    %cst_182 = arith.constant 0.0156193366 : f32
    %561 = vector.broadcast %cst_182 : f32 to vector<1x128xf32>
    %562 = arith.mulf %561, %560 : vector<1x128xf32>
    %563 = arith.addf %559, %562 : vector<1x128xf32>
    %564 = vector.extract_strided_slice %542 {offsets = [0, 640], sizes = [1, 128], strides = [1, 1]} : vector<1x6528xf32> to vector<1x128xf32>
    %cst_183 = arith.constant 0.0194256939 : f32
    %565 = vector.broadcast %cst_183 : f32 to vector<1x128xf32>
    %566 = arith.mulf %565, %564 : vector<1x128xf32>
    %567 = arith.addf %563, %566 : vector<1x128xf32>
    %568 = vector.extract_strided_slice %542 {offsets = [0, 768], sizes = [1, 128], strides = [1, 1]} : vector<1x6528xf32> to vector<1x128xf32>
    %cst_184 = arith.constant 0.0231185257 : f32
    %569 = vector.broadcast %cst_184 : f32 to vector<1x128xf32>
    %570 = arith.mulf %569, %568 : vector<1x128xf32>
    %571 = arith.addf %567, %570 : vector<1x128xf32>
    %572 = vector.extract_strided_slice %542 {offsets = [0, 896], sizes = [1, 128], strides = [1, 1]} : vector<1x6528xf32> to vector<1x128xf32>
    %cst_185 = arith.constant 0.0267650522 : f32
    %573 = vector.broadcast %cst_185 : f32 to vector<1x128xf32>
    %574 = arith.mulf %573, %572 : vector<1x128xf32>
    %575 = arith.addf %571, %574 : vector<1x128xf32>
    %576 = vector.extract_strided_slice %542 {offsets = [0, 1024], sizes = [1, 128], strides = [1, 1]} : vector<1x6528xf32> to vector<1x128xf32>
    %cst_186 = arith.constant 0.0302561838 : f32
    %577 = vector.broadcast %cst_186 : f32 to vector<1x128xf32>
    %578 = arith.mulf %577, %576 : vector<1x128xf32>
    %579 = arith.addf %575, %578 : vector<1x128xf32>
    %580 = vector.extract_strided_slice %542 {offsets = [0, 1152], sizes = [1, 128], strides = [1, 1]} : vector<1x6528xf32> to vector<1x128xf32>
    %cst_187 = arith.constant 0.0336807966 : f32
    %581 = vector.broadcast %cst_187 : f32 to vector<1x128xf32>
    %582 = arith.mulf %581, %580 : vector<1x128xf32>
    %583 = arith.addf %579, %582 : vector<1x128xf32>
    %584 = vector.extract_strided_slice %542 {offsets = [0, 1280], sizes = [1, 128], strides = [1, 1]} : vector<1x6528xf32> to vector<1x128xf32>
    %cst_188 = arith.constant 0.0369174667 : f32
    %585 = vector.broadcast %cst_188 : f32 to vector<1x128xf32>
    %586 = arith.mulf %585, %584 : vector<1x128xf32>
    %587 = arith.addf %583, %586 : vector<1x128xf32>
    %588 = vector.extract_strided_slice %542 {offsets = [0, 1408], sizes = [1, 128], strides = [1, 1]} : vector<1x6528xf32> to vector<1x128xf32>
    %cst_189 = arith.constant 0.0400649719 : f32
    %589 = vector.broadcast %cst_189 : f32 to vector<1x128xf32>
    %590 = arith.mulf %589, %588 : vector<1x128xf32>
    %591 = arith.addf %587, %590 : vector<1x128xf32>
    %592 = vector.extract_strided_slice %542 {offsets = [0, 1536], sizes = [1, 128], strides = [1, 1]} : vector<1x6528xf32> to vector<1x128xf32>
    %cst_190 = arith.constant 0.0429967158 : f32
    %593 = vector.broadcast %cst_190 : f32 to vector<1x128xf32>
    %594 = arith.mulf %593, %592 : vector<1x128xf32>
    %595 = arith.addf %591, %594 : vector<1x128xf32>
    %596 = vector.extract_strided_slice %542 {offsets = [0, 1664], sizes = [1, 128], strides = [1, 1]} : vector<1x6528xf32> to vector<1x128xf32>
    %cst_191 = arith.constant 0.045817256 : f32
    %597 = vector.broadcast %cst_191 : f32 to vector<1x128xf32>
    %598 = arith.mulf %597, %596 : vector<1x128xf32>
    %599 = arith.addf %595, %598 : vector<1x128xf32>
    %600 = vector.extract_strided_slice %542 {offsets = [0, 1792], sizes = [1, 128], strides = [1, 1]} : vector<1x6528xf32> to vector<1x128xf32>
    %cst_192 = arith.constant 0.0483978428 : f32
    %601 = vector.broadcast %cst_192 : f32 to vector<1x128xf32>
    %602 = arith.mulf %601, %600 : vector<1x128xf32>
    %603 = arith.addf %599, %602 : vector<1x128xf32>
    %604 = vector.extract_strided_slice %542 {offsets = [0, 1920], sizes = [1, 128], strides = [1, 1]} : vector<1x6528xf32> to vector<1x128xf32>
    %cst_193 = arith.constant 0.0508470684 : f32
    %605 = vector.broadcast %cst_193 : f32 to vector<1x128xf32>
    %606 = arith.mulf %605, %604 : vector<1x128xf32>
    %607 = arith.addf %603, %606 : vector<1x128xf32>
    %608 = vector.extract_strided_slice %542 {offsets = [0, 2048], sizes = [1, 128], strides = [1, 1]} : vector<1x6528xf32> to vector<1x128xf32>
    %cst_194 = arith.constant 0.0530355759 : f32
    %609 = vector.broadcast %cst_194 : f32 to vector<1x128xf32>
    %610 = arith.mulf %609, %608 : vector<1x128xf32>
    %611 = arith.addf %607, %610 : vector<1x128xf32>
    %612 = vector.extract_strided_slice %542 {offsets = [0, 2176], sizes = [1, 128], strides = [1, 1]} : vector<1x6528xf32> to vector<1x128xf32>
    %cst_195 = arith.constant 0.0550751463 : f32
    %613 = vector.broadcast %cst_195 : f32 to vector<1x128xf32>
    %614 = arith.mulf %613, %612 : vector<1x128xf32>
    %615 = arith.addf %611, %614 : vector<1x128xf32>
    %616 = vector.extract_strided_slice %542 {offsets = [0, 2304], sizes = [1, 128], strides = [1, 1]} : vector<1x6528xf32> to vector<1x128xf32>
    %cst_196 = arith.constant 0.0568367355 : f32
    %617 = vector.broadcast %cst_196 : f32 to vector<1x128xf32>
    %618 = arith.mulf %617, %616 : vector<1x128xf32>
    %619 = arith.addf %615, %618 : vector<1x128xf32>
    %620 = vector.extract_strided_slice %542 {offsets = [0, 2432], sizes = [1, 128], strides = [1, 1]} : vector<1x6528xf32> to vector<1x128xf32>
    %cst_197 = arith.constant 0.0584348477 : f32
    %621 = vector.broadcast %cst_197 : f32 to vector<1x128xf32>
    %622 = arith.mulf %621, %620 : vector<1x128xf32>
    %623 = arith.addf %619, %622 : vector<1x128xf32>
    %624 = vector.extract_strided_slice %542 {offsets = [0, 2560], sizes = [1, 128], strides = [1, 1]} : vector<1x6528xf32> to vector<1x128xf32>
    %cst_198 = arith.constant 0.0597413443 : f32
    %625 = vector.broadcast %cst_198 : f32 to vector<1x128xf32>
    %626 = arith.mulf %625, %624 : vector<1x128xf32>
    %627 = arith.addf %623, %626 : vector<1x128xf32>
    %628 = vector.extract_strided_slice %542 {offsets = [0, 2688], sizes = [1, 128], strides = [1, 1]} : vector<1x6528xf32> to vector<1x128xf32>
    %cst_199 = arith.constant 6.087320e-02 : f32
    %629 = vector.broadcast %cst_199 : f32 to vector<1x128xf32>
    %630 = arith.mulf %629, %628 : vector<1x128xf32>
    %631 = arith.addf %627, %630 : vector<1x128xf32>
    %632 = vector.extract_strided_slice %542 {offsets = [0, 2816], sizes = [1, 128], strides = [1, 1]} : vector<1x6528xf32> to vector<1x128xf32>
    %cst_200 = arith.constant 0.0617035851 : f32
    %633 = vector.broadcast %cst_200 : f32 to vector<1x128xf32>
    %634 = arith.mulf %633, %632 : vector<1x128xf32>
    %635 = arith.addf %631, %634 : vector<1x128xf32>
    %636 = vector.extract_strided_slice %542 {offsets = [0, 2944], sizes = [1, 128], strides = [1, 1]} : vector<1x6528xf32> to vector<1x128xf32>
    %cst_201 = arith.constant 0.0623517632 : f32
    %637 = vector.broadcast %cst_201 : f32 to vector<1x128xf32>
    %638 = arith.mulf %637, %636 : vector<1x128xf32>
    %639 = arith.addf %635, %638 : vector<1x128xf32>
    %640 = vector.extract_strided_slice %542 {offsets = [0, 3072], sizes = [1, 128], strides = [1, 1]} : vector<1x6528xf32> to vector<1x128xf32>
    %cst_202 = arith.constant 6.269250e-02 : f32
    %641 = vector.broadcast %cst_202 : f32 to vector<1x128xf32>
    %642 = arith.mulf %641, %640 : vector<1x128xf32>
    %643 = arith.addf %639, %642 : vector<1x128xf32>
    %644 = vector.extract_strided_slice %542 {offsets = [0, 3200], sizes = [1, 128], strides = [1, 1]} : vector<1x6528xf32> to vector<1x128xf32>
    %cst_203 = arith.constant 0.0628472194 : f32
    %645 = vector.broadcast %cst_203 : f32 to vector<1x128xf32>
    %646 = arith.mulf %645, %644 : vector<1x128xf32>
    %647 = arith.addf %643, %646 : vector<1x128xf32>
    %648 = vector.extract_strided_slice %542 {offsets = [0, 3328], sizes = [1, 128], strides = [1, 1]} : vector<1x6528xf32> to vector<1x128xf32>
    %cst_204 = arith.constant 6.269250e-02 : f32
    %649 = vector.broadcast %cst_204 : f32 to vector<1x128xf32>
    %650 = arith.mulf %649, %648 : vector<1x128xf32>
    %651 = arith.addf %647, %650 : vector<1x128xf32>
    %652 = vector.extract_strided_slice %542 {offsets = [0, 3456], sizes = [1, 128], strides = [1, 1]} : vector<1x6528xf32> to vector<1x128xf32>
    %cst_205 = arith.constant 0.0623517632 : f32
    %653 = vector.broadcast %cst_205 : f32 to vector<1x128xf32>
    %654 = arith.mulf %653, %652 : vector<1x128xf32>
    %655 = arith.addf %651, %654 : vector<1x128xf32>
    %656 = vector.extract_strided_slice %542 {offsets = [0, 3584], sizes = [1, 128], strides = [1, 1]} : vector<1x6528xf32> to vector<1x128xf32>
    %cst_206 = arith.constant 0.0617035851 : f32
    %657 = vector.broadcast %cst_206 : f32 to vector<1x128xf32>
    %658 = arith.mulf %657, %656 : vector<1x128xf32>
    %659 = arith.addf %655, %658 : vector<1x128xf32>
    %660 = vector.extract_strided_slice %542 {offsets = [0, 3712], sizes = [1, 128], strides = [1, 1]} : vector<1x6528xf32> to vector<1x128xf32>
    %cst_207 = arith.constant 6.087320e-02 : f32
    %661 = vector.broadcast %cst_207 : f32 to vector<1x128xf32>
    %662 = arith.mulf %661, %660 : vector<1x128xf32>
    %663 = arith.addf %659, %662 : vector<1x128xf32>
    %664 = vector.extract_strided_slice %542 {offsets = [0, 3840], sizes = [1, 128], strides = [1, 1]} : vector<1x6528xf32> to vector<1x128xf32>
    %cst_208 = arith.constant 0.0597413443 : f32
    %665 = vector.broadcast %cst_208 : f32 to vector<1x128xf32>
    %666 = arith.mulf %665, %664 : vector<1x128xf32>
    %667 = arith.addf %663, %666 : vector<1x128xf32>
    %668 = vector.extract_strided_slice %542 {offsets = [0, 3968], sizes = [1, 128], strides = [1, 1]} : vector<1x6528xf32> to vector<1x128xf32>
    %cst_209 = arith.constant 0.0584348477 : f32
    %669 = vector.broadcast %cst_209 : f32 to vector<1x128xf32>
    %670 = arith.mulf %669, %668 : vector<1x128xf32>
    %671 = arith.addf %667, %670 : vector<1x128xf32>
    %672 = vector.extract_strided_slice %542 {offsets = [0, 4096], sizes = [1, 128], strides = [1, 1]} : vector<1x6528xf32> to vector<1x128xf32>
    %cst_210 = arith.constant 0.0568367355 : f32
    %673 = vector.broadcast %cst_210 : f32 to vector<1x128xf32>
    %674 = arith.mulf %673, %672 : vector<1x128xf32>
    %675 = arith.addf %671, %674 : vector<1x128xf32>
    %676 = vector.extract_strided_slice %542 {offsets = [0, 4224], sizes = [1, 128], strides = [1, 1]} : vector<1x6528xf32> to vector<1x128xf32>
    %cst_211 = arith.constant 0.0550751463 : f32
    %677 = vector.broadcast %cst_211 : f32 to vector<1x128xf32>
    %678 = arith.mulf %677, %676 : vector<1x128xf32>
    %679 = arith.addf %675, %678 : vector<1x128xf32>
    %680 = vector.extract_strided_slice %542 {offsets = [0, 4352], sizes = [1, 128], strides = [1, 1]} : vector<1x6528xf32> to vector<1x128xf32>
    %cst_212 = arith.constant 0.0530355759 : f32
    %681 = vector.broadcast %cst_212 : f32 to vector<1x128xf32>
    %682 = arith.mulf %681, %680 : vector<1x128xf32>
    %683 = arith.addf %679, %682 : vector<1x128xf32>
    %684 = vector.extract_strided_slice %542 {offsets = [0, 4480], sizes = [1, 128], strides = [1, 1]} : vector<1x6528xf32> to vector<1x128xf32>
    %cst_213 = arith.constant 0.0508470684 : f32
    %685 = vector.broadcast %cst_213 : f32 to vector<1x128xf32>
    %686 = arith.mulf %685, %684 : vector<1x128xf32>
    %687 = arith.addf %683, %686 : vector<1x128xf32>
    %688 = vector.extract_strided_slice %542 {offsets = [0, 4608], sizes = [1, 128], strides = [1, 1]} : vector<1x6528xf32> to vector<1x128xf32>
    %cst_214 = arith.constant 0.0483978428 : f32
    %689 = vector.broadcast %cst_214 : f32 to vector<1x128xf32>
    %690 = arith.mulf %689, %688 : vector<1x128xf32>
    %691 = arith.addf %687, %690 : vector<1x128xf32>
    %692 = vector.extract_strided_slice %542 {offsets = [0, 4736], sizes = [1, 128], strides = [1, 1]} : vector<1x6528xf32> to vector<1x128xf32>
    %cst_215 = arith.constant 0.045817256 : f32
    %693 = vector.broadcast %cst_215 : f32 to vector<1x128xf32>
    %694 = arith.mulf %693, %692 : vector<1x128xf32>
    %695 = arith.addf %691, %694 : vector<1x128xf32>
    %696 = vector.extract_strided_slice %542 {offsets = [0, 4864], sizes = [1, 128], strides = [1, 1]} : vector<1x6528xf32> to vector<1x128xf32>
    %cst_216 = arith.constant 0.0429967158 : f32
    %697 = vector.broadcast %cst_216 : f32 to vector<1x128xf32>
    %698 = arith.mulf %697, %696 : vector<1x128xf32>
    %699 = arith.addf %695, %698 : vector<1x128xf32>
    %700 = vector.extract_strided_slice %542 {offsets = [0, 4992], sizes = [1, 128], strides = [1, 1]} : vector<1x6528xf32> to vector<1x128xf32>
    %cst_217 = arith.constant 0.0400649719 : f32
    %701 = vector.broadcast %cst_217 : f32 to vector<1x128xf32>
    %702 = arith.mulf %701, %700 : vector<1x128xf32>
    %703 = arith.addf %699, %702 : vector<1x128xf32>
    %704 = vector.extract_strided_slice %542 {offsets = [0, 5120], sizes = [1, 128], strides = [1, 1]} : vector<1x6528xf32> to vector<1x128xf32>
    %cst_218 = arith.constant 0.0369174667 : f32
    %705 = vector.broadcast %cst_218 : f32 to vector<1x128xf32>
    %706 = arith.mulf %705, %704 : vector<1x128xf32>
    %707 = arith.addf %703, %706 : vector<1x128xf32>
    %708 = vector.extract_strided_slice %542 {offsets = [0, 5248], sizes = [1, 128], strides = [1, 1]} : vector<1x6528xf32> to vector<1x128xf32>
    %cst_219 = arith.constant 0.0336807966 : f32
    %709 = vector.broadcast %cst_219 : f32 to vector<1x128xf32>
    %710 = arith.mulf %709, %708 : vector<1x128xf32>
    %711 = arith.addf %707, %710 : vector<1x128xf32>
    %712 = vector.extract_strided_slice %542 {offsets = [0, 5376], sizes = [1, 128], strides = [1, 1]} : vector<1x6528xf32> to vector<1x128xf32>
    %cst_220 = arith.constant 0.0302561838 : f32
    %713 = vector.broadcast %cst_220 : f32 to vector<1x128xf32>
    %714 = arith.mulf %713, %712 : vector<1x128xf32>
    %715 = arith.addf %711, %714 : vector<1x128xf32>
    %716 = vector.extract_strided_slice %542 {offsets = [0, 5504], sizes = [1, 128], strides = [1, 1]} : vector<1x6528xf32> to vector<1x128xf32>
    %cst_221 = arith.constant 0.0267650522 : f32
    %717 = vector.broadcast %cst_221 : f32 to vector<1x128xf32>
    %718 = arith.mulf %717, %716 : vector<1x128xf32>
    %719 = arith.addf %715, %718 : vector<1x128xf32>
    %720 = vector.extract_strided_slice %542 {offsets = [0, 5632], sizes = [1, 128], strides = [1, 1]} : vector<1x6528xf32> to vector<1x128xf32>
    %cst_222 = arith.constant 0.0231185257 : f32
    %721 = vector.broadcast %cst_222 : f32 to vector<1x128xf32>
    %722 = arith.mulf %721, %720 : vector<1x128xf32>
    %723 = arith.addf %719, %722 : vector<1x128xf32>
    %724 = vector.extract_strided_slice %542 {offsets = [0, 5760], sizes = [1, 128], strides = [1, 1]} : vector<1x6528xf32> to vector<1x128xf32>
    %cst_223 = arith.constant 0.0194256939 : f32
    %725 = vector.broadcast %cst_223 : f32 to vector<1x128xf32>
    %726 = arith.mulf %725, %724 : vector<1x128xf32>
    %727 = arith.addf %723, %726 : vector<1x128xf32>
    %728 = vector.extract_strided_slice %542 {offsets = [0, 5888], sizes = [1, 128], strides = [1, 1]} : vector<1x6528xf32> to vector<1x128xf32>
    %cst_224 = arith.constant 0.0156193366 : f32
    %729 = vector.broadcast %cst_224 : f32 to vector<1x128xf32>
    %730 = arith.mulf %729, %728 : vector<1x128xf32>
    %731 = arith.addf %727, %730 : vector<1x128xf32>
    %732 = vector.extract_strided_slice %542 {offsets = [0, 6016], sizes = [1, 128], strides = [1, 1]} : vector<1x6528xf32> to vector<1x128xf32>
    %cst_225 = arith.constant 0.0117731765 : f32
    %733 = vector.broadcast %cst_225 : f32 to vector<1x128xf32>
    %734 = arith.mulf %733, %732 : vector<1x128xf32>
    %735 = arith.addf %731, %734 : vector<1x128xf32>
    %736 = vector.extract_strided_slice %542 {offsets = [0, 6144], sizes = [1, 128], strides = [1, 1]} : vector<1x6528xf32> to vector<1x128xf32>
    %cst_226 = arith.constant 0.00789187104 : f32
    %737 = vector.broadcast %cst_226 : f32 to vector<1x128xf32>
    %738 = arith.mulf %737, %736 : vector<1x128xf32>
    %739 = arith.addf %735, %738 : vector<1x128xf32>
    %740 = vector.extract_strided_slice %542 {offsets = [0, 6272], sizes = [1, 128], strides = [1, 1]} : vector<1x6528xf32> to vector<1x128xf32>
    %cst_227 = arith.constant 0.0038675759 : f32
    %741 = vector.broadcast %cst_227 : f32 to vector<1x128xf32>
    %742 = arith.mulf %741, %740 : vector<1x128xf32>
    %743 = arith.addf %739, %742 : vector<1x128xf32>
    %744 = vector.extract_strided_slice %542 {offsets = [0, 6400], sizes = [1, 128], strides = [1, 1]} : vector<1x6528xf32> to vector<1x128xf32>
    %cst_228 = arith.constant 3.92156857E-4 : f32
    %745 = vector.broadcast %cst_228 : f32 to vector<1x128xf32>
    %746 = arith.mulf %745, %744 : vector<1x128xf32>
    %747 = arith.addf %743, %746 : vector<1x128xf32>
    %748 = arith.mulf %8, %747 : vector<1x128xf32>
    %749 = vector.broadcast %3 : f32 to vector<1x128xf32>
    %750 = arith.mulf %748, %749 : vector<1x128xf32>
    %751 = vector.broadcast %2 : f32 to vector<1x128xf32>
    %752 = arith.addf %750, %751 : vector<1x128xf32>
    %c0_229 = arith.constant 0 : index
    %c0_230 = arith.constant 0 : index
    %753 = vector.load %arg9[%c0_229, %c0_230] : memref<1x128xf32, #tpu.memory_space<vmem>>, vector<1x128xf32>
    tpu.vector_store %arg9[%c0_229, %c0_230], %752 {strides = array<i32>} : memref<1x128xf32, #tpu.memory_space<vmem>>, vector<1x128xf32>,
    return
  }
  func.func @transform_0(%arg0: i32) -> i32 {
    %c0_i32 = arith.constant 0 : i32
    %c0_i32_0 = arith.constant 0 : i32
    return %c0_i32 : i32
  }
  func.func @transform_1(%arg0: i32) -> (i32, i32) {
    %c0_i32 = arith.constant 0 : i32
    %c0_i32_0 = arith.constant 0 : i32
    return %c0_i32, %arg0 : i32, i32
  }
  func.func @transform_2(%arg0: i32) -> (i32, i32) {
    %c0_i32 = arith.constant 0 : i32
    %c0_i32_0 = arith.constant 0 : i32
    %c0_i32_1 = arith.constant 0 : i32
    return %c0_i32, %c0_i32_0 : i32, i32
  }
  func.func @transform_3(%arg0: i32) -> (i32, i32) {
    %c0_i32 = arith.constant 0 : i32
    %c0_i32_0 = arith.constant 0 : i32
    %c0_i32_1 = arith.constant 0 : i32
    return %c0_i32, %c0_i32_0 : i32, i32
  }
  func.func @transform_4(%arg0: i32) -> (i32, i32) {
    %c0_i32 = arith.constant 0 : i32
    %c0_i32_0 = arith.constant 0 : i32
    %c0_i32_1 = arith.constant 0 : i32
    return %c0_i32, %c0_i32_0 : i32, i32
  }
  func.func @transform_5(%arg0: i32) -> (i32, i32) {
    %c0_i32 = arith.constant 0 : i32
    %c0_i32_0 = arith.constant 0 : i32
    %c0_i32_1 = arith.constant 0 : i32
    return %c0_i32, %c0_i32_0 : i32, i32
  }
  func.func @transform_6(%arg0: i32) -> (i32, i32) {
    %c0_i32 = arith.constant 0 : i32
    %c0_i32_0 = arith.constant 0 : i32
    %c0_i32_1 = arith.constant 0 : i32
    return %c0_i32, %c0_i32_0 : i32, i32
  }
  func.func @transform_7(%arg0: i32) -> (i32, i32) {
    %c0_i32 = arith.constant 0 : i32
    %c0_i32_0 = arith.constant 0 : i32
    %c0_i32_1 = arith.constant 0 : i32
    return %c0_i32, %c0_i32_0 : i32, i32
  }
  func.func @transform_8(%arg0: i32) -> (i32, i32) {
    %c0_i32 = arith.constant 0 : i32
    %c0_i32_0 = arith.constant 0 : i32
    return %c0_i32, %arg0 : i32, i32
  }
}

</mosaic_0001>

<llo_original>
// kernel: tpu_custom_call.1
$region0: #{tpu_custom_call.1}
  #allocation0 [shape = 'u32[]', space=smem, size = 0x4, offset = 0x4, fixed_abs, tag = 'smem constant byte address 0x4 - core index']
  #allocation1 [shape = 'u32[72,128]{1,0:T(1,128)}', space=vmem, size = 0x9000, scoped, tag = 'internal scratch']
  #allocation2 [shape = 'f32[32,6528]{1,0:T(8,128)}', space=vmem, size = 0xcc000, scoped, tag = 'scratch operand']
  %s0 = inlined_call_operand.vmem [shape: f32[4], index: 0, kind: input, shape index: {}]
  %s1 = inlined_call_operand.vmem [shape: f32[16,128], index: 1, kind: input, shape index: {}]
  %s2 = inlined_call_operand.vmem [shape: f32[1,16], index: 2, kind: input, shape index: {}]
  %s3 = inlined_call_operand.vmem [shape: f32[32,1], index: 3, kind: input, shape index: {}]
  %s4 = inlined_call_operand.vmem [shape: f32[32,1], index: 4, kind: input, shape index: {}]
  %s5 = inlined_call_operand.vmem [shape: f32[32,32], index: 5, kind: input, shape index: {}]
  %s6 = inlined_call_operand.vmem [shape: f32[32,1], index: 6, kind: input, shape index: {}]
  %s7 = inlined_call_operand.vmem [shape: f32[1,32], index: 7, kind: input, shape index: {}]
  %s8 = inlined_call_operand.hbm [shape: f32[1,128], index: 8, kind: output, shape index: {}]
  %s9 = sld [smem:[#allocation0]]
  $region46: #{tpu_custom_call.1} parent=0
    _
  %s11 = ssub.s32 1, %s9
  %s12 = scalar_select 0, %s11, %s9
  $region1: #{tpu_custom_call.1} parent=0
    #allocation3 [shape = 'u8[512]{0}', space=smem, size = 0x200, scoped, tag = 'input window, operand 0, single buffered']
    #allocation4 [shape = 's32[1]{0}', space=sflag, size = 0x4, scoped, tag = 'scoped memory for tpu_custom_call.1']
    #allocation5 [shape = 's32[1]{0}', space=sflag, size = 0x4, scoped, tag = 'scoped memory for tpu_custom_call.1']
    #allocation6 [shape = 'u8[512]{0}', space=vmem, size = 0x400, scoped, tag = 'output window, operand 0, single buffered']
    %13 = vsyncpa [#allocation5], 0
    %14 = vsyncpa [#allocation4], 0
    // Predicated region
    $region2: #{tpu_custom_call.1} parent=1 // pred_check
      _
    $region3: #{tpu_custom_call.1} parent=1 // pred_check_branch
      %16 = sbr.rel (0) target = $region5
    $region4: #{tpu_custom_call.1} parent=1 // pred_region
      %18 = vsyncadd [#allocation5], 0
      %s20 = sshll.u32 %s0, 4
      %s21 = int_to_ptr.vmem [resolvable:$true] %s20
      %23 = dma.vmem_to_smem %s21, 16, [#allocation3], [#allocation5]
    $region5: #{tpu_custom_call.1} parent=1 // pred_fallthru
      _
    // Predicated region
    $region6: #{tpu_custom_call.1} parent=1 // pred_check
      _
    $region7: #{tpu_custom_call.1} parent=1 // pred_check_branch
      %25 = sbr.rel (0) target = $region9
    $region8: #{tpu_custom_call.1} parent=1 // pred_region
      _
    $region9: #{tpu_custom_call.1} parent=1 // pred_fallthru
      _
    // Predicated region
    $region10: #{tpu_custom_call.1} parent=1 // pred_check
      _
    $region11: #{tpu_custom_call.1} parent=1 // pred_check_branch
      %27 = sbr.rel (0) target = $region13
    $region12: #{tpu_custom_call.1} parent=1 // pred_region
      _
    $region13: #{tpu_custom_call.1} parent=1 // pred_fallthru
      _
    // Predicated region
    $region14: #{tpu_custom_call.1} parent=1 // pred_check
      _
    $region15: #{tpu_custom_call.1} parent=1 // pred_check_branch
      %29 = sbr.rel (0) target = $region17
    $region16: #{tpu_custom_call.1} parent=1 // pred_region
      _
    $region17: #{tpu_custom_call.1} parent=1 // pred_fallthru
      _
    // Predicated region
    $region18: #{tpu_custom_call.1} parent=1 // pred_check
      _
    $region19: #{tpu_custom_call.1} parent=1 // pred_check_branch
      %31 = sbr.rel (0) target = $region21
    $region20: #{tpu_custom_call.1} parent=1 // pred_region
      _
    $region21: #{tpu_custom_call.1} parent=1 // pred_fallthru
      _
    // Predicated region
    $region22: #{tpu_custom_call.1} parent=1 // pred_check
      _
    $region23: #{tpu_custom_call.1} parent=1 // pred_check_branch
      %33 = sbr.rel (0) target = $region25
    $region24: #{tpu_custom_call.1} parent=1 // pred_region
      _
    $region25: #{tpu_custom_call.1} parent=1 // pred_fallthru
      _
    // Predicated region
    $region26: #{tpu_custom_call.1} parent=1 // pred_check
      _
    $region27: #{tpu_custom_call.1} parent=1 // pred_check_branch
      %35 = sbr.rel (0) target = $region29
    $region28: #{tpu_custom_call.1} parent=1 // pred_region
      _
    $region29: #{tpu_custom_call.1} parent=1 // pred_fallthru
      _
    // Predicated region
    $region30: #{tpu_custom_call.1} parent=1 // pred_check
      _
    $region31: #{tpu_custom_call.1} parent=1 // pred_check_branch
      %37 = sbr.rel (0) target = $region33
    $region32: #{tpu_custom_call.1} parent=1 // pred_region
      _
    $region33: #{tpu_custom_call.1} parent=1 // pred_fallthru
      _
    // Predicated region
    $region34: #{tpu_custom_call.1} parent=1 // pred_check
      _
    $region35: #{tpu_custom_call.1} parent=1 // pred_check_branch
      %39 = sbr.rel (0) target = $region37
    $region36: #{tpu_custom_call.1} parent=1 // pred_region
      %41 = dma.done [#allocation5], 16
    $region37: #{tpu_custom_call.1} parent=1 // pred_fallthru
      _
    %42 = sfence
    %s43 = sld [smem:[#allocation3]]
    %s44 = sld [smem:[#allocation3 + $0x1]]
    %s45 = sld [smem:[#allocation3 + $0x2]]
    %s46 = sld [smem:[#allocation3 + $0x3]]
    %v47 = vld [vmem:[%s2] sm:$0x1]
    %v48 = vld [vmem:[%s1] sm:$0xff]
    %v49 = vld [vmem:[%s1 + $0x8] sm:$0xff]
    %v50 = vstv %s43
    %vm51 = vcmask 130048
    %v53 = vsel %vm51, %v47, 0
    %55 = vmatpush.msra.mxu0 0.0
    %56 = vmatpush.msra.mxu0 0.0
    %57 = vmatpush.msra.mxu0 0.0
    %58 = vmatpush.msra.mxu0 0.0
    %59 = vmatpush.msra.mxu0 0.0
    %60 = vmatpush.msra.mxu0 0.0
    %61 = vmatpush.msra.mxu0 0.0
    %62 = vmatpush.msra.mxu0 0.0
    %63 = vmatpush.msra.mxu0 0.0
    %64 = vmatpush.msra.mxu0 0.0
    %65 = vmatpush.msra.mxu0 0.0
    %66 = vmatpush.msra.mxu0 0.0
    %67 = vmatpush.msra.mxu0 0.0
    %68 = vmatpush.msra.mxu0 0.0
    %69 = vmatpush.msra.mxu0 %v49
    %70 = vmatpush.msra.mxu0 %v48
    %71 = vmatmul.f32.gmra.mxu0 %v53
    %v72 = vpop.f32.mrf.mxu0
    %v73 = vadd.f32 %v50, %v72
    %74 = vdwg.mxu0
    %v75 = vld [vmem:[%s3] sm:$0xff]
    %v76 = vld [vmem:[%s3 + $0x8] sm:$0xff]
    %v77 = vld [vmem:[%s3 + $0x10] sm:$0xff]
    %v78 = vld [vmem:[%s3 + $0x18] sm:$0xff]
    %v79 = vld [vmem:[%s4] sm:$0xff]
    %v80 = vld [vmem:[%s4 + $0x8] sm:$0xff]
    %v81 = vld [vmem:[%s4 + $0x10] sm:$0xff]
    %v82 = vld [vmem:[%s4 + $0x18] sm:$0xff]
    %84 = vset.pattern.permute.xlu0 0
    %85 = vperm.xlu0 %84, %v75
    %v86 = vpop.permute.xlu0 %85
    %89 = vset.pattern.permute.xlu0 0
    %90 = vperm.xlu0 %89, %v76
    %v91 = vpop.permute.xlu0 %90
    %94 = vset.pattern.permute.xlu0 0
    %95 = vperm.xlu0 %94, %v77
    %v96 = vpop.permute.xlu0 %95
    %99 = vset.pattern.permute.xlu0 0
    %100 = vperm.xlu0 %99, %v78
    %v101 = vpop.permute.xlu0 %100
    %v103 = vperm.slane %v73, 0
    %v104 = vmul.f32 %v86, %v103
    %v105 = vmul.f32 %v91, %v103
    %v106 = vmul.f32 %v96, %v103
    %v107 = vmul.f32 %v101, %v103
    %109 = vset.pattern.permute.xlu0 0
    %110 = vperm.xlu0 %109, %v79
    %v111 = vpop.permute.xlu0 %110
    %114 = vset.pattern.permute.xlu0 0
    %115 = vperm.xlu0 %114, %v80
    %v116 = vpop.permute.xlu0 %115
    %119 = vset.pattern.permute.xlu0 0
    %120 = vperm.xlu0 %119, %v81
    %v121 = vpop.permute.xlu0 %120
    %124 = vset.pattern.permute.xlu0 0
    %125 = vperm.xlu0 %124, %v82
    %v126 = vpop.permute.xlu0 %125
    %v128 = vadd.f32 %v104, %v111
    %v129 = vadd.f32 %v105, %v116
    %v130 = vadd.f32 %v106, %v121
    %v131 = vadd.f32 %v107, %v126
    %v132 = vmax.f32 %v128, 0.0
    %v133 = vmax.f32 %v129, 0.0
    %v134 = vmax.f32 %v130, 0.0
    %v135 = vmax.f32 %v131, 0.0
    %136 = vst [vmem:[#allocation2] sm:$0xff] %v132
    %137 = vst [vmem:[#allocation2 + $0x198] sm:$0xff] %v133
    %138 = vst [vmem:[#allocation2 + $0x330] sm:$0xff] %v134
    %139 = vst [vmem:[#allocation2 + $0x4c8] sm:$0xff] %v135
    %v140 = vmul.f32 %v73, 0.99901336
    %v141 = vperm.slane %v140, 0
    %v142 = vmul.f32 %v86, %v141
    %v143 = vmul.f32 %v91, %v141
    %v144 = vmul.f32 %v96, %v141
    %v145 = vmul.f32 %v101, %v141
    %v146 = vadd.f32 %v142, %v111
    %v147 = vadd.f32 %v143, %v116
    %v148 = vadd.f32 %v144, %v121
    %v149 = vadd.f32 %v145, %v126
    %v150 = vmax.f32 %v146, 0.0
    %v151 = vmax.f32 %v147, 0.0
    %v152 = vmax.f32 %v148, 0.0
    %v153 = vmax.f32 %v149, 0.0
    %154 = vst [vmem:[#allocation2 + $0x8] sm:$0xff] %v150
    %155 = vst [vmem:[#allocation2 + $0x1a0] sm:$0xff] %v151
    %156 = vst [vmem:[#allocation2 + $0x338] sm:$0xff] %v152
    %157 = vst [vmem:[#allocation2 + $0x4d0] sm:$0xff] %v153
    %v158 = vmul.f32 %v73, 0.9960574
    %v159 = vperm.slane %v158, 0
    %v160 = vmul.f32 %v86, %v159
    %v161 = vmul.f32 %v91, %v159
    %v162 = vmul.f32 %v96, %v159
    %v163 = vmul.f32 %v101, %v159
    %v164 = vadd.f32 %v160, %v111
    %v165 = vadd.f32 %v161, %v116
    %v166 = vadd.f32 %v162, %v121
    %v167 = vadd.f32 %v163, %v126
    %v168 = vmax.f32 %v164, 0.0
    %v169 = vmax.f32 %v165, 0.0
    %v170 = vmax.f32 %v166, 0.0
    %v171 = vmax.f32 %v167, 0.0
    %172 = vst [vmem:[#allocation2 + $0x10] sm:$0xff] %v168
    %173 = vst [vmem:[#allocation2 + $0x1a8] sm:$0xff] %v169
    %174 = vst [vmem:[#allocation2 + $0x340] sm:$0xff] %v170
    %175 = vst [vmem:[#allocation2 + $0x4d8] sm:$0xff] %v171
    %v176 = vmul.f32 %v73, 0.9911436
    %v177 = vperm.slane %v176, 0
    %v178 = vmul.f32 %v86, %v177
    %v179 = vmul.f32 %v91, %v177
    %v180 = vmul.f32 %v96, %v177
    %v181 = vmul.f32 %v101, %v177
    %v182 = vadd.f32 %v178, %v111
    %v183 = vadd.f32 %v179, %v116
    %v184 = vadd.f32 %v180, %v121
    %v185 = vadd.f32 %v181, %v126
    %v186 = vmax.f32 %v182, 0.0
    %v187 = vmax.f32 %v183, 0.0
    %v188 = vmax.f32 %v184, 0.0
    %v189 = vmax.f32 %v185, 0.0
    %190 = vst [vmem:[#allocation2 + $0x18] sm:$0xff] %v186
    %191 = vst [vmem:[#allocation2 + $0x1b0] sm:$0xff] %v187
    %192 = vst [vmem:[#allocation2 + $0x348] sm:$0xff] %v188
    %193 = vst [vmem:[#allocation2 + $0x4e0] sm:$0xff] %v189
    %v194 = vmul.f32 %v73, 0.98429155
    %v195 = vperm.slane %v194, 0
    %v196 = vmul.f32 %v86, %v195
    %v197 = vmul.f32 %v91, %v195
    %v198 = vmul.f32 %v96, %v195
    %v199 = vmul.f32 %v101, %v195
    %v200 = vadd.f32 %v196, %v111
    %v201 = vadd.f32 %v197, %v116
    %v202 = vadd.f32 %v198, %v121
    %v203 = vadd.f32 %v199, %v126
    %v204 = vmax.f32 %v200, 0.0
    %v205 = vmax.f32 %v201, 0.0
    %v206 = vmax.f32 %v202, 0.0
    %v207 = vmax.f32 %v203, 0.0
    %208 = vst [vmem:[#allocation2 + $0x20] sm:$0xff] %v204
    %209 = vst [vmem:[#allocation2 + $0x1b8] sm:$0xff] %v205
    %210 = vst [vmem:[#allocation2 + $0x350] sm:$0xff] %v206
    %211 = vst [vmem:[#allocation2 + $0x4e8] sm:$0xff] %v207
    %v212 = vmul.f32 %v73, 0.97552824
    %v213 = vperm.slane %v212, 0
    %v214 = vmul.f32 %v86, %v213
    %v215 = vmul.f32 %v91, %v213
    %v216 = vmul.f32 %v96, %v213
    %v217 = vmul.f32 %v101, %v213
    %v218 = vadd.f32 %v214, %v111
    %v219 = vadd.f32 %v215, %v116
    %v220 = vadd.f32 %v216, %v121
    %v221 = vadd.f32 %v217, %v126
    %v222 = vmax.f32 %v218, 0.0
    %v223 = vmax.f32 %v219, 0.0
    %v224 = vmax.f32 %v220, 0.0
    %v225 = vmax.f32 %v221, 0.0
    %226 = vst [vmem:[#allocation2 + $0x28] sm:$0xff] %v222
    %227 = vst [vmem:[#allocation2 + $0x1c0] sm:$0xff] %v223
    %228 = vst [vmem:[#allocation2 + $0x358] sm:$0xff] %v224
    %229 = vst [vmem:[#allocation2 + $0x4f0] sm:$0xff] %v225
    %v230 = vmul.f32 %v73, 0.9648882
    %v231 = vperm.slane %v230, 0
    %v232 = vmul.f32 %v86, %v231
    %v233 = vmul.f32 %v91, %v231
    %v234 = vmul.f32 %v96, %v231
    %v235 = vmul.f32 %v101, %v231
    %v236 = vadd.f32 %v232, %v111
    %v237 = vadd.f32 %v233, %v116
    %v238 = vadd.f32 %v234, %v121
    %v239 = vadd.f32 %v235, %v126
    %v240 = vmax.f32 %v236, 0.0
    %v241 = vmax.f32 %v237, 0.0
    %v242 = vmax.f32 %v238, 0.0
    %v243 = vmax.f32 %v239, 0.0
    %244 = vst [vmem:[#allocation2 + $0x30] sm:$0xff] %v240
    %245 = vst [vmem:[#allocation2 + $0x1c8] sm:$0xff] %v241
    %246 = vst [vmem:[#allocation2 + $0x360] sm:$0xff] %v242
    %247 = vst [vmem:[#allocation2 + $0x4f8] sm:$0xff] %v243
    %v248 = vmul.f32 %v73, 0.95241356
    %v249 = vperm.slane %v248, 0
    %v250 = vmul.f32 %v86, %v249
    %v251 = vmul.f32 %v91, %v249
    %v252 = vmul.f32 %v96, %v249
    %v253 = vmul.f32 %v101, %v249
    %v254 = vadd.f32 %v250, %v111
    %v255 = vadd.f32 %v251, %v116
    %v256 = vadd.f32 %v252, %v121
    %v257 = vadd.f32 %v253, %v126
    %v258 = vmax.f32 %v254, 0.0
    %v259 = vmax.f32 %v255, 0.0
    %v260 = vmax.f32 %v256, 0.0
    %v261 = vmax.f32 %v257, 0.0
    %262 = vst [vmem:[#allocation2 + $0x38] sm:$0xff] %v258
    %263 = vst [vmem:[#allocation2 + $0x1d0] sm:$0xff] %v259
    %264 = vst [vmem:[#allocation2 + $0x368] sm:$0xff] %v260
    %265 = vst [vmem:[#allocation2 + $0x500] sm:$0xff] %v261
    %v266 = vmul.f32 %v73, 0.9381533
    %v267 = vperm.slane %v266, 0
    %v268 = vmul.f32 %v86, %v267
    %v269 = vmul.f32 %v91, %v267
    %v270 = vmul.f32 %v96, %v267
    %v271 = vmul.f32 %v101, %v267
    %v272 = vadd.f32 %v268, %v111
    %v273 = vadd.f32 %v269, %v116
    %v274 = vadd.f32 %v270, %v121
    %v275 = vadd.f32 %v271, %v126
    %v276 = vmax.f32 %v272, 0.0
    %v277 = vmax.f32 %v273, 0.0
    %v278 = vmax.f32 %v274, 0.0
    %v279 = vmax.f32 %v275, 0.0
    %280 = vst [vmem:[#allocation2 + $0x40] sm:$0xff] %v276
    %281 = vst [vmem:[#allocation2 + $0x1d8] sm:$0xff] %v277
    %282 = vst [vmem:[#allocation2 + $0x370] sm:$0xff] %v278
    %283 = vst [vmem:[#allocation2 + $0x508] sm:$0xff] %v279
    %v284 = vmul.f32 %v73, 0.92216396
    %v285 = vperm.slane %v284, 0
    %v286 = vmul.f32 %v86, %v285
    %v287 = vmul.f32 %v91, %v285
    %v288 = vmul.f32 %v96, %v285
    %v289 = vmul.f32 %v101, %v285
    %v290 = vadd.f32 %v286, %v111
    %v291 = vadd.f32 %v287, %v116
    %v292 = vadd.f32 %v288, %v121
    %v293 = vadd.f32 %v289, %v126
    %v294 = vmax.f32 %v290, 0.0
    %v295 = vmax.f32 %v291, 0.0
    %v296 = vmax.f32 %v292, 0.0
    %v297 = vmax.f32 %v293, 0.0
    %298 = vst [vmem:[#allocation2 + $0x48] sm:$0xff] %v294
    %299 = vst [vmem:[#allocation2 + $0x1e0] sm:$0xff] %v295
    %300 = vst [vmem:[#allocation2 + $0x378] sm:$0xff] %v296
    %301 = vst [vmem:[#allocation2 + $0x510] sm:$0xff] %v297
    %v302 = vmul.f32 %v73, 0.9045085
    %v303 = vperm.slane %v302, 0
    %v304 = vmul.f32 %v86, %v303
    %v305 = vmul.f32 %v91, %v303
    %v306 = vmul.f32 %v96, %v303
    %v307 = vmul.f32 %v101, %v303
    %v308 = vadd.f32 %v304, %v111
    %v309 = vadd.f32 %v305, %v116
    %v310 = vadd.f32 %v306, %v121
    %v311 = vadd.f32 %v307, %v126
    %v312 = vmax.f32 %v308, 0.0
    %v313 = vmax.f32 %v309, 0.0
    %v314 = vmax.f32 %v310, 0.0
    %v315 = vmax.f32 %v311, 0.0
    %316 = vst [vmem:[#allocation2 + $0x50] sm:$0xff] %v312
    %317 = vst [vmem:[#allocation2 + $0x1e8] sm:$0xff] %v313
    %318 = vst [vmem:[#allocation2 + $0x380] sm:$0xff] %v314
    %319 = vst [vmem:[#allocation2 + $0x518] sm:$0xff] %v315
    %v320 = vmul.f32 %v73, 0.88525665
    %v321 = vperm.slane %v320, 0
    %v322 = vmul.f32 %v86, %v321
    %v323 = vmul.f32 %v91, %v321
    %v324 = vmul.f32 %v96, %v321
    %v325 = vmul.f32 %v101, %v321
    %v326 = vadd.f32 %v322, %v111
    %v327 = vadd.f32 %v323, %v116
    %v328 = vadd.f32 %v324, %v121
    %v329 = vadd.f32 %v325, %v126
    %v330 = vmax.f32 %v326, 0.0
    %v331 = vmax.f32 %v327, 0.0
    %v332 = vmax.f32 %v328, 0.0
    %v333 = vmax.f32 %v329, 0.0
    %334 = vst [vmem:[#allocation2 + $0x58] sm:$0xff] %v330
    %335 = vst [vmem:[#allocation2 + $0x1f0] sm:$0xff] %v331
    %336 = vst [vmem:[#allocation2 + $0x388] sm:$0xff] %v332
    %337 = vst [vmem:[#allocation2 + $0x520] sm:$0xff] %v333
    %v338 = vmul.f32 %v73, 0.8644843
    %v339 = vperm.slane %v338, 0
    %v340 = vmul.f32 %v86, %v339
    %v341 = vmul.f32 %v91, %v339
    %v342 = vmul.f32 %v96, %v339
    %v343 = vmul.f32 %v101, %v339
    %v344 = vadd.f32 %v340, %v111
    %v345 = vadd.f32 %v341, %v116
    %v346 = vadd.f32 %v342, %v121
    %v347 = vadd.f32 %v343, %v126
    %v348 = vmax.f32 %v344, 0.0
    %v349 = vmax.f32 %v345, 0.0
    %v350 = vmax.f32 %v346, 0.0
    %v351 = vmax.f32 %v347, 0.0
    %352 = vst [vmem:[#allocation2 + $0x60] sm:$0xff] %v348
    %353 = vst [vmem:[#allocation2 + $0x1f8] sm:$0xff] %v349
    %354 = vst [vmem:[#allocation2 + $0x390] sm:$0xff] %v350
    %355 = vst [vmem:[#allocation2 + $0x528] sm:$0xff] %v351
    %v356 = vmul.f32 %v73, 0.8422736
    %v357 = vperm.slane %v356, 0
    %v358 = vmul.f32 %v86, %v357
    %v359 = vmul.f32 %v91, %v357
    %v360 = vmul.f32 %v96, %v357
    %v361 = vmul.f32 %v101, %v357
    %v362 = vadd.f32 %v358, %v111
    %v363 = vadd.f32 %v359, %v116
    %v364 = vadd.f32 %v360, %v121
    %v365 = vadd.f32 %v361, %v126
    %v366 = vmax.f32 %v362, 0.0
    %v367 = vmax.f32 %v363, 0.0
    %v368 = vmax.f32 %v364, 0.0
    %v369 = vmax.f32 %v365, 0.0
    %370 = vst [vmem:[#allocation2 + $0x68] sm:$0xff] %v366
    %371 = vst [vmem:[#allocation2 + $0x200] sm:$0xff] %v367
    %372 = vst [vmem:[#allocation2 + $0x398] sm:$0xff] %v368
    %373 = vst [vmem:[#allocation2 + $0x530] sm:$0xff] %v369
    %v374 = vmul.f32 %v73, 0.818712
    %v375 = vperm.slane %v374, 0
    %v376 = vmul.f32 %v86, %v375
    %v377 = vmul.f32 %v91, %v375
    %v378 = vmul.f32 %v96, %v375
    %v379 = vmul.f32 %v101, %v375
    %v380 = vadd.f32 %v376, %v111
    %v381 = vadd.f32 %v377, %v116
    %v382 = vadd.f32 %v378, %v121
    %v383 = vadd.f32 %v379, %v126
    %v384 = vmax.f32 %v380, 0.0
    %v385 = vmax.f32 %v381, 0.0
    %v386 = vmax.f32 %v382, 0.0
    %v387 = vmax.f32 %v383, 0.0
    %388 = vst [vmem:[#allocation2 + $0x70] sm:$0xff] %v384
    %389 = vst [vmem:[#allocation2 + $0x208] sm:$0xff] %v385
    %390 = vst [vmem:[#allocation2 + $0x3a0] sm:$0xff] %v386
    %391 = vst [vmem:[#allocation2 + $0x538] sm:$0xff] %v387
    %v392 = vmul.f32 %v73, 0.7938926
    %v393 = vperm.slane %v392, 0
    %v394 = vmul.f32 %v86, %v393
    %v395 = vmul.f32 %v91, %v393
    %v396 = vmul.f32 %v96, %v393
    %v397 = vmul.f32 %v101, %v393
    %v398 = vadd.f32 %v394, %v111
    %v399 = vadd.f32 %v395, %v116
    %v400 = vadd.f32 %v396, %v121
    %v401 = vadd.f32 %v397, %v126
    %v402 = vmax.f32 %v398, 0.0
    %v403 = vmax.f32 %v399, 0.0
    %v404 = vmax.f32 %v400, 0.0
    %v405 = vmax.f32 %v401, 0.0
    %406 = vst [vmem:[#allocation2 + $0x78] sm:$0xff] %v402
    %407 = vst [vmem:[#allocation2 + $0x210] sm:$0xff] %v403
    %408 = vst [vmem:[#allocation2 + $0x3a8] sm:$0xff] %v404
    %409 = vst [vmem:[#allocation2 + $0x540] sm:$0xff] %v405
    %v410 = vmul.f32 %v73, 0.7679134
    %v411 = vperm.slane %v410, 0
    %v412 = vmul.f32 %v86, %v411
    %v413 = vmul.f32 %v91, %v411
    %v414 = vmul.f32 %v96, %v411
    %v415 = vmul.f32 %v101, %v411
    %v416 = vadd.f32 %v412, %v111
    %v417 = vadd.f32 %v413, %v116
    %v418 = vadd.f32 %v414, %v121
    %v419 = vadd.f32 %v415, %v126
    %v420 = vmax.f32 %v416, 0.0
    %v421 = vmax.f32 %v417, 0.0
    %v422 = vmax.f32 %v418, 0.0
    %v423 = vmax.f32 %v419, 0.0
    %424 = vst [vmem:[#allocation2 + $0x80] sm:$0xff] %v420
    %425 = vst [vmem:[#allocation2 + $0x218] sm:$0xff] %v421
    %426 = vst [vmem:[#allocation2 + $0x3b0] sm:$0xff] %v422
    %427 = vst [vmem:[#allocation2 + $0x548] sm:$0xff] %v423
    %v428 = vmul.f32 %v73, 0.74087685
    %v429 = vperm.slane %v428, 0
    %v430 = vmul.f32 %v86, %v429
    %v431 = vmul.f32 %v91, %v429
    %v432 = vmul.f32 %v96, %v429
    %v433 = vmul.f32 %v101, %v429
    %v434 = vadd.f32 %v430, %v111
    %v435 = vadd.f32 %v431, %v116
    %v436 = vadd.f32 %v432, %v121
    %v437 = vadd.f32 %v433, %v126
    %v438 = vmax.f32 %v434, 0.0
    %v439 = vmax.f32 %v435, 0.0
    %v440 = vmax.f32 %v436, 0.0
    %v441 = vmax.f32 %v437, 0.0
    %442 = vst [vmem:[#allocation2 + $0x88] sm:$0xff] %v438
    %443 = vst [vmem:[#allocation2 + $0x220] sm:$0xff] %v439
    %444 = vst [vmem:[#allocation2 + $0x3b8] sm:$0xff] %v440
    %445 = vst [vmem:[#allocation2 + $0x550] sm:$0xff] %v441
    %v446 = vmul.f32 %v73, 0.7128897
    %v447 = vperm.slane %v446, 0
    %v448 = vmul.f32 %v86, %v447
    %v449 = vmul.f32 %v91, %v447
    %v450 = vmul.f32 %v96, %v447
    %v451 = vmul.f32 %v101, %v447
    %v452 = vadd.f32 %v448, %v111
    %v453 = vadd.f32 %v449, %v116
    %v454 = vadd.f32 %v450, %v121
    %v455 = vadd.f32 %v451, %v126
    %v456 = vmax.f32 %v452, 0.0
    %v457 = vmax.f32 %v453, 0.0
    %v458 = vmax.f32 %v454, 0.0
    %v459 = vmax.f32 %v455, 0.0
    %460 = vst [vmem:[#allocation2 + $0x90] sm:$0xff] %v456
    %461 = vst [vmem:[#allocation2 + $0x228] sm:$0xff] %v457
    %462 = vst [vmem:[#allocation2 + $0x3c0] sm:$0xff] %v458
    %463 = vst [vmem:[#allocation2 + $0x558] sm:$0xff] %v459
    %v464 = vmul.f32 %v73, 0.68406224
    %v465 = vperm.slane %v464, 0
    %v466 = vmul.f32 %v86, %v465
    %v467 = vmul.f32 %v91, %v465
    %v468 = vmul.f32 %v96, %v465
    %v469 = vmul.f32 %v101, %v465
    %v470 = vadd.f32 %v466, %v111
    %v471 = vadd.f32 %v467, %v116
    %v472 = vadd.f32 %v468, %v121
    %v473 = vadd.f32 %v469, %v126
    %v474 = vmax.f32 %v470, 0.0
    %v475 = vmax.f32 %v471, 0.0
    %v476 = vmax.f32 %v472, 0.0
    %v477 = vmax.f32 %v473, 0.0
    %478 = vst [vmem:[#allocation2 + $0x98] sm:$0xff] %v474
    %479 = vst [vmem:[#allocation2 + $0x230] sm:$0xff] %v475
    %480 = vst [vmem:[#allocation2 + $0x3c8] sm:$0xff] %v476
    %481 = vst [vmem:[#allocation2 + $0x560] sm:$0xff] %v477
    %v482 = vmul.f32 %v73, 0.6545085
    %v483 = vperm.slane %v482, 0
    %v484 = vmul.f32 %v86, %v483
    %v485 = vmul.f32 %v91, %v483
    %v486 = vmul.f32 %v96, %v483
    %v487 = vmul.f32 %v101, %v483
    %v488 = vadd.f32 %v484, %v111
    %v489 = vadd.f32 %v485, %v116
    %v490 = vadd.f32 %v486, %v121
    %v491 = vadd.f32 %v487, %v126
    %v492 = vmax.f32 %v488, 0.0
    %v493 = vmax.f32 %v489, 0.0
    %v494 = vmax.f32 %v490, 0.0
    %v495 = vmax.f32 %v491, 0.0
    %496 = vst [vmem:[#allocation2 + $0xa0] sm:$0xff] %v492
    %497 = vst [vmem:[#allocation2 + $0x238] sm:$0xff] %v493
    %498 = vst [vmem:[#allocation2 + $0x3d0] sm:$0xff] %v494
    %499 = vst [vmem:[#allocation2 + $0x568] sm:$0xff] %v495
    %v500 = vmul.f32 %v73, 0.62434494
    %v501 = vperm.slane %v500, 0
    %v502 = vmul.f32 %v86, %v501
    %v503 = vmul.f32 %v91, %v501
    %v504 = vmul.f32 %v96, %v501
    %v505 = vmul.f32 %v101, %v501
    %v506 = vadd.f32 %v502, %v111
    %v507 = vadd.f32 %v503, %v116
    %v508 = vadd.f32 %v504, %v121
    %v509 = vadd.f32 %v505, %v126
    %v510 = vmax.f32 %v506, 0.0
    %v511 = vmax.f32 %v507, 0.0
    %v512 = vmax.f32 %v508, 0.0
    %v513 = vmax.f32 %v509, 0.0
    %514 = vst [vmem:[#allocation2 + $0xa8] sm:$0xff] %v510
    %515 = vst [vmem:[#allocation2 + $0x240] sm:$0xff] %v511
    %516 = vst [vmem:[#allocation2 + $0x3d8] sm:$0xff] %v512
    %517 = vst [vmem:[#allocation2 + $0x570] sm:$0xff] %v513
    %v518 = vmul.f32 %v73, 0.59369063
    %v519 = vperm.slane %v518, 0
    %v520 = vmul.f32 %v86, %v519
    %v521 = vmul.f32 %v91, %v519
    %v522 = vmul.f32 %v96, %v519
    %v523 = vmul.f32 %v101, %v519
    %v524 = vadd.f32 %v520, %v111
    %v525 = vadd.f32 %v521, %v116
    %v526 = vadd.f32 %v522, %v121
    %v527 = vadd.f32 %v523, %v126
    %v528 = vmax.f32 %v524, 0.0
    %v529 = vmax.f32 %v525, 0.0
    %v530 = vmax.f32 %v526, 0.0
    %v531 = vmax.f32 %v527, 0.0
    %532 = vst [vmem:[#allocation2 + $0xb0] sm:$0xff] %v528
    %533 = vst [vmem:[#allocation2 + $0x248] sm:$0xff] %v529
    %534 = vst [vmem:[#allocation2 + $0x3e0] sm:$0xff] %v530
    %535 = vst [vmem:[#allocation2 + $0x578] sm:$0xff] %v531
    %v536 = vmul.f32 %v73, 0.5626666
    %v537 = vperm.slane %v536, 0
    %v538 = vmul.f32 %v86, %v537
    %v539 = vmul.f32 %v91, %v537
    %v540 = vmul.f32 %v96, %v537
    %v541 = vmul.f32 %v101, %v537
    %v542 = vadd.f32 %v538, %v111
    %v543 = vadd.f32 %v539, %v116
    %v544 = vadd.f32 %v540, %v121
    %v545 = vadd.f32 %v541, %v126
    %v546 = vmax.f32 %v542, 0.0
    %v547 = vmax.f32 %v543, 0.0
    %v548 = vmax.f32 %v544, 0.0
    %v549 = vmax.f32 %v545, 0.0
    %550 = vst [vmem:[#allocation2 + $0xb8] sm:$0xff] %v546
    %551 = vst [vmem:[#allocation2 + $0x250] sm:$0xff] %v547
    %552 = vst [vmem:[#allocation2 + $0x3e8] sm:$0xff] %v548
    %553 = vst [vmem:[#allocation2 + $0x580] sm:$0xff] %v549
    %v554 = vmul.f32 %v73, 0.53139526
    %v555 = vperm.slane %v554, 0
    %v556 = vmul.f32 %v86, %v555
    %v557 = vmul.f32 %v91, %v555
    %v558 = vmul.f32 %v96, %v555
    %v559 = vmul.f32 %v101, %v555
    %v560 = vadd.f32 %v556, %v111
    %v561 = vadd.f32 %v557, %v116
    %v562 = vadd.f32 %v558, %v121
    %v563 = vadd.f32 %v559, %v126
    %v564 = vmax.f32 %v560, 0.0
    %v565 = vmax.f32 %v561, 0.0
    %v566 = vmax.f32 %v562, 0.0
    %v567 = vmax.f32 %v563, 0.0
    %568 = vst [vmem:[#allocation2 + $0xc0] sm:$0xff] %v564
    %569 = vst [vmem:[#allocation2 + $0x258] sm:$0xff] %v565
    %570 = vst [vmem:[#allocation2 + $0x3f0] sm:$0xff] %v566
    %571 = vst [vmem:[#allocation2 + $0x588] sm:$0xff] %v567
    %v572 = vmul.f32 %v73, 0.5
    %v573 = vperm.slane %v572, 0
    %v574 = vmul.f32 %v86, %v573
    %v575 = vmul.f32 %v91, %v573
    %v576 = vmul.f32 %v96, %v573
    %v577 = vmul.f32 %v101, %v573
    %v578 = vadd.f32 %v574, %v111
    %v579 = vadd.f32 %v575, %v116
    %v580 = vadd.f32 %v576, %v121
    %v581 = vadd.f32 %v577, %v126
    %v582 = vmax.f32 %v578, 0.0
    %v583 = vmax.f32 %v579, 0.0
    %v584 = vmax.f32 %v580, 0.0
    %v585 = vmax.f32 %v581, 0.0
    %586 = vst [vmem:[#allocation2 + $0xc8] sm:$0xff] %v582
    %587 = vst [vmem:[#allocation2 + $0x260] sm:$0xff] %v583
    %588 = vst [vmem:[#allocation2 + $0x3f8] sm:$0xff] %v584
    %589 = vst [vmem:[#allocation2 + $0x590] sm:$0xff] %v585
    %v590 = vmul.f32 %v73, 0.46860474
    %v591 = vperm.slane %v590, 0
    %v592 = vmul.f32 %v86, %v591
    %v593 = vmul.f32 %v91, %v591
    %v594 = vmul.f32 %v96, %v591
    %v595 = vmul.f32 %v101, %v591
    %v596 = vadd.f32 %v592, %v111
    %v597 = vadd.f32 %v593, %v116
    %v598 = vadd.f32 %v594, %v121
    %v599 = vadd.f32 %v595, %v126
    %v600 = vmax.f32 %v596, 0.0
    %v601 = vmax.f32 %v597, 0.0
    %v602 = vmax.f32 %v598, 0.0
    %v603 = vmax.f32 %v599, 0.0
    %604 = vst [vmem:[#allocation2 + $0xd0] sm:$0xff] %v600
    %605 = vst [vmem:[#allocation2 + $0x268] sm:$0xff] %v601
    %606 = vst [vmem:[#allocation2 + $0x400] sm:$0xff] %v602
    %607 = vst [vmem:[#allocation2 + $0x598] sm:$0xff] %v603
    %v608 = vmul.f32 %v73, 0.43733338
    %v609 = vperm.slane %v608, 0
    %v610 = vmul.f32 %v86, %v609
    %v611 = vmul.f32 %v91, %v609
    %v612 = vmul.f32 %v96, %v609
    %v613 = vmul.f32 %v101, %v609
    %v614 = vadd.f32 %v610, %v111
    %v615 = vadd.f32 %v611, %v116
    %v616 = vadd.f32 %v612, %v121
    %v617 = vadd.f32 %v613, %v126
    %v618 = vmax.f32 %v614, 0.0
    %v619 = vmax.f32 %v615, 0.0
    %v620 = vmax.f32 %v616, 0.0
    %v621 = vmax.f32 %v617, 0.0
    %622 = vst [vmem:[#allocation2 + $0xd8] sm:$0xff] %v618
    %623 = vst [vmem:[#allocation2 + $0x270] sm:$0xff] %v619
    %624 = vst [vmem:[#allocation2 + $0x408] sm:$0xff] %v620
    %625 = vst [vmem:[#allocation2 + $0x5a0] sm:$0xff] %v621
    %v626 = vmul.f32 %v73, 0.40630934
    %v627 = vperm.slane %v626, 0
    %v628 = vmul.f32 %v86, %v627
    %v629 = vmul.f32 %v91, %v627
    %v630 = vmul.f32 %v96, %v627
    %v631 = vmul.f32 %v101, %v627
    %v632 = vadd.f32 %v628, %v111
    %v633 = vadd.f32 %v629, %v116
    %v634 = vadd.f32 %v630, %v121
    %v635 = vadd.f32 %v631, %v126
    %v636 = vmax.f32 %v632, 0.0
    %v637 = vmax.f32 %v633, 0.0
    %v638 = vmax.f32 %v634, 0.0
    %v639 = vmax.f32 %v635, 0.0
    %640 = vst [vmem:[#allocation2 + $0xe0] sm:$0xff] %v636
    %641 = vst [vmem:[#allocation2 + $0x278] sm:$0xff] %v637
    %642 = vst [vmem:[#allocation2 + $0x410] sm:$0xff] %v638
    %643 = vst [vmem:[#allocation2 + $0x5a8] sm:$0xff] %v639
    %v644 = vmul.f32 %v73, 0.37565506
    %v645 = vperm.slane %v644, 0
    %v646 = vmul.f32 %v86, %v645
    %v647 = vmul.f32 %v91, %v645
    %v648 = vmul.f32 %v96, %v645
    %v649 = vmul.f32 %v101, %v645
    %v650 = vadd.f32 %v646, %v111
    %v651 = vadd.f32 %v647, %v116
    %v652 = vadd.f32 %v648, %v121
    %v653 = vadd.f32 %v649, %v126
    %v654 = vmax.f32 %v650, 0.0
    %v655 = vmax.f32 %v651, 0.0
    %v656 = vmax.f32 %v652, 0.0
    %v657 = vmax.f32 %v653, 0.0
    %658 = vst [vmem:[#allocation2 + $0xe8] sm:$0xff] %v654
    %659 = vst [vmem:[#allocation2 + $0x280] sm:$0xff] %v655
    %660 = vst [vmem:[#allocation2 + $0x418] sm:$0xff] %v656
    %661 = vst [vmem:[#allocation2 + $0x5b0] sm:$0xff] %v657
    %v662 = vmul.f32 %v73, 0.3454915
    %v663 = vperm.slane %v662, 0
    %v664 = vmul.f32 %v86, %v663
    %v665 = vmul.f32 %v91, %v663
    %v666 = vmul.f32 %v96, %v663
    %v667 = vmul.f32 %v101, %v663
    %v668 = vadd.f32 %v664, %v111
    %v669 = vadd.f32 %v665, %v116
    %v670 = vadd.f32 %v666, %v121
    %v671 = vadd.f32 %v667, %v126
    %v672 = vmax.f32 %v668, 0.0
    %v673 = vmax.f32 %v669, 0.0
    %v674 = vmax.f32 %v670, 0.0
    %v675 = vmax.f32 %v671, 0.0
    %676 = vst [vmem:[#allocation2 + $0xf0] sm:$0xff] %v672
    %677 = vst [vmem:[#allocation2 + $0x288] sm:$0xff] %v673
    %678 = vst [vmem:[#allocation2 + $0x420] sm:$0xff] %v674
    %679 = vst [vmem:[#allocation2 + $0x5b8] sm:$0xff] %v675
    %v680 = vmul.f32 %v73, 0.31593773
    %v681 = vperm.slane %v680, 0
    %v682 = vmul.f32 %v86, %v681
    %v683 = vmul.f32 %v91, %v681
    %v684 = vmul.f32 %v96, %v681
    %v685 = vmul.f32 %v101, %v681
    %v686 = vadd.f32 %v682, %v111
    %v687 = vadd.f32 %v683, %v116
    %v688 = vadd.f32 %v684, %v121
    %v689 = vadd.f32 %v685, %v126
    %v690 = vmax.f32 %v686, 0.0
    %v691 = vmax.f32 %v687, 0.0
    %v692 = vmax.f32 %v688, 0.0
    %v693 = vmax.f32 %v689, 0.0
    %694 = vst [vmem:[#allocation2 + $0xf8] sm:$0xff] %v690
    %695 = vst [vmem:[#allocation2 + $0x290] sm:$0xff] %v691
    %696 = vst [vmem:[#allocation2 + $0x428] sm:$0xff] %v692
    %697 = vst [vmem:[#allocation2 + $0x5c0] sm:$0xff] %v693
    %v698 = vmul.f32 %v73, 0.28711036
    %v699 = vperm.slane %v698, 0
    %v700 = vmul.f32 %v86, %v699
    %v701 = vmul.f32 %v91, %v699
    %v702 = vmul.f32 %v96, %v699
    %v703 = vmul.f32 %v101, %v699
    %v704 = vadd.f32 %v700, %v111
    %v705 = vadd.f32 %v701, %v116
    %v706 = vadd.f32 %v702, %v121
    %v707 = vadd.f32 %v703, %v126
    %v708 = vmax.f32 %v704, 0.0
    %v709 = vmax.f32 %v705, 0.0
    %v710 = vmax.f32 %v706, 0.0
    %v711 = vmax.f32 %v707, 0.0
    %712 = vst [vmem:[#allocation2 + $0x100] sm:$0xff] %v708
    %713 = vst [vmem:[#allocation2 + $0x298] sm:$0xff] %v709
    %714 = vst [vmem:[#allocation2 + $0x430] sm:$0xff] %v710
    %715 = vst [vmem:[#allocation2 + $0x5c8] sm:$0xff] %v711
    %v716 = vmul.f32 %v73, 0.25912315
    %v717 = vperm.slane %v716, 0
    %v718 = vmul.f32 %v86, %v717
    %v719 = vmul.f32 %v91, %v717
    %v720 = vmul.f32 %v96, %v717
    %v721 = vmul.f32 %v101, %v717
    %v722 = vadd.f32 %v718, %v111
    %v723 = vadd.f32 %v719, %v116
    %v724 = vadd.f32 %v720, %v121
    %v725 = vadd.f32 %v721, %v126
    %v726 = vmax.f32 %v722, 0.0
    %v727 = vmax.f32 %v723, 0.0
    %v728 = vmax.f32 %v724, 0.0
    %v729 = vmax.f32 %v725, 0.0
    %730 = vst [vmem:[#allocation2 + $0x108] sm:$0xff] %v726
    %731 = vst [vmem:[#allocation2 + $0x2a0] sm:$0xff] %v727
    %732 = vst [vmem:[#allocation2 + $0x438] sm:$0xff] %v728
    %733 = vst [vmem:[#allocation2 + $0x5d0] sm:$0xff] %v729
    %v734 = vmul.f32 %v73, 0.2320866
    %v735 = vperm.slane %v734, 0
    %v736 = vmul.f32 %v86, %v735
    %v737 = vmul.f32 %v91, %v735
    %v738 = vmul.f32 %v96, %v735
    %v739 = vmul.f32 %v101, %v735
    %v740 = vadd.f32 %v736, %v111
    %v741 = vadd.f32 %v737, %v116
    %v742 = vadd.f32 %v738, %v121
    %v743 = vadd.f32 %v739, %v126
    %v744 = vmax.f32 %v740, 0.0
    %v745 = vmax.f32 %v741, 0.0
    %v746 = vmax.f32 %v742, 0.0
    %v747 = vmax.f32 %v743, 0.0
    %748 = vst [vmem:[#allocation2 + $0x110] sm:$0xff] %v744
    %749 = vst [vmem:[#allocation2 + $0x2a8] sm:$0xff] %v745
    %750 = vst [vmem:[#allocation2 + $0x440] sm:$0xff] %v746
    %751 = vst [vmem:[#allocation2 + $0x5d8] sm:$0xff] %v747
    %v752 = vmul.f32 %v73, 0.20610738
    %v753 = vperm.slane %v752, 0
    %v754 = vmul.f32 %v86, %v753
    %v755 = vmul.f32 %v91, %v753
    %v756 = vmul.f32 %v96, %v753
    %v757 = vmul.f32 %v101, %v753
    %v758 = vadd.f32 %v754, %v111
    %v759 = vadd.f32 %v755, %v116
    %v760 = vadd.f32 %v756, %v121
    %v761 = vadd.f32 %v757, %v126
    %v762 = vmax.f32 %v758, 0.0
    %v763 = vmax.f32 %v759, 0.0
    %v764 = vmax.f32 %v760, 0.0
    %v765 = vmax.f32 %v761, 0.0
    %766 = vst [vmem:[#allocation2 + $0x118] sm:$0xff] %v762
    %767 = vst [vmem:[#allocation2 + $0x2b0] sm:$0xff] %v763
    %768 = vst [vmem:[#allocation2 + $0x448] sm:$0xff] %v764
    %769 = vst [vmem:[#allocation2 + $0x5e0] sm:$0xff] %v765
    %v770 = vmul.f32 %v73, 0.181288
    %v771 = vperm.slane %v770, 0
    %v772 = vmul.f32 %v86, %v771
    %v773 = vmul.f32 %v91, %v771
    %v774 = vmul.f32 %v96, %v771
    %v775 = vmul.f32 %v101, %v771
    %v776 = vadd.f32 %v772, %v111
    %v777 = vadd.f32 %v773, %v116
    %v778 = vadd.f32 %v774, %v121
    %v779 = vadd.f32 %v775, %v126
    %v780 = vmax.f32 %v776, 0.0
    %v781 = vmax.f32 %v777, 0.0
    %v782 = vmax.f32 %v778, 0.0
    %v783 = vmax.f32 %v779, 0.0
    %784 = vst [vmem:[#allocation2 + $0x120] sm:$0xff] %v780
    %785 = vst [vmem:[#allocation2 + $0x2b8] sm:$0xff] %v781
    %786 = vst [vmem:[#allocation2 + $0x450] sm:$0xff] %v782
    %787 = vst [vmem:[#allocation2 + $0x5e8] sm:$0xff] %v783
    %v788 = vmul.f32 %v73, 0.15772644
    %v789 = vperm.slane %v788, 0
    %v790 = vmul.f32 %v86, %v789
    %v791 = vmul.f32 %v91, %v789
    %v792 = vmul.f32 %v96, %v789
    %v793 = vmul.f32 %v101, %v789
    %v794 = vadd.f32 %v790, %v111
    %v795 = vadd.f32 %v791, %v116
    %v796 = vadd.f32 %v792, %v121
    %v797 = vadd.f32 %v793, %v126
    %v798 = vmax.f32 %v794, 0.0
    %v799 = vmax.f32 %v795, 0.0
    %v800 = vmax.f32 %v796, 0.0
    %v801 = vmax.f32 %v797, 0.0
    %802 = vst [vmem:[#allocation2 + $0x128] sm:$0xff] %v798
    %803 = vst [vmem:[#allocation2 + $0x2c0] sm:$0xff] %v799
    %804 = vst [vmem:[#allocation2 + $0x458] sm:$0xff] %v800
    %805 = vst [vmem:[#allocation2 + $0x5f0] sm:$0xff] %v801
    %v806 = vmul.f32 %v73, 0.13551569
    %v807 = vperm.slane %v806, 0
    %v808 = vmul.f32 %v86, %v807
    %v809 = vmul.f32 %v91, %v807
    %v810 = vmul.f32 %v96, %v807
    %v811 = vmul.f32 %v101, %v807
    %v812 = vadd.f32 %v808, %v111
    %v813 = vadd.f32 %v809, %v116
    %v814 = vadd.f32 %v810, %v121
    %v815 = vadd.f32 %v811, %v126
    %v816 = vmax.f32 %v812, 0.0
    %v817 = vmax.f32 %v813, 0.0
    %v818 = vmax.f32 %v814, 0.0
    %v819 = vmax.f32 %v815, 0.0
    %820 = vst [vmem:[#allocation2 + $0x130] sm:$0xff] %v816
    %821 = vst [vmem:[#allocation2 + $0x2c8] sm:$0xff] %v817
    %822 = vst [vmem:[#allocation2 + $0x460] sm:$0xff] %v818
    %823 = vst [vmem:[#allocation2 + $0x5f8] sm:$0xff] %v819
    %v824 = vmul.f32 %v73, 0.11474338
    %v825 = vperm.slane %v824, 0
    %v826 = vmul.f32 %v86, %v825
    %v827 = vmul.f32 %v91, %v825
    %v828 = vmul.f32 %v96, %v825
    %v829 = vmul.f32 %v101, %v825
    %v830 = vadd.f32 %v826, %v111
    %v831 = vadd.f32 %v827, %v116
    %v832 = vadd.f32 %v828, %v121
    %v833 = vadd.f32 %v829, %v126
    %v834 = vmax.f32 %v830, 0.0
    %v835 = vmax.f32 %v831, 0.0
    %v836 = vmax.f32 %v832, 0.0
    %v837 = vmax.f32 %v833, 0.0
    %838 = vst [vmem:[#allocation2 + $0x138] sm:$0xff] %v834
    %839 = vst [vmem:[#allocation2 + $0x2d0] sm:$0xff] %v835
    %840 = vst [vmem:[#allocation2 + $0x468] sm:$0xff] %v836
    %841 = vst [vmem:[#allocation2 + $0x600] sm:$0xff] %v837
    %v842 = vmul.f32 %v73, 0.0954915
    %v843 = vperm.slane %v842, 0
    %v844 = vmul.f32 %v86, %v843
    %v845 = vmul.f32 %v91, %v843
    %v846 = vmul.f32 %v96, %v843
    %v847 = vmul.f32 %v101, %v843
    %v848 = vadd.f32 %v844, %v111
    %v849 = vadd.f32 %v845, %v116
    %v850 = vadd.f32 %v846, %v121
    %v851 = vadd.f32 %v847, %v126
    %v852 = vmax.f32 %v848, 0.0
    %v853 = vmax.f32 %v849, 0.0
    %v854 = vmax.f32 %v850, 0.0
    %v855 = vmax.f32 %v851, 0.0
    %856 = vst [vmem:[#allocation2 + $0x140] sm:$0xff] %v852
    %857 = vst [vmem:[#allocation2 + $0x2d8] sm:$0xff] %v853
    %858 = vst [vmem:[#allocation2 + $0x470] sm:$0xff] %v854
    %859 = vst [vmem:[#allocation2 + $0x608] sm:$0xff] %v855
    %v860 = vmul.f32 %v73, 0.07783604
    %v861 = vperm.slane %v860, 0
    %v862 = vmul.f32 %v86, %v861
    %v863 = vmul.f32 %v91, %v861
    %v864 = vmul.f32 %v96, %v861
    %v865 = vmul.f32 %v101, %v861
    %v866 = vadd.f32 %v862, %v111
    %v867 = vadd.f32 %v863, %v116
    %v868 = vadd.f32 %v864, %v121
    %v869 = vadd.f32 %v865, %v126
    %v870 = vmax.f32 %v866, 0.0
    %v871 = vmax.f32 %v867, 0.0
    %v872 = vmax.f32 %v868, 0.0
    %v873 = vmax.f32 %v869, 0.0
    %874 = vst [vmem:[#allocation2 + $0x148] sm:$0xff] %v870
    %875 = vst [vmem:[#allocation2 + $0x2e0] sm:$0xff] %v871
    %876 = vst [vmem:[#allocation2 + $0x478] sm:$0xff] %v872
    %877 = vst [vmem:[#allocation2 + $0x610] sm:$0xff] %v873
    %v878 = vmul.f32 %v73, 0.061846673
    %v879 = vperm.slane %v878, 0
    %v880 = vmul.f32 %v86, %v879
    %v881 = vmul.f32 %v91, %v879
    %v882 = vmul.f32 %v96, %v879
    %v883 = vmul.f32 %v101, %v879
    %v884 = vadd.f32 %v880, %v111
    %v885 = vadd.f32 %v881, %v116
    %v886 = vadd.f32 %v882, %v121
    %v887 = vadd.f32 %v883, %v126
    %v888 = vmax.f32 %v884, 0.0
    %v889 = vmax.f32 %v885, 0.0
    %v890 = vmax.f32 %v886, 0.0
    %v891 = vmax.f32 %v887, 0.0
    %892 = vst [vmem:[#allocation2 + $0x150] sm:$0xff] %v888
    %893 = vst [vmem:[#allocation2 + $0x2e8] sm:$0xff] %v889
    %894 = vst [vmem:[#allocation2 + $0x480] sm:$0xff] %v890
    %895 = vst [vmem:[#allocation2 + $0x618] sm:$0xff] %v891
    %v896 = vmul.f32 %v73, 0.04758647
    %v897 = vperm.slane %v896, 0
    %v898 = vmul.f32 %v86, %v897
    %v899 = vmul.f32 %v91, %v897
    %v900 = vmul.f32 %v96, %v897
    %v901 = vmul.f32 %v101, %v897
    %v902 = vadd.f32 %v898, %v111
    %v903 = vadd.f32 %v899, %v116
    %v904 = vadd.f32 %v900, %v121
    %v905 = vadd.f32 %v901, %v126
    %v906 = vmax.f32 %v902, 0.0
    %v907 = vmax.f32 %v903, 0.0
    %v908 = vmax.f32 %v904, 0.0
    %v909 = vmax.f32 %v905, 0.0
    %910 = vst [vmem:[#allocation2 + $0x158] sm:$0xff] %v906
    %911 = vst [vmem:[#allocation2 + $0x2f0] sm:$0xff] %v907
    %912 = vst [vmem:[#allocation2 + $0x488] sm:$0xff] %v908
    %913 = vst [vmem:[#allocation2 + $0x620] sm:$0xff] %v909
    %v914 = vmul.f32 %v73, 0.035111755
    %v915 = vperm.slane %v914, 0
    %v916 = vmul.f32 %v86, %v915
    %v917 = vmul.f32 %v91, %v915
    %v918 = vmul.f32 %v96, %v915
    %v919 = vmul.f32 %v101, %v915
    %v920 = vadd.f32 %v916, %v111
    %v921 = vadd.f32 %v917, %v116
    %v922 = vadd.f32 %v918, %v121
    %v923 = vadd.f32 %v919, %v126
    %v924 = vmax.f32 %v920, 0.0
    %v925 = vmax.f32 %v921, 0.0
    %v926 = vmax.f32 %v922, 0.0
    %v927 = vmax.f32 %v923, 0.0
    %928 = vst [vmem:[#allocation2 + $0x160] sm:$0xff] %v924
    %929 = vst [vmem:[#allocation2 + $0x2f8] sm:$0xff] %v925
    %930 = vst [vmem:[#allocation2 + $0x490] sm:$0xff] %v926
    %931 = vst [vmem:[#allocation2 + $0x628] sm:$0xff] %v927
    %v932 = vmul.f32 %v73, 0.02447173
    %v933 = vperm.slane %v932, 0
    %v934 = vmul.f32 %v86, %v933
    %v935 = vmul.f32 %v91, %v933
    %v936 = vmul.f32 %v96, %v933
    %v937 = vmul.f32 %v101, %v933
    %v938 = vadd.f32 %v934, %v111
    %v939 = vadd.f32 %v935, %v116
    %v940 = vadd.f32 %v936, %v121
    %v941 = vadd.f32 %v937, %v126
    %v942 = vmax.f32 %v938, 0.0
    %v943 = vmax.f32 %v939, 0.0
    %v944 = vmax.f32 %v940, 0.0
    %v945 = vmax.f32 %v941, 0.0
    %946 = vst [vmem:[#allocation2 + $0x168] sm:$0xff] %v942
    %947 = vst [vmem:[#allocation2 + $0x300] sm:$0xff] %v943
    %948 = vst [vmem:[#allocation2 + $0x498] sm:$0xff] %v944
    %949 = vst [vmem:[#allocation2 + $0x630] sm:$0xff] %v945
    %v950 = vmul.f32 %v73, 0.015708417
    %v951 = vperm.slane %v950, 0
    %v952 = vmul.f32 %v86, %v951
    %v953 = vmul.f32 %v91, %v951
    %v954 = vmul.f32 %v96, %v951
    %v955 = vmul.f32 %v101, %v951
    %v956 = vadd.f32 %v952, %v111
    %v957 = vadd.f32 %v953, %v116
    %v958 = vadd.f32 %v954, %v121
    %v959 = vadd.f32 %v955, %v126
    %v960 = vmax.f32 %v956, 0.0
    %v961 = vmax.f32 %v957, 0.0
    %v962 = vmax.f32 %v958, 0.0
    %v963 = vmax.f32 %v959, 0.0
    %964 = vst [vmem:[#allocation2 + $0x170] sm:$0xff] %v960
    %965 = vst [vmem:[#allocation2 + $0x308] sm:$0xff] %v961
    %966 = vst [vmem:[#allocation2 + $0x4a0] sm:$0xff] %v962
    %967 = vst [vmem:[#allocation2 + $0x638] sm:$0xff] %v963
    %v968 = vmul.f32 %v73, 0.008856386
    %v969 = vperm.slane %v968, 0
    %v970 = vmul.f32 %v86, %v969
    %v971 = vmul.f32 %v91, %v969
    %v972 = vmul.f32 %v96, %v969
    %v973 = vmul.f32 %v101, %v969
    %v974 = vadd.f32 %v970, %v111
    %v975 = vadd.f32 %v971, %v116
    %v976 = vadd.f32 %v972, %v121
    %v977 = vadd.f32 %v973, %v126
    %v978 = vmax.f32 %v974, 0.0
    %v979 = vmax.f32 %v975, 0.0
    %v980 = vmax.f32 %v976, 0.0
    %v981 = vmax.f32 %v977, 0.0
    %982 = vst [vmem:[#allocation2 + $0x178] sm:$0xff] %v978
    %983 = vst [vmem:[#allocation2 + $0x310] sm:$0xff] %v979
    %984 = vst [vmem:[#allocation2 + $0x4a8] sm:$0xff] %v980
    %985 = vst [vmem:[#allocation2 + $0x640] sm:$0xff] %v981
    %v986 = vmul.f32 %v73, 0.0039426386
    %v987 = vperm.slane %v986, 0
    %v988 = vmul.f32 %v86, %v987
    %v989 = vmul.f32 %v91, %v987
    %v990 = vmul.f32 %v96, %v987
    %v991 = vmul.f32 %v101, %v987
    %v992 = vadd.f32 %v988, %v111
    %v993 = vadd.f32 %v989, %v116
    %v994 = vadd.f32 %v990, %v121
    %v995 = vadd.f32 %v991, %v126
    %v996 = vmax.f32 %v992, 0.0
    %v997 = vmax.f32 %v993, 0.0
    %v998 = vmax.f32 %v994, 0.0
    %v999 = vmax.f32 %v995, 0.0
    %1000 = vst [vmem:[#allocation2 + $0x180] sm:$0xff] %v996
    %1001 = vst [vmem:[#allocation2 + $0x318] sm:$0xff] %v997
    %1002 = vst [vmem:[#allocation2 + $0x4b0] sm:$0xff] %v998
    %1003 = vst [vmem:[#allocation2 + $0x648] sm:$0xff] %v999
    %v1004 = vmul.f32 %v73, 0.0009866357
    %v1005 = vperm.slane %v1004, 0
    %v1006 = vmul.f32 %v86, %v1005
    %v1007 = vmul.f32 %v91, %v1005
    %v1008 = vmul.f32 %v96, %v1005
    %v1009 = vmul.f32 %v101, %v1005
    %v1010 = vadd.f32 %v1006, %v111
    %v1011 = vadd.f32 %v1007, %v116
    %v1012 = vadd.f32 %v1008, %v121
    %v1013 = vadd.f32 %v1009, %v126
    %v1014 = vmax.f32 %v1010, 0.0
    %v1015 = vmax.f32 %v1011, 0.0
    %v1016 = vmax.f32 %v1012, 0.0
    %v1017 = vmax.f32 %v1013, 0.0
    %1018 = vst [vmem:[#allocation2 + $0x188] sm:$0xff] %v1014
    %1019 = vst [vmem:[#allocation2 + $0x320] sm:$0xff] %v1015
    %1020 = vst [vmem:[#allocation2 + $0x4b8] sm:$0xff] %v1016
    %1021 = vst [vmem:[#allocation2 + $0x650] sm:$0xff] %v1017
    %v1022 = vmul.f32 %v73, 0.0
    %v1023 = vperm.slane %v1022, 0
    %v1024 = vmul.f32 %v86, %v1023
    %v1025 = vmul.f32 %v91, %v1023
    %v1026 = vmul.f32 %v96, %v1023
    %v1027 = vmul.f32 %v101, %v1023
    %v1028 = vadd.f32 %v1024, %v111
    %v1029 = vadd.f32 %v1025, %v116
    %v1030 = vadd.f32 %v1026, %v121
    %v1031 = vadd.f32 %v1027, %v126
    %v1032 = vmax.f32 %v1028, 0.0
    %v1033 = vmax.f32 %v1029, 0.0
    %v1034 = vmax.f32 %v1030, 0.0
    %v1035 = vmax.f32 %v1031, 0.0
    %1036 = vst [vmem:[#allocation2 + $0x190] sm:$0xff] %v1032
    %1037 = vst [vmem:[#allocation2 + $0x328] sm:$0xff] %v1033
    %1038 = vst [vmem:[#allocation2 + $0x4c0] sm:$0xff] %v1034
    %1039 = vst [vmem:[#allocation2 + $0x658] sm:$0xff] %v1035
    %v1040 = vld [vmem:[%s5] sm:$0xff]
    %v1041 = vld [vmem:[%s5 + $0x8] sm:$0xff]
    %v1042 = vld [vmem:[%s5 + $0x10] sm:$0xff]
    %v1043 = vld [vmem:[%s5 + $0x18] sm:$0xff]
    %v1044 = vld [vmem:[#allocation2] sm:$0xff]
    %v1045 = vld [vmem:[#allocation2 + $0x8] sm:$0xff]
    %v1046 = vld [vmem:[#allocation2 + $0x10] sm:$0xff]
    %v1047 = vld [vmem:[#allocation2 + $0x18] sm:$0xff]
    %v1048 = vld [vmem:[#allocation2 + $0x20] sm:$0xff]
    %v1049 = vld [vmem:[#allocation2 + $0x28] sm:$0xff]
    %v1050 = vld [vmem:[#allocation2 + $0x30] sm:$0xff]
    %v1051 = vld [vmem:[#allocation2 + $0x38] sm:$0xff]
    %v1052 = vld [vmem:[#allocation2 + $0x40] sm:$0xff]
    %v1053 = vld [vmem:[#allocation2 + $0x48] sm:$0xff]
    %v1054 = vld [vmem:[#allocation2 + $0x50] sm:$0xff]
    %v1055 = vld [vmem:[#allocation2 + $0x58] sm:$0xff]
    %v1056 = vld [vmem:[#allocation2 + $0x60] sm:$0xff]
    %v1057 = vld [vmem:[#allocation2 + $0x68] sm:$0xff]
    %v1058 = vld [vmem:[#allocation2 + $0x70] sm:$0xff]
    %v1059 = vld [vmem:[#allocation2 + $0x78] sm:$0xff]
    %v1060 = vld [vmem:[#allocation2 + $0x80] sm:$0xff]
    %v1061 = vld [vmem:[#allocation2 + $0x88] sm:$0xff]
    %v1062 = vld [vmem:[#allocation2 + $0x90] sm:$0xff]
    %v1063 = vld [vmem:[#allocation2 + $0x98] sm:$0xff]
    %v1064 = vld [vmem:[#allocation2 + $0xa0] sm:$0xff]
    %v1065 = vld [vmem:[#allocation2 + $0xa8] sm:$0xff]
    %v1066 = vld [vmem:[#allocation2 + $0xb0] sm:$0xff]
    %v1067 = vld [vmem:[#allocation2 + $0xb8] sm:$0xff]
    %v1068 = vld [vmem:[#allocation2 + $0xc0] sm:$0xff]
    %v1069 = vld [vmem:[#allocation2 + $0xc8] sm:$0xff]
    %v1070 = vld [vmem:[#allocation2 + $0xd0] sm:$0xff]
    %v1071 = vld [vmem:[#allocation2 + $0xd8] sm:$0xff]
    %v1072 = vld [vmem:[#allocation2 + $0xe0] sm:$0xff]
    %v1073 = vld [vmem:[#allocation2 + $0xe8] sm:$0xff]
    %v1074 = vld [vmem:[#allocation2 + $0xf0] sm:$0xff]
    %v1075 = vld [vmem:[#allocation2 + $0xf8] sm:$0xff]
    %v1076 = vld [vmem:[#allocation2 + $0x100] sm:$0xff]
    %v1077 = vld [vmem:[#allocation2 + $0x108] sm:$0xff]
    %v1078 = vld [vmem:[#allocation2 + $0x110] sm:$0xff]
    %v1079 = vld [vmem:[#allocation2 + $0x118] sm:$0xff]
    %v1080 = vld [vmem:[#allocation2 + $0x120] sm:$0xff]
    %v1081 = vld [vmem:[#allocation2 + $0x128] sm:$0xff]
    %v1082 = vld [vmem:[#allocation2 + $0x130] sm:$0xff]
    %v1083 = vld [vmem:[#allocation2 + $0x138] sm:$0xff]
    %v1084 = vld [vmem:[#allocation2 + $0x140] sm:$0xff]
    %v1085 = vld [vmem:[#allocation2 + $0x148] sm:$0xff]
    %v1086 = vld [vmem:[#allocation2 + $0x150] sm:$0xff]
    %v1087 = vld [vmem:[#allocation2 + $0x158] sm:$0xff]
    %v1088 = vld [vmem:[#allocation2 + $0x160] sm:$0xff]
    %v1089 = vld [vmem:[#allocation2 + $0x168] sm:$0xff]
    %v1090 = vld [vmem:[#allocation2 + $0x170] sm:$0xff]
    %v1091 = vld [vmem:[#allocation2 + $0x178] sm:$0xff]
    %v1092 = vld [vmem:[#allocation2 + $0x180] sm:$0xff]
    %v1093 = vld [vmem:[#allocation2 + $0x188] sm:$0xff]
    %v1094 = vld [vmem:[#allocation2 + $0x190] sm:$0xff]
    %v1095 = vld [vmem:[#allocation2 + $0x198] sm:$0xff]
    %v1096 = vld [vmem:[#allocation2 + $0x1a0] sm:$0xff]
    %v1097 = vld [vmem:[#allocation2 + $0x1a8] sm:$0xff]
    %v1098 = vld [vmem:[#allocation2 + $0x1b0] sm:$0xff]
    %v1099 = vld [vmem:[#allocation2 + $0x1b8] sm:$0xff]
    %v1100 = vld [vmem:[#allocation2 + $0x1c0] sm:$0xff]
    %v1101 = vld [vmem:[#allocation2 + $0x1c8] sm:$0xff]
    %v1102 = vld [vmem:[#allocation2 + $0x1d0] sm:$0xff]
    %v1103 = vld [vmem:[#allocation2 + $0x1d8] sm:$0xff]
    %v1104 = vld [vmem:[#allocation2 + $0x1e0] sm:$0xff]
    %v1105 = vld [vmem:[#allocation2 + $0x1e8] sm:$0xff]
    %v1106 = vld [vmem:[#allocation2 + $0x1f0] sm:$0xff]
    %v1107 = vld [vmem:[#allocation2 + $0x1f8] sm:$0xff]
    %v1108 = vld [vmem:[#allocation2 + $0x200] sm:$0xff]
    %v1109 = vld [vmem:[#allocation2 + $0x208] sm:$0xff]
    %v1110 = vld [vmem:[#allocation2 + $0x210] sm:$0xff]
    %v1111 = vld [vmem:[#allocation2 + $0x218] sm:$0xff]
    %v1112 = vld [vmem:[#allocation2 + $0x220] sm:$0xff]
    %v1113 = vld [vmem:[#allocation2 + $0x228] sm:$0xff]
    %v1114 = vld [vmem:[#allocation2 + $0x230] sm:$0xff]
    %v1115 = vld [vmem:[#allocation2 + $0x238] sm:$0xff]
    %v1116 = vld [vmem:[#allocation2 + $0x240] sm:$0xff]
    %v1117 = vld [vmem:[#allocation2 + $0x248] sm:$0xff]
    %v1118 = vld [vmem:[#allocation2 + $0x250] sm:$0xff]
    %v1119 = vld [vmem:[#allocation2 + $0x258] sm:$0xff]
    %v1120 = vld [vmem:[#allocation2 + $0x260] sm:$0xff]
    %v1121 = vld [vmem:[#allocation2 + $0x268] sm:$0xff]
    %v1122 = vld [vmem:[#allocation2 + $0x270] sm:$0xff]
    %v1123 = vld [vmem:[#allocation2 + $0x278] sm:$0xff]
    %v1124 = vld [vmem:[#allocation2 + $0x280] sm:$0xff]
    %v1125 = vld [vmem:[#allocation2 + $0x288] sm:$0xff]
    %v1126 = vld [vmem:[#allocation2 + $0x290] sm:$0xff]
    %v1127 = vld [vmem:[#allocation2 + $0x298] sm:$0xff]
    %v1128 = vld [vmem:[#allocation2 + $0x2a0] sm:$0xff]
    %v1129 = vld [vmem:[#allocation2 + $0x2a8] sm:$0xff]
    %v1130 = vld [vmem:[#allocation2 + $0x2b0] sm:$0xff]
    %v1131 = vld [vmem:[#allocation2 + $0x2b8] sm:$0xff]
    %v1132 = vld [vmem:[#allocation2 + $0x2c0] sm:$0xff]
    %v1133 = vld [vmem:[#allocation2 + $0x2c8] sm:$0xff]
    %v1134 = vld [vmem:[#allocation2 + $0x2d0] sm:$0xff]
    %v1135 = vld [vmem:[#allocation2 + $0x2d8] sm:$0xff]
    %v1136 = vld [vmem:[#allocation2 + $0x2e0] sm:$0xff]
    %v1137 = vld [vmem:[#allocation2 + $0x2e8] sm:$0xff]
    %v1138 = vld [vmem:[#allocation2 + $0x2f0] sm:$0xff]
    %v1139 = vld [vmem:[#allocation2 + $0x2f8] sm:$0xff]
    %v1140 = vld [vmem:[#allocation2 + $0x300] sm:$0xff]
    %v1141 = vld [vmem:[#allocation2 + $0x308] sm:$0xff]
    %v1142 = vld [vmem:[#allocation2 + $0x310] sm:$0xff]
    %v1143 = vld [vmem:[#allocation2 + $0x318] sm:$0xff]
    %v1144 = vld [vmem:[#allocation2 + $0x320] sm:$0xff]
    %v1145 = vld [vmem:[#allocation2 + $0x328] sm:$0xff]
    %v1146 = vld [vmem:[#allocation2 + $0x330] sm:$0xff]
    %v1147 = vld [vmem:[#allocation2 + $0x338] sm:$0xff]
    %v1148 = vld [vmem:[#allocation2 + $0x340] sm:$0xff]
    %v1149 = vld [vmem:[#allocation2 + $0x348] sm:$0xff]
    %v1150 = vld [vmem:[#allocation2 + $0x350] sm:$0xff]
    %v1151 = vld [vmem:[#allocation2 + $0x358] sm:$0xff]
    %v1152 = vld [vmem:[#allocation2 + $0x360] sm:$0xff]
    %v1153 = vld [vmem:[#allocation2 + $0x368] sm:$0xff]
    %v1154 = vld [vmem:[#allocation2 + $0x370] sm:$0xff]
    %v1155 = vld [vmem:[#allocation2 + $0x378] sm:$0xff]
    %v1156 = vld [vmem:[#allocation2 + $0x380] sm:$0xff]
    %v1157 = vld [vmem:[#allocation2 + $0x388] sm:$0xff]
    %v1158 = vld [vmem:[#allocation2 + $0x390] sm:$0xff]
    %v1159 = vld [vmem:[#allocation2 + $0x398] sm:$0xff]
    %v1160 = vld [vmem:[#allocation2 + $0x3a0] sm:$0xff]
    %v1161 = vld [vmem:[#allocation2 + $0x3a8] sm:$0xff]
    %v1162 = vld [vmem:[#allocation2 + $0x3b0] sm:$0xff]
    %v1163 = vld [vmem:[#allocation2 + $0x3b8] sm:$0xff]
    %v1164 = vld [vmem:[#allocation2 + $0x3c0] sm:$0xff]
    %v1165 = vld [vmem:[#allocation2 + $0x3c8] sm:$0xff]
    %v1166 = vld [vmem:[#allocation2 + $0x3d0] sm:$0xff]
    %v1167 = vld [vmem:[#allocation2 + $0x3d8] sm:$0xff]
    %v1168 = vld [vmem:[#allocation2 + $0x3e0] sm:$0xff]
    %v1169 = vld [vmem:[#allocation2 + $0x3e8] sm:$0xff]
    %v1170 = vld [vmem:[#allocation2 + $0x3f0] sm:$0xff]
    %v1171 = vld [vmem:[#allocation2 + $0x3f8] sm:$0xff]
    %v1172 = vld [vmem:[#allocation2 + $0x400] sm:$0xff]
    %v1173 = vld [vmem:[#allocation2 + $0x408] sm:$0xff]
    %v1174 = vld [vmem:[#allocation2 + $0x410] sm:$0xff]
    %v1175 = vld [vmem:[#allocation2 + $0x418] sm:$0xff]
    %v1176 = vld [vmem:[#allocation2 + $0x420] sm:$0xff]
    %v1177 = vld [vmem:[#allocation2 + $0x428] sm:$0xff]
    %v1178 = vld [vmem:[#allocation2 + $0x430] sm:$0xff]
    %v1179 = vld [vmem:[#allocation2 + $0x438] sm:$0xff]
    %v1180 = vld [vmem:[#allocation2 + $0x440] sm:$0xff]
    %v1181 = vld [vmem:[#allocation2 + $0x448] sm:$0xff]
    %v1182 = vld [vmem:[#allocation2 + $0x450] sm:$0xff]
    %v1183 = vld [vmem:[#allocation2 + $0x458] sm:$0xff]
    %v1184 = vld [vmem:[#allocation2 + $0x460] sm:$0xff]
    %v1185 = vld [vmem:[#allocation2 + $0x468] sm:$0xff]
    %v1186 = vld [vmem:[#allocation2 + $0x470] sm:$0xff]
    %v1187 = vld [vmem:[#allocation2 + $0x478] sm:$0xff]
    %v1188 = vld [vmem:[#allocation2 + $0x480] sm:$0xff]
    %v1189 = vld [vmem:[#allocation2 + $0x488] sm:$0xff]
    %v1190 = vld [vmem:[#allocation2 + $0x490] sm:$0xff]
    %v1191 = vld [vmem:[#allocation2 + $0x498] sm:$0xff]
    %v1192 = vld [vmem:[#allocation2 + $0x4a0] sm:$0xff]
    %v1193 = vld [vmem:[#allocation2 + $0x4a8] sm:$0xff]
    %v1194 = vld [vmem:[#allocation2 + $0x4b0] sm:$0xff]
    %v1195 = vld [vmem:[#allocation2 + $0x4b8] sm:$0xff]
    %v1196 = vld [vmem:[#allocation2 + $0x4c0] sm:$0xff]
    %v1197 = vld [vmem:[#allocation2 + $0x4c8] sm:$0xff]
    %v1198 = vld [vmem:[#allocation2 + $0x4d0] sm:$0xff]
    %v1199 = vld [vmem:[#allocation2 + $0x4d8] sm:$0xff]
    %v1200 = vld [vmem:[#allocation2 + $0x4e0] sm:$0xff]
    %v1201 = vld [vmem:[#allocation2 + $0x4e8] sm:$0xff]
    %v1202 = vld [vmem:[#allocation2 + $0x4f0] sm:$0xff]
    %v1203 = vld [vmem:[#allocation2 + $0x4f8] sm:$0xff]
    %v1204 = vld [vmem:[#allocation2 + $0x500] sm:$0xff]
    %v1205 = vld [vmem:[#allocation2 + $0x508] sm:$0xff]
    %v1206 = vld [vmem:[#allocation2 + $0x510] sm:$0xff]
    %v1207 = vld [vmem:[#allocation2 + $0x518] sm:$0xff]
    %v1208 = vld [vmem:[#allocation2 + $0x520] sm:$0xff]
    %v1209 = vld [vmem:[#allocation2 + $0x528] sm:$0xff]
    %v1210 = vld [vmem:[#allocation2 + $0x530] sm:$0xff]
    %v1211 = vld [vmem:[#allocation2 + $0x538] sm:$0xff]
    %v1212 = vld [vmem:[#allocation2 + $0x540] sm:$0xff]
    %v1213 = vld [vmem:[#allocation2 + $0x548] sm:$0xff]
    %v1214 = vld [vmem:[#allocation2 + $0x550] sm:$0xff]
    %v1215 = vld [vmem:[#allocation2 + $0x558] sm:$0xff]
    %v1216 = vld [vmem:[#allocation2 + $0x560] sm:$0xff]
    %v1217 = vld [vmem:[#allocation2 + $0x568] sm:$0xff]
    %v1218 = vld [vmem:[#allocation2 + $0x570] sm:$0xff]
    %v1219 = vld [vmem:[#allocation2 + $0x578] sm:$0xff]
    %v1220 = vld [vmem:[#allocation2 + $0x580] sm:$0xff]
    %v1221 = vld [vmem:[#allocation2 + $0x588] sm:$0xff]
    %v1222 = vld [vmem:[#allocation2 + $0x590] sm:$0xff]
    %v1223 = vld [vmem:[#allocation2 + $0x598] sm:$0xff]
    %v1224 = vld [vmem:[#allocation2 + $0x5a0] sm:$0xff]
    %v1225 = vld [vmem:[#allocation2 + $0x5a8] sm:$0xff]
    %v1226 = vld [vmem:[#allocation2 + $0x5b0] sm:$0xff]
    %v1227 = vld [vmem:[#allocation2 + $0x5b8] sm:$0xff]
    %v1228 = vld [vmem:[#allocation2 + $0x5c0] sm:$0xff]
    %v1229 = vld [vmem:[#allocation2 + $0x5c8] sm:$0xff]
    %v1230 = vld [vmem:[#allocation2 + $0x5d0] sm:$0xff]
    %v1231 = vld [vmem:[#allocation2 + $0x5d8] sm:$0xff]
    %v1232 = vld [vmem:[#allocation2 + $0x5e0] sm:$0xff]
    %v1233 = vld [vmem:[#allocation2 + $0x5e8] sm:$0xff]
    %v1234 = vld [vmem:[#allocation2 + $0x5f0] sm:$0xff]
    %v1235 = vld [vmem:[#allocation2 + $0x5f8] sm:$0xff]
    %v1236 = vld [vmem:[#allocation2 + $0x600] sm:$0xff]
    %v1237 = vld [vmem:[#allocation2 + $0x608] sm:$0xff]
    %v1238 = vld [vmem:[#allocation2 + $0x610] sm:$0xff]
    %v1239 = vld [vmem:[#allocation2 + $0x618] sm:$0xff]
    %v1240 = vld [vmem:[#allocation2 + $0x620] sm:$0xff]
    %v1241 = vld [vmem:[#allocation2 + $0x628] sm:$0xff]
    %v1242 = vld [vmem:[#allocation2 + $0x630] sm:$0xff]
    %v1243 = vld [vmem:[#allocation2 + $0x638] sm:$0xff]
    %v1244 = vld [vmem:[#allocation2 + $0x640] sm:$0xff]
    %v1245 = vld [vmem:[#allocation2 + $0x648] sm:$0xff]
    %v1246 = vld [vmem:[#allocation2 + $0x650] sm:$0xff]
    %v1247 = vld [vmem:[#allocation2 + $0x658] sm:$0xff]
    %v1248 = vld [vmem:[%s6] sm:$0xff]
    %v1249 = vld [vmem:[%s6 + $0x8] sm:$0xff]
    %v1250 = vld [vmem:[%s6 + $0x10] sm:$0xff]
    %v1251 = vld [vmem:[%s6 + $0x18] sm:$0xff]
    %1253 = vset.pattern.permute.xlu0 0
    %1254 = vperm.xlu0 %1253, %v1248
    %v1255 = vpop.permute.xlu0 %1254
    %1258 = vset.pattern.permute.xlu0 0
    %1259 = vperm.xlu0 %1258, %v1249
    %v1260 = vpop.permute.xlu0 %1259
    %1263 = vset.pattern.permute.xlu0 0
    %1264 = vperm.xlu0 %1263, %v1250
    %v1265 = vpop.permute.xlu0 %1264
    %1268 = vset.pattern.permute.xlu0 0
    %1269 = vperm.xlu0 %1268, %v1251
    %v1270 = vpop.permute.xlu0 %1269
    %vm1272 = vcmask 261120
    %v1274 = vsel %vm1272, %v1040, 0
    %v1277 = vsel %vm1272, %v1041, 0
    %v1280 = vsel %vm1272, %v1042, 0
    %v1283 = vsel %vm1272, %v1043, 0
    %1285 = vmatpush.msra.mxu0 0.0
    %1286 = vmatpush.msra.mxu0 0.0
    %1287 = vmatpush.msra.mxu0 0.0
    %1288 = vmatpush.msra.mxu0 0.0
    %1289 = vmatpush.msra.mxu0 0.0
    %1290 = vmatpush.msra.mxu0 0.0
    %1291 = vmatpush.msra.mxu0 0.0
    %1292 = vmatpush.msra.mxu0 0.0
    %1293 = vmatpush.msra.mxu0 0.0
    %1294 = vmatpush.msra.mxu0 0.0
    %1295 = vmatpush.msra.mxu0 0.0
    %1296 = vmatpush.msra.mxu0 0.0
    %1297 = vmatpush.msra.mxu0 %v1197
    %1298 = vmatpush.msra.mxu0 %v1146
    %1299 = vmatpush.msra.mxu0 %v1095
    %1300 = vmatpush.msra.mxu0 %v1044
    %1301 = vmatmul.f32.gmra.mxu0 %v1274
    %v1302 = vpop.f32.mrf.mxu0
    %v1303 = vadd.f32 %v1255, %v1302
    %1304 = vmatmul.f32.gmra.mxu0 %v1277
    %v1305 = vpop.f32.mrf.mxu0
    %v1306 = vadd.f32 %v1260, %v1305
    %1307 = vmatmul.f32.gmra.mxu0 %v1280
    %v1308 = vpop.f32.mrf.mxu0
    %v1309 = vadd.f32 %v1265, %v1308
    %1310 = vmatmul.f32.gmra.mxu0 %v1283
    %v1311 = vpop.f32.mrf.mxu0
    %v1312 = vadd.f32 %v1270, %v1311
    %1313 = vdwg.mxu0
    %1314 = vmatpush.msra.mxu0 0.0
    %1315 = vmatpush.msra.mxu0 0.0
    %1316 = vmatpush.msra.mxu0 0.0
    %1317 = vmatpush.msra.mxu0 0.0
    %1318 = vmatpush.msra.mxu0 0.0
    %1319 = vmatpush.msra.mxu0 0.0
    %1320 = vmatpush.msra.mxu0 0.0
    %1321 = vmatpush.msra.mxu0 0.0
    %1322 = vmatpush.msra.mxu0 0.0
    %1323 = vmatpush.msra.mxu0 0.0
    %1324 = vmatpush.msra.mxu0 0.0
    %1325 = vmatpush.msra.mxu0 0.0
    %1326 = vmatpush.msra.mxu0 %v1198
    %1327 = vmatpush.msra.mxu0 %v1147
    %1328 = vmatpush.msra.mxu0 %v1096
    %1329 = vmatpush.msra.mxu0 %v1045
    %1330 = vmatmul.f32.gmra.mxu0 %v1274
    %v1331 = vpop.f32.mrf.mxu0
    %v1332 = vadd.f32 %v1255, %v1331
    %1333 = vmatmul.f32.gmra.mxu0 %v1277
    %v1334 = vpop.f32.mrf.mxu0
    %v1335 = vadd.f32 %v1260, %v1334
    %1336 = vmatmul.f32.gmra.mxu0 %v1280
    %v1337 = vpop.f32.mrf.mxu0
    %v1338 = vadd.f32 %v1265, %v1337
    %1339 = vmatmul.f32.gmra.mxu0 %v1283
    %v1340 = vpop.f32.mrf.mxu0
    %v1341 = vadd.f32 %v1270, %v1340
    %1342 = vdwg.mxu0
    %1343 = vmatpush.msra.mxu0 0.0
    %1344 = vmatpush.msra.mxu0 0.0
    %1345 = vmatpush.msra.mxu0 0.0
    %1346 = vmatpush.msra.mxu0 0.0
    %1347 = vmatpush.msra.mxu0 0.0
    %1348 = vmatpush.msra.mxu0 0.0
    %1349 = vmatpush.msra.mxu0 0.0
    %1350 = vmatpush.msra.mxu0 0.0
    %1351 = vmatpush.msra.mxu0 0.0
    %1352 = vmatpush.msra.mxu0 0.0
    %1353 = vmatpush.msra.mxu0 0.0
    %1354 = vmatpush.msra.mxu0 0.0
    %1355 = vmatpush.msra.mxu0 %v1199
    %1356 = vmatpush.msra.mxu0 %v1148
    %1357 = vmatpush.msra.mxu0 %v1097
    %1358 = vmatpush.msra.mxu0 %v1046
    %1359 = vmatmul.f32.gmra.mxu0 %v1274
    %v1360 = vpop.f32.mrf.mxu0
    %v1361 = vadd.f32 %v1255, %v1360
    %1362 = vmatmul.f32.gmra.mxu0 %v1277
    %v1363 = vpop.f32.mrf.mxu0
    %v1364 = vadd.f32 %v1260, %v1363
    %1365 = vmatmul.f32.gmra.mxu0 %v1280
    %v1366 = vpop.f32.mrf.mxu0
    %v1367 = vadd.f32 %v1265, %v1366
    %1368 = vmatmul.f32.gmra.mxu0 %v1283
    %v1369 = vpop.f32.mrf.mxu0
    %v1370 = vadd.f32 %v1270, %v1369
    %1371 = vdwg.mxu0
    %1372 = vmatpush.msra.mxu0 0.0
    %1373 = vmatpush.msra.mxu0 0.0
    %1374 = vmatpush.msra.mxu0 0.0
    %1375 = vmatpush.msra.mxu0 0.0
    %1376 = vmatpush.msra.mxu0 0.0
    %1377 = vmatpush.msra.mxu0 0.0
    %1378 = vmatpush.msra.mxu0 0.0
    %1379 = vmatpush.msra.mxu0 0.0
    %1380 = vmatpush.msra.mxu0 0.0
    %1381 = vmatpush.msra.mxu0 0.0
    %1382 = vmatpush.msra.mxu0 0.0
    %1383 = vmatpush.msra.mxu0 0.0
    %1384 = vmatpush.msra.mxu0 %v1200
    %1385 = vmatpush.msra.mxu0 %v1149
    %1386 = vmatpush.msra.mxu0 %v1098
    %1387 = vmatpush.msra.mxu0 %v1047
    %1388 = vmatmul.f32.gmra.mxu0 %v1274
    %v1389 = vpop.f32.mrf.mxu0
    %v1390 = vadd.f32 %v1255, %v1389
    %1391 = vmatmul.f32.gmra.mxu0 %v1277
    %v1392 = vpop.f32.mrf.mxu0
    %v1393 = vadd.f32 %v1260, %v1392
    %1394 = vmatmul.f32.gmra.mxu0 %v1280
    %v1395 = vpop.f32.mrf.mxu0
    %v1396 = vadd.f32 %v1265, %v1395
    %1397 = vmatmul.f32.gmra.mxu0 %v1283
    %v1398 = vpop.f32.mrf.mxu0
    %v1399 = vadd.f32 %v1270, %v1398
    %1400 = vdwg.mxu0
    %1401 = vmatpush.msra.mxu0 0.0
    %1402 = vmatpush.msra.mxu0 0.0
    %1403 = vmatpush.msra.mxu0 0.0
    %1404 = vmatpush.msra.mxu0 0.0
    %1405 = vmatpush.msra.mxu0 0.0
    %1406 = vmatpush.msra.mxu0 0.0
    %1407 = vmatpush.msra.mxu0 0.0
    %1408 = vmatpush.msra.mxu0 0.0
    %1409 = vmatpush.msra.mxu0 0.0
    %1410 = vmatpush.msra.mxu0 0.0
    %1411 = vmatpush.msra.mxu0 0.0
    %1412 = vmatpush.msra.mxu0 0.0
    %1413 = vmatpush.msra.mxu0 %v1201
    %1414 = vmatpush.msra.mxu0 %v1150
    %1415 = vmatpush.msra.mxu0 %v1099
    %1416 = vmatpush.msra.mxu0 %v1048
    %1417 = vmatmul.f32.gmra.mxu0 %v1274
    %v1418 = vpop.f32.mrf.mxu0
    %v1419 = vadd.f32 %v1255, %v1418
    %1420 = vmatmul.f32.gmra.mxu0 %v1277
    %v1421 = vpop.f32.mrf.mxu0
    %v1422 = vadd.f32 %v1260, %v1421
    %1423 = vmatmul.f32.gmra.mxu0 %v1280
    %v1424 = vpop.f32.mrf.mxu0
    %v1425 = vadd.f32 %v1265, %v1424
    %1426 = vmatmul.f32.gmra.mxu0 %v1283
    %v1427 = vpop.f32.mrf.mxu0
    %v1428 = vadd.f32 %v1270, %v1427
    %1429 = vdwg.mxu0
    %1430 = vmatpush.msra.mxu0 0.0
    %1431 = vmatpush.msra.mxu0 0.0
    %1432 = vmatpush.msra.mxu0 0.0
    %1433 = vmatpush.msra.mxu0 0.0
    %1434 = vmatpush.msra.mxu0 0.0
    %1435 = vmatpush.msra.mxu0 0.0
    %1436 = vmatpush.msra.mxu0 0.0
    %1437 = vmatpush.msra.mxu0 0.0
    %1438 = vmatpush.msra.mxu0 0.0
    %1439 = vmatpush.msra.mxu0 0.0
    %1440 = vmatpush.msra.mxu0 0.0
    %1441 = vmatpush.msra.mxu0 0.0
    %1442 = vmatpush.msra.mxu0 %v1202
    %1443 = vmatpush.msra.mxu0 %v1151
    %1444 = vmatpush.msra.mxu0 %v1100
    %1445 = vmatpush.msra.mxu0 %v1049
    %1446 = vmatmul.f32.gmra.mxu0 %v1274
    %v1447 = vpop.f32.mrf.mxu0
    %v1448 = vadd.f32 %v1255, %v1447
    %1449 = vmatmul.f32.gmra.mxu0 %v1277
    %v1450 = vpop.f32.mrf.mxu0
    %v1451 = vadd.f32 %v1260, %v1450
    %1452 = vmatmul.f32.gmra.mxu0 %v1280
    %v1453 = vpop.f32.mrf.mxu0
    %v1454 = vadd.f32 %v1265, %v1453
    %1455 = vmatmul.f32.gmra.mxu0 %v1283
    %v1456 = vpop.f32.mrf.mxu0
    %v1457 = vadd.f32 %v1270, %v1456
    %1458 = vdwg.mxu0
    %1459 = vmatpush.msra.mxu0 0.0
    %1460 = vmatpush.msra.mxu0 0.0
    %1461 = vmatpush.msra.mxu0 0.0
    %1462 = vmatpush.msra.mxu0 0.0
    %1463 = vmatpush.msra.mxu0 0.0
    %1464 = vmatpush.msra.mxu0 0.0
    %1465 = vmatpush.msra.mxu0 0.0
    %1466 = vmatpush.msra.mxu0 0.0
    %1467 = vmatpush.msra.mxu0 0.0
    %1468 = vmatpush.msra.mxu0 0.0
    %1469 = vmatpush.msra.mxu0 0.0
    %1470 = vmatpush.msra.mxu0 0.0
    %1471 = vmatpush.msra.mxu0 %v1203
    %1472 = vmatpush.msra.mxu0 %v1152
    %1473 = vmatpush.msra.mxu0 %v1101
    %1474 = vmatpush.msra.mxu0 %v1050
    %1475 = vmatmul.f32.gmra.mxu0 %v1274
    %v1476 = vpop.f32.mrf.mxu0
    %v1477 = vadd.f32 %v1255, %v1476
    %1478 = vmatmul.f32.gmra.mxu0 %v1277
    %v1479 = vpop.f32.mrf.mxu0
    %v1480 = vadd.f32 %v1260, %v1479
    %1481 = vmatmul.f32.gmra.mxu0 %v1280
    %v1482 = vpop.f32.mrf.mxu0
    %v1483 = vadd.f32 %v1265, %v1482
    %1484 = vmatmul.f32.gmra.mxu0 %v1283
    %v1485 = vpop.f32.mrf.mxu0
    %v1486 = vadd.f32 %v1270, %v1485
    %1487 = vdwg.mxu0
    %1488 = vmatpush.msra.mxu0 0.0
    %1489 = vmatpush.msra.mxu0 0.0
    %1490 = vmatpush.msra.mxu0 0.0
    %1491 = vmatpush.msra.mxu0 0.0
    %1492 = vmatpush.msra.mxu0 0.0
    %1493 = vmatpush.msra.mxu0 0.0
    %1494 = vmatpush.msra.mxu0 0.0
    %1495 = vmatpush.msra.mxu0 0.0
    %1496 = vmatpush.msra.mxu0 0.0
    %1497 = vmatpush.msra.mxu0 0.0
    %1498 = vmatpush.msra.mxu0 0.0
    %1499 = vmatpush.msra.mxu0 0.0
    %1500 = vmatpush.msra.mxu0 %v1204
    %1501 = vmatpush.msra.mxu0 %v1153
    %1502 = vmatpush.msra.mxu0 %v1102
    %1503 = vmatpush.msra.mxu0 %v1051
    %1504 = vmatmul.f32.gmra.mxu0 %v1274
    %v1505 = vpop.f32.mrf.mxu0
    %v1506 = vadd.f32 %v1255, %v1505
    %1507 = vmatmul.f32.gmra.mxu0 %v1277
    %v1508 = vpop.f32.mrf.mxu0
    %v1509 = vadd.f32 %v1260, %v1508
    %1510 = vmatmul.f32.gmra.mxu0 %v1280
    %v1511 = vpop.f32.mrf.mxu0
    %v1512 = vadd.f32 %v1265, %v1511
    %1513 = vmatmul.f32.gmra.mxu0 %v1283
    %v1514 = vpop.f32.mrf.mxu0
    %v1515 = vadd.f32 %v1270, %v1514
    %1516 = vdwg.mxu0
    %1517 = vmatpush.msra.mxu0 0.0
    %1518 = vmatpush.msra.mxu0 0.0
    %1519 = vmatpush.msra.mxu0 0.0
    %1520 = vmatpush.msra.mxu0 0.0
    %1521 = vmatpush.msra.mxu0 0.0
    %1522 = vmatpush.msra.mxu0 0.0
    %1523 = vmatpush.msra.mxu0 0.0
    %1524 = vmatpush.msra.mxu0 0.0
    %1525 = vmatpush.msra.mxu0 0.0
    %1526 = vmatpush.msra.mxu0 0.0
    %1527 = vmatpush.msra.mxu0 0.0
    %1528 = vmatpush.msra.mxu0 0.0
    %1529 = vmatpush.msra.mxu0 %v1205
    %1530 = vmatpush.msra.mxu0 %v1154
    %1531 = vmatpush.msra.mxu0 %v1103
    %1532 = vmatpush.msra.mxu0 %v1052
    %1533 = vmatmul.f32.gmra.mxu0 %v1274
    %v1534 = vpop.f32.mrf.mxu0
    %v1535 = vadd.f32 %v1255, %v1534
    %1536 = vmatmul.f32.gmra.mxu0 %v1277
    %v1537 = vpop.f32.mrf.mxu0
    %v1538 = vadd.f32 %v1260, %v1537
    %1539 = vmatmul.f32.gmra.mxu0 %v1280
    %v1540 = vpop.f32.mrf.mxu0
    %v1541 = vadd.f32 %v1265, %v1540
    %1542 = vmatmul.f32.gmra.mxu0 %v1283
    %v1543 = vpop.f32.mrf.mxu0
    %v1544 = vadd.f32 %v1270, %v1543
    %1545 = vdwg.mxu0
    %1546 = vmatpush.msra.mxu0 0.0
    %1547 = vmatpush.msra.mxu0 0.0
    %1548 = vmatpush.msra.mxu0 0.0
    %1549 = vmatpush.msra.mxu0 0.0
    %1550 = vmatpush.msra.mxu0 0.0
    %1551 = vmatpush.msra.mxu0 0.0
    %1552 = vmatpush.msra.mxu0 0.0
    %1553 = vmatpush.msra.mxu0 0.0
    %1554 = vmatpush.msra.mxu0 0.0
    %1555 = vmatpush.msra.mxu0 0.0
    %1556 = vmatpush.msra.mxu0 0.0
    %1557 = vmatpush.msra.mxu0 0.0
    %1558 = vmatpush.msra.mxu0 %v1206
    %1559 = vmatpush.msra.mxu0 %v1155
    %1560 = vmatpush.msra.mxu0 %v1104
    %1561 = vmatpush.msra.mxu0 %v1053
    %1562 = vmatmul.f32.gmra.mxu0 %v1274
    %v1563 = vpop.f32.mrf.mxu0
    %v1564 = vadd.f32 %v1255, %v1563
    %1565 = vmatmul.f32.gmra.mxu0 %v1277
    %v1566 = vpop.f32.mrf.mxu0
    %v1567 = vadd.f32 %v1260, %v1566
    %1568 = vmatmul.f32.gmra.mxu0 %v1280
    %v1569 = vpop.f32.mrf.mxu0
    %v1570 = vadd.f32 %v1265, %v1569
    %1571 = vmatmul.f32.gmra.mxu0 %v1283
    %v1572 = vpop.f32.mrf.mxu0
    %v1573 = vadd.f32 %v1270, %v1572
    %1574 = vdwg.mxu0
    %1575 = vmatpush.msra.mxu0 0.0
    %1576 = vmatpush.msra.mxu0 0.0
    %1577 = vmatpush.msra.mxu0 0.0
    %1578 = vmatpush.msra.mxu0 0.0
    %1579 = vmatpush.msra.mxu0 0.0
    %1580 = vmatpush.msra.mxu0 0.0
    %1581 = vmatpush.msra.mxu0 0.0
    %1582 = vmatpush.msra.mxu0 0.0
    %1583 = vmatpush.msra.mxu0 0.0
    %1584 = vmatpush.msra.mxu0 0.0
    %1585 = vmatpush.msra.mxu0 0.0
    %1586 = vmatpush.msra.mxu0 0.0
    %1587 = vmatpush.msra.mxu0 %v1207
    %1588 = vmatpush.msra.mxu0 %v1156
    %1589 = vmatpush.msra.mxu0 %v1105
    %1590 = vmatpush.msra.mxu0 %v1054
    %1591 = vmatmul.f32.gmra.mxu0 %v1274
    %v1592 = vpop.f32.mrf.mxu0
    %v1593 = vadd.f32 %v1255, %v1592
    %1594 = vmatmul.f32.gmra.mxu0 %v1277
    %v1595 = vpop.f32.mrf.mxu0
    %v1596 = vadd.f32 %v1260, %v1595
    %1597 = vmatmul.f32.gmra.mxu0 %v1280
    %v1598 = vpop.f32.mrf.mxu0
    %v1599 = vadd.f32 %v1265, %v1598
    %1600 = vmatmul.f32.gmra.mxu0 %v1283
    %v1601 = vpop.f32.mrf.mxu0
    %v1602 = vadd.f32 %v1270, %v1601
    %1603 = vdwg.mxu0
    %1604 = vmatpush.msra.mxu0 0.0
    %1605 = vmatpush.msra.mxu0 0.0
    %1606 = vmatpush.msra.mxu0 0.0
    %1607 = vmatpush.msra.mxu0 0.0
    %1608 = vmatpush.msra.mxu0 0.0
    %1609 = vmatpush.msra.mxu0 0.0
    %1610 = vmatpush.msra.mxu0 0.0
    %1611 = vmatpush.msra.mxu0 0.0
    %1612 = vmatpush.msra.mxu0 0.0
    %1613 = vmatpush.msra.mxu0 0.0
    %1614 = vmatpush.msra.mxu0 0.0
    %1615 = vmatpush.msra.mxu0 0.0
    %1616 = vmatpush.msra.mxu0 %v1208
    %1617 = vmatpush.msra.mxu0 %v1157
    %1618 = vmatpush.msra.mxu0 %v1106
    %1619 = vmatpush.msra.mxu0 %v1055
    %1620 = vmatmul.f32.gmra.mxu0 %v1274
    %v1621 = vpop.f32.mrf.mxu0
    %v1622 = vadd.f32 %v1255, %v1621
    %1623 = vmatmul.f32.gmra.mxu0 %v1277
    %v1624 = vpop.f32.mrf.mxu0
    %v1625 = vadd.f32 %v1260, %v1624
    %1626 = vmatmul.f32.gmra.mxu0 %v1280
    %v1627 = vpop.f32.mrf.mxu0
    %v1628 = vadd.f32 %v1265, %v1627
    %1629 = vmatmul.f32.gmra.mxu0 %v1283
    %v1630 = vpop.f32.mrf.mxu0
    %v1631 = vadd.f32 %v1270, %v1630
    %1632 = vdwg.mxu0
    %1633 = vmatpush.msra.mxu0 0.0
    %1634 = vmatpush.msra.mxu0 0.0
    %1635 = vmatpush.msra.mxu0 0.0
    %1636 = vmatpush.msra.mxu0 0.0
    %1637 = vmatpush.msra.mxu0 0.0
    %1638 = vmatpush.msra.mxu0 0.0
    %1639 = vmatpush.msra.mxu0 0.0
    %1640 = vmatpush.msra.mxu0 0.0
    %1641 = vmatpush.msra.mxu0 0.0
    %1642 = vmatpush.msra.mxu0 0.0
    %1643 = vmatpush.msra.mxu0 0.0
    %1644 = vmatpush.msra.mxu0 0.0
    %1645 = vmatpush.msra.mxu0 %v1209
    %1646 = vmatpush.msra.mxu0 %v1158
    %1647 = vmatpush.msra.mxu0 %v1107
    %1648 = vmatpush.msra.mxu0 %v1056
    %1649 = vmatmul.f32.gmra.mxu0 %v1274
    %v1650 = vpop.f32.mrf.mxu0
    %v1651 = vadd.f32 %v1255, %v1650
    %1652 = vmatmul.f32.gmra.mxu0 %v1277
    %v1653 = vpop.f32.mrf.mxu0
    %v1654 = vadd.f32 %v1260, %v1653
    %1655 = vmatmul.f32.gmra.mxu0 %v1280
    %v1656 = vpop.f32.mrf.mxu0
    %v1657 = vadd.f32 %v1265, %v1656
    %1658 = vmatmul.f32.gmra.mxu0 %v1283
    %v1659 = vpop.f32.mrf.mxu0
    %v1660 = vadd.f32 %v1270, %v1659
    %1661 = vdwg.mxu0
    %1662 = vmatpush.msra.mxu0 0.0
    %1663 = vmatpush.msra.mxu0 0.0
    %1664 = vmatpush.msra.mxu0 0.0
    %1665 = vmatpush.msra.mxu0 0.0
    %1666 = vmatpush.msra.mxu0 0.0
    %1667 = vmatpush.msra.mxu0 0.0
    %1668 = vmatpush.msra.mxu0 0.0
    %1669 = vmatpush.msra.mxu0 0.0
    %1670 = vmatpush.msra.mxu0 0.0
    %1671 = vmatpush.msra.mxu0 0.0
    %1672 = vmatpush.msra.mxu0 0.0
    %1673 = vmatpush.msra.mxu0 0.0
    %1674 = vmatpush.msra.mxu0 %v1210
    %1675 = vmatpush.msra.mxu0 %v1159
    %1676 = vmatpush.msra.mxu0 %v1108
    %1677 = vmatpush.msra.mxu0 %v1057
    %1678 = vmatmul.f32.gmra.mxu0 %v1274
    %v1679 = vpop.f32.mrf.mxu0
    %v1680 = vadd.f32 %v1255, %v1679
    %1681 = vmatmul.f32.gmra.mxu0 %v1277
    %v1682 = vpop.f32.mrf.mxu0
    %v1683 = vadd.f32 %v1260, %v1682
    %1684 = vmatmul.f32.gmra.mxu0 %v1280
    %v1685 = vpop.f32.mrf.mxu0
    %v1686 = vadd.f32 %v1265, %v1685
    %1687 = vmatmul.f32.gmra.mxu0 %v1283
    %v1688 = vpop.f32.mrf.mxu0
    %v1689 = vadd.f32 %v1270, %v1688
    %1690 = vdwg.mxu0
    %1691 = vmatpush.msra.mxu0 0.0
    %1692 = vmatpush.msra.mxu0 0.0
    %1693 = vmatpush.msra.mxu0 0.0
    %1694 = vmatpush.msra.mxu0 0.0
    %1695 = vmatpush.msra.mxu0 0.0
    %1696 = vmatpush.msra.mxu0 0.0
    %1697 = vmatpush.msra.mxu0 0.0
    %1698 = vmatpush.msra.mxu0 0.0
    %1699 = vmatpush.msra.mxu0 0.0
    %1700 = vmatpush.msra.mxu0 0.0
    %1701 = vmatpush.msra.mxu0 0.0
    %1702 = vmatpush.msra.mxu0 0.0
    %1703 = vmatpush.msra.mxu0 %v1211
    %1704 = vmatpush.msra.mxu0 %v1160
    %1705 = vmatpush.msra.mxu0 %v1109
    %1706 = vmatpush.msra.mxu0 %v1058
    %1707 = vmatmul.f32.gmra.mxu0 %v1274
    %v1708 = vpop.f32.mrf.mxu0
    %v1709 = vadd.f32 %v1255, %v1708
    %1710 = vmatmul.f32.gmra.mxu0 %v1277
    %v1711 = vpop.f32.mrf.mxu0
    %v1712 = vadd.f32 %v1260, %v1711
    %1713 = vmatmul.f32.gmra.mxu0 %v1280
    %v1714 = vpop.f32.mrf.mxu0
    %v1715 = vadd.f32 %v1265, %v1714
    %1716 = vmatmul.f32.gmra.mxu0 %v1283
    %v1717 = vpop.f32.mrf.mxu0
    %v1718 = vadd.f32 %v1270, %v1717
    %1719 = vdwg.mxu0
    %1720 = vmatpush.msra.mxu0 0.0
    %1721 = vmatpush.msra.mxu0 0.0
    %1722 = vmatpush.msra.mxu0 0.0
    %1723 = vmatpush.msra.mxu0 0.0
    %1724 = vmatpush.msra.mxu0 0.0
    %1725 = vmatpush.msra.mxu0 0.0
    %1726 = vmatpush.msra.mxu0 0.0
    %1727 = vmatpush.msra.mxu0 0.0
    %1728 = vmatpush.msra.mxu0 0.0
    %1729 = vmatpush.msra.mxu0 0.0
    %1730 = vmatpush.msra.mxu0 0.0
    %1731 = vmatpush.msra.mxu0 0.0
    %1732 = vmatpush.msra.mxu0 %v1212
    %1733 = vmatpush.msra.mxu0 %v1161
    %1734 = vmatpush.msra.mxu0 %v1110
    %1735 = vmatpush.msra.mxu0 %v1059
    %1736 = vmatmul.f32.gmra.mxu0 %v1274
    %v1737 = vpop.f32.mrf.mxu0
    %v1738 = vadd.f32 %v1255, %v1737
    %1739 = vmatmul.f32.gmra.mxu0 %v1277
    %v1740 = vpop.f32.mrf.mxu0
    %v1741 = vadd.f32 %v1260, %v1740
    %1742 = vmatmul.f32.gmra.mxu0 %v1280
    %v1743 = vpop.f32.mrf.mxu0
    %v1744 = vadd.f32 %v1265, %v1743
    %1745 = vmatmul.f32.gmra.mxu0 %v1283
    %v1746 = vpop.f32.mrf.mxu0
    %v1747 = vadd.f32 %v1270, %v1746
    %1748 = vdwg.mxu0
    %1749 = vmatpush.msra.mxu0 0.0
    %1750 = vmatpush.msra.mxu0 0.0
    %1751 = vmatpush.msra.mxu0 0.0
    %1752 = vmatpush.msra.mxu0 0.0
    %1753 = vmatpush.msra.mxu0 0.0
    %1754 = vmatpush.msra.mxu0 0.0
    %1755 = vmatpush.msra.mxu0 0.0
    %1756 = vmatpush.msra.mxu0 0.0
    %1757 = vmatpush.msra.mxu0 0.0
    %1758 = vmatpush.msra.mxu0 0.0
    %1759 = vmatpush.msra.mxu0 0.0
    %1760 = vmatpush.msra.mxu0 0.0
    %1761 = vmatpush.msra.mxu0 %v1213
    %1762 = vmatpush.msra.mxu0 %v1162
    %1763 = vmatpush.msra.mxu0 %v1111
    %1764 = vmatpush.msra.mxu0 %v1060
    %1765 = vmatmul.f32.gmra.mxu0 %v1274
    %v1766 = vpop.f32.mrf.mxu0
    %v1767 = vadd.f32 %v1255, %v1766
    %1768 = vmatmul.f32.gmra.mxu0 %v1277
    %v1769 = vpop.f32.mrf.mxu0
    %v1770 = vadd.f32 %v1260, %v1769
    %1771 = vmatmul.f32.gmra.mxu0 %v1280
    %v1772 = vpop.f32.mrf.mxu0
    %v1773 = vadd.f32 %v1265, %v1772
    %1774 = vmatmul.f32.gmra.mxu0 %v1283
    %v1775 = vpop.f32.mrf.mxu0
    %v1776 = vadd.f32 %v1270, %v1775
    %1777 = vdwg.mxu0
    %1778 = vmatpush.msra.mxu0 0.0
    %1779 = vmatpush.msra.mxu0 0.0
    %1780 = vmatpush.msra.mxu0 0.0
    %1781 = vmatpush.msra.mxu0 0.0
    %1782 = vmatpush.msra.mxu0 0.0
    %1783 = vmatpush.msra.mxu0 0.0
    %1784 = vmatpush.msra.mxu0 0.0
    %1785 = vmatpush.msra.mxu0 0.0
    %1786 = vmatpush.msra.mxu0 0.0
    %1787 = vmatpush.msra.mxu0 0.0
    %1788 = vmatpush.msra.mxu0 0.0
    %1789 = vmatpush.msra.mxu0 0.0
    %1790 = vmatpush.msra.mxu0 %v1214
    %1791 = vmatpush.msra.mxu0 %v1163
    %1792 = vmatpush.msra.mxu0 %v1112
    %1793 = vmatpush.msra.mxu0 %v1061
    %1794 = vmatmul.f32.gmra.mxu0 %v1274
    %v1795 = vpop.f32.mrf.mxu0
    %v1796 = vadd.f32 %v1255, %v1795
    %1797 = vmatmul.f32.gmra.mxu0 %v1277
    %v1798 = vpop.f32.mrf.mxu0
    %v1799 = vadd.f32 %v1260, %v1798
    %1800 = vmatmul.f32.gmra.mxu0 %v1280
    %v1801 = vpop.f32.mrf.mxu0
    %v1802 = vadd.f32 %v1265, %v1801
    %1803 = vmatmul.f32.gmra.mxu0 %v1283
    %v1804 = vpop.f32.mrf.mxu0
    %v1805 = vadd.f32 %v1270, %v1804
    %1806 = vdwg.mxu0
    %1807 = vmatpush.msra.mxu0 0.0
    %1808 = vmatpush.msra.mxu0 0.0
    %1809 = vmatpush.msra.mxu0 0.0
    %1810 = vmatpush.msra.mxu0 0.0
    %1811 = vmatpush.msra.mxu0 0.0
    %1812 = vmatpush.msra.mxu0 0.0
    %1813 = vmatpush.msra.mxu0 0.0
    %1814 = vmatpush.msra.mxu0 0.0
    %1815 = vmatpush.msra.mxu0 0.0
    %1816 = vmatpush.msra.mxu0 0.0
    %1817 = vmatpush.msra.mxu0 0.0
    %1818 = vmatpush.msra.mxu0 0.0
    %1819 = vmatpush.msra.mxu0 %v1215
    %1820 = vmatpush.msra.mxu0 %v1164
    %1821 = vmatpush.msra.mxu0 %v1113
    %1822 = vmatpush.msra.mxu0 %v1062
    %1823 = vmatmul.f32.gmra.mxu0 %v1274
    %v1824 = vpop.f32.mrf.mxu0
    %v1825 = vadd.f32 %v1255, %v1824
    %1826 = vmatmul.f32.gmra.mxu0 %v1277
    %v1827 = vpop.f32.mrf.mxu0
    %v1828 = vadd.f32 %v1260, %v1827
    %1829 = vmatmul.f32.gmra.mxu0 %v1280
    %v1830 = vpop.f32.mrf.mxu0
    %v1831 = vadd.f32 %v1265, %v1830
    %1832 = vmatmul.f32.gmra.mxu0 %v1283
    %v1833 = vpop.f32.mrf.mxu0
    %v1834 = vadd.f32 %v1270, %v1833
    %1835 = vdwg.mxu0
    %1836 = vmatpush.msra.mxu0 0.0
    %1837 = vmatpush.msra.mxu0 0.0
    %1838 = vmatpush.msra.mxu0 0.0
    %1839 = vmatpush.msra.mxu0 0.0
    %1840 = vmatpush.msra.mxu0 0.0
    %1841 = vmatpush.msra.mxu0 0.0
    %1842 = vmatpush.msra.mxu0 0.0
    %1843 = vmatpush.msra.mxu0 0.0
    %1844 = vmatpush.msra.mxu0 0.0
    %1845 = vmatpush.msra.mxu0 0.0
    %1846 = vmatpush.msra.mxu0 0.0
    %1847 = vmatpush.msra.mxu0 0.0
    %1848 = vmatpush.msra.mxu0 %v1216
    %1849 = vmatpush.msra.mxu0 %v1165
    %1850 = vmatpush.msra.mxu0 %v1114
    %1851 = vmatpush.msra.mxu0 %v1063
    %1852 = vmatmul.f32.gmra.mxu0 %v1274
    %v1853 = vpop.f32.mrf.mxu0
    %v1854 = vadd.f32 %v1255, %v1853
    %1855 = vmatmul.f32.gmra.mxu0 %v1277
    %v1856 = vpop.f32.mrf.mxu0
    %v1857 = vadd.f32 %v1260, %v1856
    %1858 = vmatmul.f32.gmra.mxu0 %v1280
    %v1859 = vpop.f32.mrf.mxu0
    %v1860 = vadd.f32 %v1265, %v1859
    %1861 = vmatmul.f32.gmra.mxu0 %v1283
    %v1862 = vpop.f32.mrf.mxu0
    %v1863 = vadd.f32 %v1270, %v1862
    %1864 = vdwg.mxu0
    %1865 = vmatpush.msra.mxu0 0.0
    %1866 = vmatpush.msra.mxu0 0.0
    %1867 = vmatpush.msra.mxu0 0.0
    %1868 = vmatpush.msra.mxu0 0.0
    %1869 = vmatpush.msra.mxu0 0.0
    %1870 = vmatpush.msra.mxu0 0.0
    %1871 = vmatpush.msra.mxu0 0.0
    %1872 = vmatpush.msra.mxu0 0.0
    %1873 = vmatpush.msra.mxu0 0.0
    %1874 = vmatpush.msra.mxu0 0.0
    %1875 = vmatpush.msra.mxu0 0.0
    %1876 = vmatpush.msra.mxu0 0.0
    %1877 = vmatpush.msra.mxu0 %v1217
    %1878 = vmatpush.msra.mxu0 %v1166
    %1879 = vmatpush.msra.mxu0 %v1115
    %1880 = vmatpush.msra.mxu0 %v1064
    %1881 = vmatmul.f32.gmra.mxu0 %v1274
    %v1882 = vpop.f32.mrf.mxu0
    %v1883 = vadd.f32 %v1255, %v1882
    %1884 = vmatmul.f32.gmra.mxu0 %v1277
    %v1885 = vpop.f32.mrf.mxu0
    %v1886 = vadd.f32 %v1260, %v1885
    %1887 = vmatmul.f32.gmra.mxu0 %v1280
    %v1888 = vpop.f32.mrf.mxu0
    %v1889 = vadd.f32 %v1265, %v1888
    %1890 = vmatmul.f32.gmra.mxu0 %v1283
    %v1891 = vpop.f32.mrf.mxu0
    %v1892 = vadd.f32 %v1270, %v1891
    %1893 = vdwg.mxu0
    %1894 = vmatpush.msra.mxu0 0.0
    %1895 = vmatpush.msra.mxu0 0.0
    %1896 = vmatpush.msra.mxu0 0.0
    %1897 = vmatpush.msra.mxu0 0.0
    %1898 = vmatpush.msra.mxu0 0.0
    %1899 = vmatpush.msra.mxu0 0.0
    %1900 = vmatpush.msra.mxu0 0.0
    %1901 = vmatpush.msra.mxu0 0.0
    %1902 = vmatpush.msra.mxu0 0.0
    %1903 = vmatpush.msra.mxu0 0.0
    %1904 = vmatpush.msra.mxu0 0.0
    %1905 = vmatpush.msra.mxu0 0.0
    %1906 = vmatpush.msra.mxu0 %v1218
    %1907 = vmatpush.msra.mxu0 %v1167
    %1908 = vmatpush.msra.mxu0 %v1116
    %1909 = vmatpush.msra.mxu0 %v1065
    %1910 = vmatmul.f32.gmra.mxu0 %v1274
    %v1911 = vpop.f32.mrf.mxu0
    %v1912 = vadd.f32 %v1255, %v1911
    %1913 = vmatmul.f32.gmra.mxu0 %v1277
    %v1914 = vpop.f32.mrf.mxu0
    %v1915 = vadd.f32 %v1260, %v1914
    %1916 = vmatmul.f32.gmra.mxu0 %v1280
    %v1917 = vpop.f32.mrf.mxu0
    %v1918 = vadd.f32 %v1265, %v1917
    %1919 = vmatmul.f32.gmra.mxu0 %v1283
    %v1920 = vpop.f32.mrf.mxu0
    %v1921 = vadd.f32 %v1270, %v1920
    %1922 = vdwg.mxu0
    %1923 = vmatpush.msra.mxu0 0.0
    %1924 = vmatpush.msra.mxu0 0.0
    %1925 = vmatpush.msra.mxu0 0.0
    %1926 = vmatpush.msra.mxu0 0.0
    %1927 = vmatpush.msra.mxu0 0.0
    %1928 = vmatpush.msra.mxu0 0.0
    %1929 = vmatpush.msra.mxu0 0.0
    %1930 = vmatpush.msra.mxu0 0.0
    %1931 = vmatpush.msra.mxu0 0.0
    %1932 = vmatpush.msra.mxu0 0.0
    %1933 = vmatpush.msra.mxu0 0.0
    %1934 = vmatpush.msra.mxu0 0.0
    %1935 = vmatpush.msra.mxu0 %v1219
    %1936 = vmatpush.msra.mxu0 %v1168
    %1937 = vmatpush.msra.mxu0 %v1117
    %1938 = vmatpush.msra.mxu0 %v1066
    %1939 = vmatmul.f32.gmra.mxu0 %v1274
    %v1940 = vpop.f32.mrf.mxu0
    %v1941 = vadd.f32 %v1255, %v1940
    %1942 = vmatmul.f32.gmra.mxu0 %v1277
    %v1943 = vpop.f32.mrf.mxu0
    %v1944 = vadd.f32 %v1260, %v1943
    %1945 = vmatmul.f32.gmra.mxu0 %v1280
    %v1946 = vpop.f32.mrf.mxu0
    %v1947 = vadd.f32 %v1265, %v1946
    %1948 = vmatmul.f32.gmra.mxu0 %v1283
    %v1949 = vpop.f32.mrf.mxu0
    %v1950 = vadd.f32 %v1270, %v1949
    %1951 = vdwg.mxu0
    %1952 = vmatpush.msra.mxu0 0.0
    %1953 = vmatpush.msra.mxu0 0.0
    %1954 = vmatpush.msra.mxu0 0.0
    %1955 = vmatpush.msra.mxu0 0.0
    %1956 = vmatpush.msra.mxu0 0.0
    %1957 = vmatpush.msra.mxu0 0.0
    %1958 = vmatpush.msra.mxu0 0.0
    %1959 = vmatpush.msra.mxu0 0.0
    %1960 = vmatpush.msra.mxu0 0.0
    %1961 = vmatpush.msra.mxu0 0.0
    %1962 = vmatpush.msra.mxu0 0.0
    %1963 = vmatpush.msra.mxu0 0.0
    %1964 = vmatpush.msra.mxu0 %v1220
    %1965 = vmatpush.msra.mxu0 %v1169
    %1966 = vmatpush.msra.mxu0 %v1118
    %1967 = vmatpush.msra.mxu0 %v1067
    %1968 = vmatmul.f32.gmra.mxu0 %v1274
    %v1969 = vpop.f32.mrf.mxu0
    %v1970 = vadd.f32 %v1255, %v1969
    %1971 = vmatmul.f32.gmra.mxu0 %v1277
    %v1972 = vpop.f32.mrf.mxu0
    %v1973 = vadd.f32 %v1260, %v1972
    %1974 = vmatmul.f32.gmra.mxu0 %v1280
    %v1975 = vpop.f32.mrf.mxu0
    %v1976 = vadd.f32 %v1265, %v1975
    %1977 = vmatmul.f32.gmra.mxu0 %v1283
    %v1978 = vpop.f32.mrf.mxu0
    %v1979 = vadd.f32 %v1270, %v1978
    %1980 = vdwg.mxu0
    %1981 = vmatpush.msra.mxu0 0.0
    %1982 = vmatpush.msra.mxu0 0.0
    %1983 = vmatpush.msra.mxu0 0.0
    %1984 = vmatpush.msra.mxu0 0.0
    %1985 = vmatpush.msra.mxu0 0.0
    %1986 = vmatpush.msra.mxu0 0.0
    %1987 = vmatpush.msra.mxu0 0.0
    %1988 = vmatpush.msra.mxu0 0.0
    %1989 = vmatpush.msra.mxu0 0.0
    %1990 = vmatpush.msra.mxu0 0.0
    %1991 = vmatpush.msra.mxu0 0.0
    %1992 = vmatpush.msra.mxu0 0.0
    %1993 = vmatpush.msra.mxu0 %v1221
    %1994 = vmatpush.msra.mxu0 %v1170
    %1995 = vmatpush.msra.mxu0 %v1119
    %1996 = vmatpush.msra.mxu0 %v1068
    %1997 = vmatmul.f32.gmra.mxu0 %v1274
    %v1998 = vpop.f32.mrf.mxu0
    %v1999 = vadd.f32 %v1255, %v1998
    %2000 = vmatmul.f32.gmra.mxu0 %v1277
    %v2001 = vpop.f32.mrf.mxu0
    %v2002 = vadd.f32 %v1260, %v2001
    %2003 = vmatmul.f32.gmra.mxu0 %v1280
    %v2004 = vpop.f32.mrf.mxu0
    %v2005 = vadd.f32 %v1265, %v2004
    %2006 = vmatmul.f32.gmra.mxu0 %v1283
    %v2007 = vpop.f32.mrf.mxu0
    %v2008 = vadd.f32 %v1270, %v2007
    %2009 = vdwg.mxu0
    %2010 = vmatpush.msra.mxu0 0.0
    %2011 = vmatpush.msra.mxu0 0.0
    %2012 = vmatpush.msra.mxu0 0.0
    %2013 = vmatpush.msra.mxu0 0.0
    %2014 = vmatpush.msra.mxu0 0.0
    %2015 = vmatpush.msra.mxu0 0.0
    %2016 = vmatpush.msra.mxu0 0.0
    %2017 = vmatpush.msra.mxu0 0.0
    %2018 = vmatpush.msra.mxu0 0.0
    %2019 = vmatpush.msra.mxu0 0.0
    %2020 = vmatpush.msra.mxu0 0.0
    %2021 = vmatpush.msra.mxu0 0.0
    %2022 = vmatpush.msra.mxu0 %v1222
    %2023 = vmatpush.msra.mxu0 %v1171
    %2024 = vmatpush.msra.mxu0 %v1120
    %2025 = vmatpush.msra.mxu0 %v1069
    %2026 = vmatmul.f32.gmra.mxu0 %v1274
    %v2027 = vpop.f32.mrf.mxu0
    %v2028 = vadd.f32 %v1255, %v2027
    %2029 = vmatmul.f32.gmra.mxu0 %v1277
    %v2030 = vpop.f32.mrf.mxu0
    %v2031 = vadd.f32 %v1260, %v2030
    %2032 = vmatmul.f32.gmra.mxu0 %v1280
    %v2033 = vpop.f32.mrf.mxu0
    %v2034 = vadd.f32 %v1265, %v2033
    %2035 = vmatmul.f32.gmra.mxu0 %v1283
    %v2036 = vpop.f32.mrf.mxu0
    %v2037 = vadd.f32 %v1270, %v2036
    %2038 = vdwg.mxu0
    %2039 = vmatpush.msra.mxu0 0.0
    %2040 = vmatpush.msra.mxu0 0.0
    %2041 = vmatpush.msra.mxu0 0.0
    %2042 = vmatpush.msra.mxu0 0.0
    %2043 = vmatpush.msra.mxu0 0.0
    %2044 = vmatpush.msra.mxu0 0.0
    %2045 = vmatpush.msra.mxu0 0.0
    %2046 = vmatpush.msra.mxu0 0.0
    %2047 = vmatpush.msra.mxu0 0.0
    %2048 = vmatpush.msra.mxu0 0.0
    %2049 = vmatpush.msra.mxu0 0.0
    %2050 = vmatpush.msra.mxu0 0.0
    %2051 = vmatpush.msra.mxu0 %v1223
    %2052 = vmatpush.msra.mxu0 %v1172
    %2053 = vmatpush.msra.mxu0 %v1121
    %2054 = vmatpush.msra.mxu0 %v1070
    %2055 = vmatmul.f32.gmra.mxu0 %v1274
    %v2056 = vpop.f32.mrf.mxu0
    %v2057 = vadd.f32 %v1255, %v2056
    %2058 = vmatmul.f32.gmra.mxu0 %v1277
    %v2059 = vpop.f32.mrf.mxu0
    %v2060 = vadd.f32 %v1260, %v2059
    %2061 = vmatmul.f32.gmra.mxu0 %v1280
    %v2062 = vpop.f32.mrf.mxu0
    %v2063 = vadd.f32 %v1265, %v2062
    %2064 = vmatmul.f32.gmra.mxu0 %v1283
    %v2065 = vpop.f32.mrf.mxu0
    %v2066 = vadd.f32 %v1270, %v2065
    %2067 = vdwg.mxu0
    %2068 = vmatpush.msra.mxu0 0.0
    %2069 = vmatpush.msra.mxu0 0.0
    %2070 = vmatpush.msra.mxu0 0.0
    %2071 = vmatpush.msra.mxu0 0.0
    %2072 = vmatpush.msra.mxu0 0.0
    %2073 = vmatpush.msra.mxu0 0.0
    %2074 = vmatpush.msra.mxu0 0.0
    %2075 = vmatpush.msra.mxu0 0.0
    %2076 = vmatpush.msra.mxu0 0.0
    %2077 = vmatpush.msra.mxu0 0.0
    %2078 = vmatpush.msra.mxu0 0.0
    %2079 = vmatpush.msra.mxu0 0.0
    %2080 = vmatpush.msra.mxu0 %v1224
    %2081 = vmatpush.msra.mxu0 %v1173
    %2082 = vmatpush.msra.mxu0 %v1122
    %2083 = vmatpush.msra.mxu0 %v1071
    %2084 = vmatmul.f32.gmra.mxu0 %v1274
    %v2085 = vpop.f32.mrf.mxu0
    %v2086 = vadd.f32 %v1255, %v2085
    %2087 = vmatmul.f32.gmra.mxu0 %v1277
    %v2088 = vpop.f32.mrf.mxu0
    %v2089 = vadd.f32 %v1260, %v2088
    %2090 = vmatmul.f32.gmra.mxu0 %v1280
    %v2091 = vpop.f32.mrf.mxu0
    %v2092 = vadd.f32 %v1265, %v2091
    %2093 = vmatmul.f32.gmra.mxu0 %v1283
    %v2094 = vpop.f32.mrf.mxu0
    %v2095 = vadd.f32 %v1270, %v2094
    %2096 = vdwg.mxu0
    %2097 = vmatpush.msra.mxu0 0.0
    %2098 = vmatpush.msra.mxu0 0.0
    %2099 = vmatpush.msra.mxu0 0.0
    %2100 = vmatpush.msra.mxu0 0.0
    %2101 = vmatpush.msra.mxu0 0.0
    %2102 = vmatpush.msra.mxu0 0.0
    %2103 = vmatpush.msra.mxu0 0.0
    %2104 = vmatpush.msra.mxu0 0.0
    %2105 = vmatpush.msra.mxu0 0.0
    %2106 = vmatpush.msra.mxu0 0.0
    %2107 = vmatpush.msra.mxu0 0.0
    %2108 = vmatpush.msra.mxu0 0.0
    %2109 = vmatpush.msra.mxu0 %v1225
    %2110 = vmatpush.msra.mxu0 %v1174
    %2111 = vmatpush.msra.mxu0 %v1123
    %2112 = vmatpush.msra.mxu0 %v1072
    %2113 = vmatmul.f32.gmra.mxu0 %v1274
    %v2114 = vpop.f32.mrf.mxu0
    %v2115 = vadd.f32 %v1255, %v2114
    %2116 = vmatmul.f32.gmra.mxu0 %v1277
    %v2117 = vpop.f32.mrf.mxu0
    %v2118 = vadd.f32 %v1260, %v2117
    %2119 = vmatmul.f32.gmra.mxu0 %v1280
    %v2120 = vpop.f32.mrf.mxu0
    %v2121 = vadd.f32 %v1265, %v2120
    %2122 = vmatmul.f32.gmra.mxu0 %v1283
    %v2123 = vpop.f32.mrf.mxu0
    %v2124 = vadd.f32 %v1270, %v2123
    %2125 = vdwg.mxu0
    %2126 = vmatpush.msra.mxu0 0.0
    %2127 = vmatpush.msra.mxu0 0.0
    %2128 = vmatpush.msra.mxu0 0.0
    %2129 = vmatpush.msra.mxu0 0.0
    %2130 = vmatpush.msra.mxu0 0.0
    %2131 = vmatpush.msra.mxu0 0.0
    %2132 = vmatpush.msra.mxu0 0.0
    %2133 = vmatpush.msra.mxu0 0.0
    %2134 = vmatpush.msra.mxu0 0.0
    %2135 = vmatpush.msra.mxu0 0.0
    %2136 = vmatpush.msra.mxu0 0.0
    %2137 = vmatpush.msra.mxu0 0.0
    %2138 = vmatpush.msra.mxu0 %v1226
    %2139 = vmatpush.msra.mxu0 %v1175
    %2140 = vmatpush.msra.mxu0 %v1124
    %2141 = vmatpush.msra.mxu0 %v1073
    %2142 = vmatmul.f32.gmra.mxu0 %v1274
    %v2143 = vpop.f32.mrf.mxu0
    %v2144 = vadd.f32 %v1255, %v2143
    %2145 = vmatmul.f32.gmra.mxu0 %v1277
    %v2146 = vpop.f32.mrf.mxu0
    %v2147 = vadd.f32 %v1260, %v2146
    %2148 = vmatmul.f32.gmra.mxu0 %v1280
    %v2149 = vpop.f32.mrf.mxu0
    %v2150 = vadd.f32 %v1265, %v2149
    %2151 = vmatmul.f32.gmra.mxu0 %v1283
    %v2152 = vpop.f32.mrf.mxu0
    %v2153 = vadd.f32 %v1270, %v2152
    %2154 = vdwg.mxu0
    %2155 = vmatpush.msra.mxu0 0.0
    %2156 = vmatpush.msra.mxu0 0.0
    %2157 = vmatpush.msra.mxu0 0.0
    %2158 = vmatpush.msra.mxu0 0.0
    %2159 = vmatpush.msra.mxu0 0.0
    %2160 = vmatpush.msra.mxu0 0.0
    %2161 = vmatpush.msra.mxu0 0.0
    %2162 = vmatpush.msra.mxu0 0.0
    %2163 = vmatpush.msra.mxu0 0.0
    %2164 = vmatpush.msra.mxu0 0.0
    %2165 = vmatpush.msra.mxu0 0.0
    %2166 = vmatpush.msra.mxu0 0.0
    %2167 = vmatpush.msra.mxu0 %v1227
    %2168 = vmatpush.msra.mxu0 %v1176
    %2169 = vmatpush.msra.mxu0 %v1125
    %2170 = vmatpush.msra.mxu0 %v1074
    %2171 = vmatmul.f32.gmra.mxu0 %v1274
    %v2172 = vpop.f32.mrf.mxu0
    %v2173 = vadd.f32 %v1255, %v2172
    %2174 = vmatmul.f32.gmra.mxu0 %v1277
    %v2175 = vpop.f32.mrf.mxu0
    %v2176 = vadd.f32 %v1260, %v2175
    %2177 = vmatmul.f32.gmra.mxu0 %v1280
    %v2178 = vpop.f32.mrf.mxu0
    %v2179 = vadd.f32 %v1265, %v2178
    %2180 = vmatmul.f32.gmra.mxu0 %v1283
    %v2181 = vpop.f32.mrf.mxu0
    %v2182 = vadd.f32 %v1270, %v2181
    %2183 = vdwg.mxu0
    %2184 = vmatpush.msra.mxu0 0.0
    %2185 = vmatpush.msra.mxu0 0.0
    %2186 = vmatpush.msra.mxu0 0.0
    %2187 = vmatpush.msra.mxu0 0.0
    %2188 = vmatpush.msra.mxu0 0.0
    %2189 = vmatpush.msra.mxu0 0.0
    %2190 = vmatpush.msra.mxu0 0.0
    %2191 = vmatpush.msra.mxu0 0.0
    %2192 = vmatpush.msra.mxu0 0.0
    %2193 = vmatpush.msra.mxu0 0.0
    %2194 = vmatpush.msra.mxu0 0.0
    %2195 = vmatpush.msra.mxu0 0.0
    %2196 = vmatpush.msra.mxu0 %v1228
    %2197 = vmatpush.msra.mxu0 %v1177
    %2198 = vmatpush.msra.mxu0 %v1126
    %2199 = vmatpush.msra.mxu0 %v1075
    %2200 = vmatmul.f32.gmra.mxu0 %v1274
    %v2201 = vpop.f32.mrf.mxu0
    %v2202 = vadd.f32 %v1255, %v2201
    %2203 = vmatmul.f32.gmra.mxu0 %v1277
    %v2204 = vpop.f32.mrf.mxu0
    %v2205 = vadd.f32 %v1260, %v2204
    %2206 = vmatmul.f32.gmra.mxu0 %v1280
    %v2207 = vpop.f32.mrf.mxu0
    %v2208 = vadd.f32 %v1265, %v2207
    %2209 = vmatmul.f32.gmra.mxu0 %v1283
    %v2210 = vpop.f32.mrf.mxu0
    %v2211 = vadd.f32 %v1270, %v2210
    %2212 = vdwg.mxu0
    %2213 = vmatpush.msra.mxu0 0.0
    %2214 = vmatpush.msra.mxu0 0.0
    %2215 = vmatpush.msra.mxu0 0.0
    %2216 = vmatpush.msra.mxu0 0.0
    %2217 = vmatpush.msra.mxu0 0.0
    %2218 = vmatpush.msra.mxu0 0.0
    %2219 = vmatpush.msra.mxu0 0.0
    %2220 = vmatpush.msra.mxu0 0.0
    %2221 = vmatpush.msra.mxu0 0.0
    %2222 = vmatpush.msra.mxu0 0.0
    %2223 = vmatpush.msra.mxu0 0.0
    %2224 = vmatpush.msra.mxu0 0.0
    %2225 = vmatpush.msra.mxu0 %v1229
    %2226 = vmatpush.msra.mxu0 %v1178
    %2227 = vmatpush.msra.mxu0 %v1127
    %2228 = vmatpush.msra.mxu0 %v1076
    %2229 = vmatmul.f32.gmra.mxu0 %v1274
    %v2230 = vpop.f32.mrf.mxu0
    %v2231 = vadd.f32 %v1255, %v2230
    %2232 = vmatmul.f32.gmra.mxu0 %v1277
    %v2233 = vpop.f32.mrf.mxu0
    %v2234 = vadd.f32 %v1260, %v2233
    %2235 = vmatmul.f32.gmra.mxu0 %v1280
    %v2236 = vpop.f32.mrf.mxu0
    %v2237 = vadd.f32 %v1265, %v2236
    %2238 = vmatmul.f32.gmra.mxu0 %v1283
    %v2239 = vpop.f32.mrf.mxu0
    %v2240 = vadd.f32 %v1270, %v2239
    %2241 = vdwg.mxu0
    %2242 = vmatpush.msra.mxu0 0.0
    %2243 = vmatpush.msra.mxu0 0.0
    %2244 = vmatpush.msra.mxu0 0.0
    %2245 = vmatpush.msra.mxu0 0.0
    %2246 = vmatpush.msra.mxu0 0.0
    %2247 = vmatpush.msra.mxu0 0.0
    %2248 = vmatpush.msra.mxu0 0.0
    %2249 = vmatpush.msra.mxu0 0.0
    %2250 = vmatpush.msra.mxu0 0.0
    %2251 = vmatpush.msra.mxu0 0.0
    %2252 = vmatpush.msra.mxu0 0.0
    %2253 = vmatpush.msra.mxu0 0.0
    %2254 = vmatpush.msra.mxu0 %v1230
    %2255 = vmatpush.msra.mxu0 %v1179
    %2256 = vmatpush.msra.mxu0 %v1128
    %2257 = vmatpush.msra.mxu0 %v1077
    %2258 = vmatmul.f32.gmra.mxu0 %v1274
    %v2259 = vpop.f32.mrf.mxu0
    %v2260 = vadd.f32 %v1255, %v2259
    %2261 = vmatmul.f32.gmra.mxu0 %v1277
    %v2262 = vpop.f32.mrf.mxu0
    %v2263 = vadd.f32 %v1260, %v2262
    %2264 = vmatmul.f32.gmra.mxu0 %v1280
    %v2265 = vpop.f32.mrf.mxu0
    %v2266 = vadd.f32 %v1265, %v2265
    %2267 = vmatmul.f32.gmra.mxu0 %v1283
    %v2268 = vpop.f32.mrf.mxu0
    %v2269 = vadd.f32 %v1270, %v2268
    %2270 = vdwg.mxu0
    %2271 = vmatpush.msra.mxu0 0.0
    %2272 = vmatpush.msra.mxu0 0.0
    %2273 = vmatpush.msra.mxu0 0.0
    %2274 = vmatpush.msra.mxu0 0.0
    %2275 = vmatpush.msra.mxu0 0.0
    %2276 = vmatpush.msra.mxu0 0.0
    %2277 = vmatpush.msra.mxu0 0.0
    %2278 = vmatpush.msra.mxu0 0.0
    %2279 = vmatpush.msra.mxu0 0.0
    %2280 = vmatpush.msra.mxu0 0.0
    %2281 = vmatpush.msra.mxu0 0.0
    %2282 = vmatpush.msra.mxu0 0.0
    %2283 = vmatpush.msra.mxu0 %v1231
    %2284 = vmatpush.msra.mxu0 %v1180
    %2285 = vmatpush.msra.mxu0 %v1129
    %2286 = vmatpush.msra.mxu0 %v1078
    %2287 = vmatmul.f32.gmra.mxu0 %v1274
    %v2288 = vpop.f32.mrf.mxu0
    %v2289 = vadd.f32 %v1255, %v2288
    %2290 = vmatmul.f32.gmra.mxu0 %v1277
    %v2291 = vpop.f32.mrf.mxu0
    %v2292 = vadd.f32 %v1260, %v2291
    %2293 = vmatmul.f32.gmra.mxu0 %v1280
    %v2294 = vpop.f32.mrf.mxu0
    %v2295 = vadd.f32 %v1265, %v2294
    %2296 = vmatmul.f32.gmra.mxu0 %v1283
    %v2297 = vpop.f32.mrf.mxu0
    %v2298 = vadd.f32 %v1270, %v2297
    %2299 = vdwg.mxu0
    %2300 = vmatpush.msra.mxu0 0.0
    %2301 = vmatpush.msra.mxu0 0.0
    %2302 = vmatpush.msra.mxu0 0.0
    %2303 = vmatpush.msra.mxu0 0.0
    %2304 = vmatpush.msra.mxu0 0.0
    %2305 = vmatpush.msra.mxu0 0.0
    %2306 = vmatpush.msra.mxu0 0.0
    %2307 = vmatpush.msra.mxu0 0.0
    %2308 = vmatpush.msra.mxu0 0.0
    %2309 = vmatpush.msra.mxu0 0.0
    %2310 = vmatpush.msra.mxu0 0.0
    %2311 = vmatpush.msra.mxu0 0.0
    %2312 = vmatpush.msra.mxu0 %v1232
    %2313 = vmatpush.msra.mxu0 %v1181
    %2314 = vmatpush.msra.mxu0 %v1130
    %2315 = vmatpush.msra.mxu0 %v1079
    %2316 = vmatmul.f32.gmra.mxu0 %v1274
    %v2317 = vpop.f32.mrf.mxu0
    %v2318 = vadd.f32 %v1255, %v2317
    %2319 = vmatmul.f32.gmra.mxu0 %v1277
    %v2320 = vpop.f32.mrf.mxu0
    %v2321 = vadd.f32 %v1260, %v2320
    %2322 = vmatmul.f32.gmra.mxu0 %v1280
    %v2323 = vpop.f32.mrf.mxu0
    %v2324 = vadd.f32 %v1265, %v2323
    %2325 = vmatmul.f32.gmra.mxu0 %v1283
    %v2326 = vpop.f32.mrf.mxu0
    %v2327 = vadd.f32 %v1270, %v2326
    %2328 = vdwg.mxu0
    %2329 = vmatpush.msra.mxu0 0.0
    %2330 = vmatpush.msra.mxu0 0.0
    %2331 = vmatpush.msra.mxu0 0.0
    %2332 = vmatpush.msra.mxu0 0.0
    %2333 = vmatpush.msra.mxu0 0.0
    %2334 = vmatpush.msra.mxu0 0.0
    %2335 = vmatpush.msra.mxu0 0.0
    %2336 = vmatpush.msra.mxu0 0.0
    %2337 = vmatpush.msra.mxu0 0.0
    %2338 = vmatpush.msra.mxu0 0.0
    %2339 = vmatpush.msra.mxu0 0.0
    %2340 = vmatpush.msra.mxu0 0.0
    %2341 = vmatpush.msra.mxu0 %v1233
    %2342 = vmatpush.msra.mxu0 %v1182
    %2343 = vmatpush.msra.mxu0 %v1131
    %2344 = vmatpush.msra.mxu0 %v1080
    %2345 = vmatmul.f32.gmra.mxu0 %v1274
    %v2346 = vpop.f32.mrf.mxu0
    %v2347 = vadd.f32 %v1255, %v2346
    %2348 = vmatmul.f32.gmra.mxu0 %v1277
    %v2349 = vpop.f32.mrf.mxu0
    %v2350 = vadd.f32 %v1260, %v2349
    %2351 = vmatmul.f32.gmra.mxu0 %v1280
    %v2352 = vpop.f32.mrf.mxu0
    %v2353 = vadd.f32 %v1265, %v2352
    %2354 = vmatmul.f32.gmra.mxu0 %v1283
    %v2355 = vpop.f32.mrf.mxu0
    %v2356 = vadd.f32 %v1270, %v2355
    %2357 = vdwg.mxu0
    %2358 = vmatpush.msra.mxu0 0.0
    %2359 = vmatpush.msra.mxu0 0.0
    %2360 = vmatpush.msra.mxu0 0.0
    %2361 = vmatpush.msra.mxu0 0.0
    %2362 = vmatpush.msra.mxu0 0.0
    %2363 = vmatpush.msra.mxu0 0.0
    %2364 = vmatpush.msra.mxu0 0.0
    %2365 = vmatpush.msra.mxu0 0.0
    %2366 = vmatpush.msra.mxu0 0.0
    %2367 = vmatpush.msra.mxu0 0.0
    %2368 = vmatpush.msra.mxu0 0.0
    %2369 = vmatpush.msra.mxu0 0.0
    %2370 = vmatpush.msra.mxu0 %v1234
    %2371 = vmatpush.msra.mxu0 %v1183
    %2372 = vmatpush.msra.mxu0 %v1132
    %2373 = vmatpush.msra.mxu0 %v1081
    %2374 = vmatmul.f32.gmra.mxu0 %v1274
    %v2375 = vpop.f32.mrf.mxu0
    %v2376 = vadd.f32 %v1255, %v2375
    %2377 = vmatmul.f32.gmra.mxu0 %v1277
    %v2378 = vpop.f32.mrf.mxu0
    %v2379 = vadd.f32 %v1260, %v2378
    %2380 = vmatmul.f32.gmra.mxu0 %v1280
    %v2381 = vpop.f32.mrf.mxu0
    %v2382 = vadd.f32 %v1265, %v2381
    %2383 = vmatmul.f32.gmra.mxu0 %v1283
    %v2384 = vpop.f32.mrf.mxu0
    %v2385 = vadd.f32 %v1270, %v2384
    %2386 = vdwg.mxu0
    %2387 = vmatpush.msra.mxu0 0.0
    %2388 = vmatpush.msra.mxu0 0.0
    %2389 = vmatpush.msra.mxu0 0.0
    %2390 = vmatpush.msra.mxu0 0.0
    %2391 = vmatpush.msra.mxu0 0.0
    %2392 = vmatpush.msra.mxu0 0.0
    %2393 = vmatpush.msra.mxu0 0.0
    %2394 = vmatpush.msra.mxu0 0.0
    %2395 = vmatpush.msra.mxu0 0.0
    %2396 = vmatpush.msra.mxu0 0.0
    %2397 = vmatpush.msra.mxu0 0.0
    %2398 = vmatpush.msra.mxu0 0.0
    %2399 = vmatpush.msra.mxu0 %v1235
    %2400 = vmatpush.msra.mxu0 %v1184
    %2401 = vmatpush.msra.mxu0 %v1133
    %2402 = vmatpush.msra.mxu0 %v1082
    %2403 = vmatmul.f32.gmra.mxu0 %v1274
    %v2404 = vpop.f32.mrf.mxu0
    %v2405 = vadd.f32 %v1255, %v2404
    %2406 = vmatmul.f32.gmra.mxu0 %v1277
    %v2407 = vpop.f32.mrf.mxu0
    %v2408 = vadd.f32 %v1260, %v2407
    %2409 = vmatmul.f32.gmra.mxu0 %v1280
    %v2410 = vpop.f32.mrf.mxu0
    %v2411 = vadd.f32 %v1265, %v2410
    %2412 = vmatmul.f32.gmra.mxu0 %v1283
    %v2413 = vpop.f32.mrf.mxu0
    %v2414 = vadd.f32 %v1270, %v2413
    %2415 = vdwg.mxu0
    %2416 = vmatpush.msra.mxu0 0.0
    %2417 = vmatpush.msra.mxu0 0.0
    %2418 = vmatpush.msra.mxu0 0.0
    %2419 = vmatpush.msra.mxu0 0.0
    %2420 = vmatpush.msra.mxu0 0.0
    %2421 = vmatpush.msra.mxu0 0.0
    %2422 = vmatpush.msra.mxu0 0.0
    %2423 = vmatpush.msra.mxu0 0.0
    %2424 = vmatpush.msra.mxu0 0.0
    %2425 = vmatpush.msra.mxu0 0.0
    %2426 = vmatpush.msra.mxu0 0.0
    %2427 = vmatpush.msra.mxu0 0.0
    %2428 = vmatpush.msra.mxu0 %v1236
    %2429 = vmatpush.msra.mxu0 %v1185
    %2430 = vmatpush.msra.mxu0 %v1134
    %2431 = vmatpush.msra.mxu0 %v1083
    %2432 = vmatmul.f32.gmra.mxu0 %v1274
    %v2433 = vpop.f32.mrf.mxu0
    %v2434 = vadd.f32 %v1255, %v2433
    %2435 = vmatmul.f32.gmra.mxu0 %v1277
    %v2436 = vpop.f32.mrf.mxu0
    %v2437 = vadd.f32 %v1260, %v2436
    %2438 = vmatmul.f32.gmra.mxu0 %v1280
    %v2439 = vpop.f32.mrf.mxu0
    %v2440 = vadd.f32 %v1265, %v2439
    %2441 = vmatmul.f32.gmra.mxu0 %v1283
    %v2442 = vpop.f32.mrf.mxu0
    %v2443 = vadd.f32 %v1270, %v2442
    %2444 = vdwg.mxu0
    %2445 = vmatpush.msra.mxu0 0.0
    %2446 = vmatpush.msra.mxu0 0.0
    %2447 = vmatpush.msra.mxu0 0.0
    %2448 = vmatpush.msra.mxu0 0.0
    %2449 = vmatpush.msra.mxu0 0.0
    %2450 = vmatpush.msra.mxu0 0.0
    %2451 = vmatpush.msra.mxu0 0.0
    %2452 = vmatpush.msra.mxu0 0.0
    %2453 = vmatpush.msra.mxu0 0.0
    %2454 = vmatpush.msra.mxu0 0.0
    %2455 = vmatpush.msra.mxu0 0.0
    %2456 = vmatpush.msra.mxu0 0.0
    %2457 = vmatpush.msra.mxu0 %v1237
    %2458 = vmatpush.msra.mxu0 %v1186
    %2459 = vmatpush.msra.mxu0 %v1135
    %2460 = vmatpush.msra.mxu0 %v1084
    %2461 = vmatmul.f32.gmra.mxu0 %v1274
    %v2462 = vpop.f32.mrf.mxu0
    %v2463 = vadd.f32 %v1255, %v2462
    %2464 = vmatmul.f32.gmra.mxu0 %v1277
    %v2465 = vpop.f32.mrf.mxu0
    %v2466 = vadd.f32 %v1260, %v2465
    %2467 = vmatmul.f32.gmra.mxu0 %v1280
    %v2468 = vpop.f32.mrf.mxu0
    %v2469 = vadd.f32 %v1265, %v2468
    %2470 = vmatmul.f32.gmra.mxu0 %v1283
    %v2471 = vpop.f32.mrf.mxu0
    %v2472 = vadd.f32 %v1270, %v2471
    %2473 = vdwg.mxu0
    %2474 = vmatpush.msra.mxu0 0.0
    %2475 = vmatpush.msra.mxu0 0.0
    %2476 = vmatpush.msra.mxu0 0.0
    %2477 = vmatpush.msra.mxu0 0.0
    %2478 = vmatpush.msra.mxu0 0.0
    %2479 = vmatpush.msra.mxu0 0.0
    %2480 = vmatpush.msra.mxu0 0.0
    %2481 = vmatpush.msra.mxu0 0.0
    %2482 = vmatpush.msra.mxu0 0.0
    %2483 = vmatpush.msra.mxu0 0.0
    %2484 = vmatpush.msra.mxu0 0.0
    %2485 = vmatpush.msra.mxu0 0.0
    %2486 = vmatpush.msra.mxu0 %v1238
    %2487 = vmatpush.msra.mxu0 %v1187
    %2488 = vmatpush.msra.mxu0 %v1136
    %2489 = vmatpush.msra.mxu0 %v1085
    %2490 = vmatmul.f32.gmra.mxu0 %v1274
    %v2491 = vpop.f32.mrf.mxu0
    %v2492 = vadd.f32 %v1255, %v2491
    %2493 = vmatmul.f32.gmra.mxu0 %v1277
    %v2494 = vpop.f32.mrf.mxu0
    %v2495 = vadd.f32 %v1260, %v2494
    %2496 = vmatmul.f32.gmra.mxu0 %v1280
    %v2497 = vpop.f32.mrf.mxu0
    %v2498 = vadd.f32 %v1265, %v2497
    %2499 = vmatmul.f32.gmra.mxu0 %v1283
    %v2500 = vpop.f32.mrf.mxu0
    %v2501 = vadd.f32 %v1270, %v2500
    %2502 = vdwg.mxu0
    %2503 = vmatpush.msra.mxu0 0.0
    %2504 = vmatpush.msra.mxu0 0.0
    %2505 = vmatpush.msra.mxu0 0.0
    %2506 = vmatpush.msra.mxu0 0.0
    %2507 = vmatpush.msra.mxu0 0.0
    %2508 = vmatpush.msra.mxu0 0.0
    %2509 = vmatpush.msra.mxu0 0.0
    %2510 = vmatpush.msra.mxu0 0.0
    %2511 = vmatpush.msra.mxu0 0.0
    %2512 = vmatpush.msra.mxu0 0.0
    %2513 = vmatpush.msra.mxu0 0.0
    %2514 = vmatpush.msra.mxu0 0.0
    %2515 = vmatpush.msra.mxu0 %v1239
    %2516 = vmatpush.msra.mxu0 %v1188
    %2517 = vmatpush.msra.mxu0 %v1137
    %2518 = vmatpush.msra.mxu0 %v1086
    %2519 = vmatmul.f32.gmra.mxu0 %v1274
    %v2520 = vpop.f32.mrf.mxu0
    %v2521 = vadd.f32 %v1255, %v2520
    %2522 = vmatmul.f32.gmra.mxu0 %v1277
    %v2523 = vpop.f32.mrf.mxu0
    %v2524 = vadd.f32 %v1260, %v2523
    %2525 = vmatmul.f32.gmra.mxu0 %v1280
    %v2526 = vpop.f32.mrf.mxu0
    %v2527 = vadd.f32 %v1265, %v2526
    %2528 = vmatmul.f32.gmra.mxu0 %v1283
    %v2529 = vpop.f32.mrf.mxu0
    %v2530 = vadd.f32 %v1270, %v2529
    %2531 = vdwg.mxu0
    %2532 = vmatpush.msra.mxu0 0.0
    %2533 = vmatpush.msra.mxu0 0.0
    %2534 = vmatpush.msra.mxu0 0.0
    %2535 = vmatpush.msra.mxu0 0.0
    %2536 = vmatpush.msra.mxu0 0.0
    %2537 = vmatpush.msra.mxu0 0.0
    %2538 = vmatpush.msra.mxu0 0.0
    %2539 = vmatpush.msra.mxu0 0.0
    %2540 = vmatpush.msra.mxu0 0.0
    %2541 = vmatpush.msra.mxu0 0.0
    %2542 = vmatpush.msra.mxu0 0.0
    %2543 = vmatpush.msra.mxu0 0.0
    %2544 = vmatpush.msra.mxu0 %v1240
    %2545 = vmatpush.msra.mxu0 %v1189
    %2546 = vmatpush.msra.mxu0 %v1138
    %2547 = vmatpush.msra.mxu0 %v1087
    %2548 = vmatmul.f32.gmra.mxu0 %v1274
    %v2549 = vpop.f32.mrf.mxu0
    %v2550 = vadd.f32 %v1255, %v2549
    %2551 = vmatmul.f32.gmra.mxu0 %v1277
    %v2552 = vpop.f32.mrf.mxu0
    %v2553 = vadd.f32 %v1260, %v2552
    %2554 = vmatmul.f32.gmra.mxu0 %v1280
    %v2555 = vpop.f32.mrf.mxu0
    %v2556 = vadd.f32 %v1265, %v2555
    %2557 = vmatmul.f32.gmra.mxu0 %v1283
    %v2558 = vpop.f32.mrf.mxu0
    %v2559 = vadd.f32 %v1270, %v2558
    %2560 = vdwg.mxu0
    %2561 = vmatpush.msra.mxu0 0.0
    %2562 = vmatpush.msra.mxu0 0.0
    %2563 = vmatpush.msra.mxu0 0.0
    %2564 = vmatpush.msra.mxu0 0.0
    %2565 = vmatpush.msra.mxu0 0.0
    %2566 = vmatpush.msra.mxu0 0.0
    %2567 = vmatpush.msra.mxu0 0.0
    %2568 = vmatpush.msra.mxu0 0.0
    %2569 = vmatpush.msra.mxu0 0.0
    %2570 = vmatpush.msra.mxu0 0.0
    %2571 = vmatpush.msra.mxu0 0.0
    %2572 = vmatpush.msra.mxu0 0.0
    %2573 = vmatpush.msra.mxu0 %v1241
    %2574 = vmatpush.msra.mxu0 %v1190
    %2575 = vmatpush.msra.mxu0 %v1139
    %2576 = vmatpush.msra.mxu0 %v1088
    %2577 = vmatmul.f32.gmra.mxu0 %v1274
    %v2578 = vpop.f32.mrf.mxu0
    %v2579 = vadd.f32 %v1255, %v2578
    %2580 = vmatmul.f32.gmra.mxu0 %v1277
    %v2581 = vpop.f32.mrf.mxu0
    %v2582 = vadd.f32 %v1260, %v2581
    %2583 = vmatmul.f32.gmra.mxu0 %v1280
    %v2584 = vpop.f32.mrf.mxu0
    %v2585 = vadd.f32 %v1265, %v2584
    %2586 = vmatmul.f32.gmra.mxu0 %v1283
    %v2587 = vpop.f32.mrf.mxu0
    %v2588 = vadd.f32 %v1270, %v2587
    %2589 = vdwg.mxu0
    %2590 = vmatpush.msra.mxu0 0.0
    %2591 = vmatpush.msra.mxu0 0.0
    %2592 = vmatpush.msra.mxu0 0.0
    %2593 = vmatpush.msra.mxu0 0.0
    %2594 = vmatpush.msra.mxu0 0.0
    %2595 = vmatpush.msra.mxu0 0.0
    %2596 = vmatpush.msra.mxu0 0.0
    %2597 = vmatpush.msra.mxu0 0.0
    %2598 = vmatpush.msra.mxu0 0.0
    %2599 = vmatpush.msra.mxu0 0.0
    %2600 = vmatpush.msra.mxu0 0.0
    %2601 = vmatpush.msra.mxu0 0.0
    %2602 = vmatpush.msra.mxu0 %v1242
    %2603 = vmatpush.msra.mxu0 %v1191
    %2604 = vmatpush.msra.mxu0 %v1140
    %2605 = vmatpush.msra.mxu0 %v1089
    %2606 = vmatmul.f32.gmra.mxu0 %v1274
    %v2607 = vpop.f32.mrf.mxu0
    %v2608 = vadd.f32 %v1255, %v2607
    %2609 = vmatmul.f32.gmra.mxu0 %v1277
    %v2610 = vpop.f32.mrf.mxu0
    %v2611 = vadd.f32 %v1260, %v2610
    %2612 = vmatmul.f32.gmra.mxu0 %v1280
    %v2613 = vpop.f32.mrf.mxu0
    %v2614 = vadd.f32 %v1265, %v2613
    %2615 = vmatmul.f32.gmra.mxu0 %v1283
    %v2616 = vpop.f32.mrf.mxu0
    %v2617 = vadd.f32 %v1270, %v2616
    %2618 = vdwg.mxu0
    %2619 = vmatpush.msra.mxu0 0.0
    %2620 = vmatpush.msra.mxu0 0.0
    %2621 = vmatpush.msra.mxu0 0.0
    %2622 = vmatpush.msra.mxu0 0.0
    %2623 = vmatpush.msra.mxu0 0.0
    %2624 = vmatpush.msra.mxu0 0.0
    %2625 = vmatpush.msra.mxu0 0.0
    %2626 = vmatpush.msra.mxu0 0.0
    %2627 = vmatpush.msra.mxu0 0.0
    %2628 = vmatpush.msra.mxu0 0.0
    %2629 = vmatpush.msra.mxu0 0.0
    %2630 = vmatpush.msra.mxu0 0.0
    %2631 = vmatpush.msra.mxu0 %v1243
    %2632 = vmatpush.msra.mxu0 %v1192
    %2633 = vmatpush.msra.mxu0 %v1141
    %2634 = vmatpush.msra.mxu0 %v1090
    %2635 = vmatmul.f32.gmra.mxu0 %v1274
    %v2636 = vpop.f32.mrf.mxu0
    %v2637 = vadd.f32 %v1255, %v2636
    %2638 = vmatmul.f32.gmra.mxu0 %v1277
    %v2639 = vpop.f32.mrf.mxu0
    %v2640 = vadd.f32 %v1260, %v2639
    %2641 = vmatmul.f32.gmra.mxu0 %v1280
    %v2642 = vpop.f32.mrf.mxu0
    %v2643 = vadd.f32 %v1265, %v2642
    %2644 = vmatmul.f32.gmra.mxu0 %v1283
    %v2645 = vpop.f32.mrf.mxu0
    %v2646 = vadd.f32 %v1270, %v2645
    %2647 = vdwg.mxu0
    %2648 = vmatpush.msra.mxu0 0.0
    %2649 = vmatpush.msra.mxu0 0.0
    %2650 = vmatpush.msra.mxu0 0.0
    %2651 = vmatpush.msra.mxu0 0.0
    %2652 = vmatpush.msra.mxu0 0.0
    %2653 = vmatpush.msra.mxu0 0.0
    %2654 = vmatpush.msra.mxu0 0.0
    %2655 = vmatpush.msra.mxu0 0.0
    %2656 = vmatpush.msra.mxu0 0.0
    %2657 = vmatpush.msra.mxu0 0.0
    %2658 = vmatpush.msra.mxu0 0.0
    %2659 = vmatpush.msra.mxu0 0.0
    %2660 = vmatpush.msra.mxu0 %v1244
    %2661 = vmatpush.msra.mxu0 %v1193
    %2662 = vmatpush.msra.mxu0 %v1142
    %2663 = vmatpush.msra.mxu0 %v1091
    %2664 = vmatmul.f32.gmra.mxu0 %v1274
    %v2665 = vpop.f32.mrf.mxu0
    %v2666 = vadd.f32 %v1255, %v2665
    %2667 = vmatmul.f32.gmra.mxu0 %v1277
    %v2668 = vpop.f32.mrf.mxu0
    %v2669 = vadd.f32 %v1260, %v2668
    %2670 = vmatmul.f32.gmra.mxu0 %v1280
    %v2671 = vpop.f32.mrf.mxu0
    %v2672 = vadd.f32 %v1265, %v2671
    %2673 = vmatmul.f32.gmra.mxu0 %v1283
    %v2674 = vpop.f32.mrf.mxu0
    %v2675 = vadd.f32 %v1270, %v2674
    %2676 = vdwg.mxu0
    %2677 = vmatpush.msra.mxu0 0.0
    %2678 = vmatpush.msra.mxu0 0.0
    %2679 = vmatpush.msra.mxu0 0.0
    %2680 = vmatpush.msra.mxu0 0.0
    %2681 = vmatpush.msra.mxu0 0.0
    %2682 = vmatpush.msra.mxu0 0.0
    %2683 = vmatpush.msra.mxu0 0.0
    %2684 = vmatpush.msra.mxu0 0.0
    %2685 = vmatpush.msra.mxu0 0.0
    %2686 = vmatpush.msra.mxu0 0.0
    %2687 = vmatpush.msra.mxu0 0.0
    %2688 = vmatpush.msra.mxu0 0.0
    %2689 = vmatpush.msra.mxu0 %v1245
    %2690 = vmatpush.msra.mxu0 %v1194
    %2691 = vmatpush.msra.mxu0 %v1143
    %2692 = vmatpush.msra.mxu0 %v1092
    %2693 = vmatmul.f32.gmra.mxu0 %v1274
    %v2694 = vpop.f32.mrf.mxu0
    %v2695 = vadd.f32 %v1255, %v2694
    %2696 = vmatmul.f32.gmra.mxu0 %v1277
    %v2697 = vpop.f32.mrf.mxu0
    %v2698 = vadd.f32 %v1260, %v2697
    %2699 = vmatmul.f32.gmra.mxu0 %v1280
    %v2700 = vpop.f32.mrf.mxu0
    %v2701 = vadd.f32 %v1265, %v2700
    %2702 = vmatmul.f32.gmra.mxu0 %v1283
    %v2703 = vpop.f32.mrf.mxu0
    %v2704 = vadd.f32 %v1270, %v2703
    %2705 = vdwg.mxu0
    %2706 = vmatpush.msra.mxu0 0.0
    %2707 = vmatpush.msra.mxu0 0.0
    %2708 = vmatpush.msra.mxu0 0.0
    %2709 = vmatpush.msra.mxu0 0.0
    %2710 = vmatpush.msra.mxu0 0.0
    %2711 = vmatpush.msra.mxu0 0.0
    %2712 = vmatpush.msra.mxu0 0.0
    %2713 = vmatpush.msra.mxu0 0.0
    %2714 = vmatpush.msra.mxu0 0.0
    %2715 = vmatpush.msra.mxu0 0.0
    %2716 = vmatpush.msra.mxu0 0.0
    %2717 = vmatpush.msra.mxu0 0.0
    %2718 = vmatpush.msra.mxu0 %v1246
    %2719 = vmatpush.msra.mxu0 %v1195
    %2720 = vmatpush.msra.mxu0 %v1144
    %2721 = vmatpush.msra.mxu0 %v1093
    %2722 = vmatmul.f32.gmra.mxu0 %v1274
    %v2723 = vpop.f32.mrf.mxu0
    %v2724 = vadd.f32 %v1255, %v2723
    %2725 = vmatmul.f32.gmra.mxu0 %v1277
    %v2726 = vpop.f32.mrf.mxu0
    %v2727 = vadd.f32 %v1260, %v2726
    %2728 = vmatmul.f32.gmra.mxu0 %v1280
    %v2729 = vpop.f32.mrf.mxu0
    %v2730 = vadd.f32 %v1265, %v2729
    %2731 = vmatmul.f32.gmra.mxu0 %v1283
    %v2732 = vpop.f32.mrf.mxu0
    %v2733 = vadd.f32 %v1270, %v2732
    %2734 = vdwg.mxu0
    %2735 = vmatpush.msra.mxu0 0.0
    %2736 = vmatpush.msra.mxu0 0.0
    %2737 = vmatpush.msra.mxu0 0.0
    %2738 = vmatpush.msra.mxu0 0.0
    %2739 = vmatpush.msra.mxu0 0.0
    %2740 = vmatpush.msra.mxu0 0.0
    %2741 = vmatpush.msra.mxu0 0.0
    %2742 = vmatpush.msra.mxu0 0.0
    %2743 = vmatpush.msra.mxu0 0.0
    %2744 = vmatpush.msra.mxu0 0.0
    %2745 = vmatpush.msra.mxu0 0.0
    %2746 = vmatpush.msra.mxu0 0.0
    %2747 = vmatpush.msra.mxu0 %v1247
    %2748 = vmatpush.msra.mxu0 %v1196
    %2749 = vmatpush.msra.mxu0 %v1145
    %2750 = vmatpush.msra.mxu0 %v1094
    %2751 = vmatmul.f32.gmra.mxu0 %v1274
    %v2752 = vpop.f32.mrf.mxu0
    %v2753 = vadd.f32 %v1255, %v2752
    %2754 = vmatmul.f32.gmra.mxu0 %v1277
    %v2755 = vpop.f32.mrf.mxu0
    %v2756 = vadd.f32 %v1260, %v2755
    %2757 = vmatmul.f32.gmra.mxu0 %v1280
    %v2758 = vpop.f32.mrf.mxu0
    %v2759 = vadd.f32 %v1265, %v2758
    %2760 = vmatmul.f32.gmra.mxu0 %v1283
    %v2761 = vpop.f32.mrf.mxu0
    %v2762 = vadd.f32 %v1270, %v2761
    %2763 = vdwg.mxu0
    %v2764 = vmax.f32 %v1303, 0.0
    %v2765 = vmax.f32 %v1332, 0.0
    %v2766 = vmax.f32 %v1361, 0.0
    %v2767 = vmax.f32 %v1390, 0.0
    %v2768 = vmax.f32 %v1419, 0.0
    %v2769 = vmax.f32 %v1448, 0.0
    %v2770 = vmax.f32 %v1477, 0.0
    %v2771 = vmax.f32 %v1506, 0.0
    %v2772 = vmax.f32 %v1535, 0.0
    %v2773 = vmax.f32 %v1564, 0.0
    %v2774 = vmax.f32 %v1593, 0.0
    %v2775 = vmax.f32 %v1622, 0.0
    %v2776 = vmax.f32 %v1651, 0.0
    %v2777 = vmax.f32 %v1680, 0.0
    %v2778 = vmax.f32 %v1709, 0.0
    %v2779 = vmax.f32 %v1738, 0.0
    %v2780 = vmax.f32 %v1767, 0.0
    %v2781 = vmax.f32 %v1796, 0.0
    %v2782 = vmax.f32 %v1825, 0.0
    %v2783 = vmax.f32 %v1854, 0.0
    %v2784 = vmax.f32 %v1883, 0.0
    %v2785 = vmax.f32 %v1912, 0.0
    %v2786 = vmax.f32 %v1941, 0.0
    %v2787 = vmax.f32 %v1970, 0.0
    %v2788 = vmax.f32 %v1999, 0.0
    %v2789 = vmax.f32 %v2028, 0.0
    %v2790 = vmax.f32 %v2057, 0.0
    %v2791 = vmax.f32 %v2086, 0.0
    %v2792 = vmax.f32 %v2115, 0.0
    %v2793 = vmax.f32 %v2144, 0.0
    %v2794 = vmax.f32 %v2173, 0.0
    %v2795 = vmax.f32 %v2202, 0.0
    %v2796 = vmax.f32 %v2231, 0.0
    %v2797 = vmax.f32 %v2260, 0.0
    %v2798 = vmax.f32 %v2289, 0.0
    %v2799 = vmax.f32 %v2318, 0.0
    %v2800 = vmax.f32 %v2347, 0.0
    %v2801 = vmax.f32 %v2376, 0.0
    %v2802 = vmax.f32 %v2405, 0.0
    %v2803 = vmax.f32 %v2434, 0.0
    %v2804 = vmax.f32 %v2463, 0.0
    %v2805 = vmax.f32 %v2492, 0.0
    %v2806 = vmax.f32 %v2521, 0.0
    %v2807 = vmax.f32 %v2550, 0.0
    %v2808 = vmax.f32 %v2579, 0.0
    %v2809 = vmax.f32 %v2608, 0.0
    %v2810 = vmax.f32 %v2637, 0.0
    %v2811 = vmax.f32 %v2666, 0.0
    %v2812 = vmax.f32 %v2695, 0.0
    %v2813 = vmax.f32 %v2724, 0.0
    %v2814 = vmax.f32 %v2753, 0.0
    %v2815 = vmax.f32 %v1306, 0.0
    %v2816 = vmax.f32 %v1335, 0.0
    %v2817 = vmax.f32 %v1364, 0.0
    %v2818 = vmax.f32 %v1393, 0.0
    %v2819 = vmax.f32 %v1422, 0.0
    %v2820 = vmax.f32 %v1451, 0.0
    %v2821 = vmax.f32 %v1480, 0.0
    %v2822 = vmax.f32 %v1509, 0.0
    %v2823 = vmax.f32 %v1538, 0.0
    %v2824 = vmax.f32 %v1567, 0.0
    %v2825 = vmax.f32 %v1596, 0.0
    %v2826 = vmax.f32 %v1625, 0.0
    %v2827 = vmax.f32 %v1654, 0.0
    %v2828 = vmax.f32 %v1683, 0.0
    %v2829 = vmax.f32 %v1712, 0.0
    %v2830 = vmax.f32 %v1741, 0.0
    %v2831 = vmax.f32 %v1770, 0.0
    %v2832 = vmax.f32 %v1799, 0.0
    %v2833 = vmax.f32 %v1828, 0.0
    %v2834 = vmax.f32 %v1857, 0.0
    %v2835 = vmax.f32 %v1886, 0.0
    %v2836 = vmax.f32 %v1915, 0.0
    %v2837 = vmax.f32 %v1944, 0.0
    %v2838 = vmax.f32 %v1973, 0.0
    %v2839 = vmax.f32 %v2002, 0.0
    %v2840 = vmax.f32 %v2031, 0.0
    %v2841 = vmax.f32 %v2060, 0.0
    %v2842 = vmax.f32 %v2089, 0.0
    %v2843 = vmax.f32 %v2118, 0.0
    %v2844 = vmax.f32 %v2147, 0.0
    %v2845 = vmax.f32 %v2176, 0.0
    %v2846 = vmax.f32 %v2205, 0.0
    %v2847 = vmax.f32 %v2234, 0.0
    %v2848 = vmax.f32 %v2263, 0.0
    %v2849 = vmax.f32 %v2292, 0.0
    %v2850 = vmax.f32 %v2321, 0.0
    %v2851 = vmax.f32 %v2350, 0.0
    %v2852 = vmax.f32 %v2379, 0.0
    %v2853 = vmax.f32 %v2408, 0.0
    %v2854 = vmax.f32 %v2437, 0.0
    %v2855 = vmax.f32 %v2466, 0.0
    %v2856 = vmax.f32 %v2495, 0.0
    %v2857 = vmax.f32 %v2524, 0.0
    %v2858 = vmax.f32 %v2553, 0.0
    %v2859 = vmax.f32 %v2582, 0.0
    %v2860 = vmax.f32 %v2611, 0.0
    %v2861 = vmax.f32 %v2640, 0.0
    %v2862 = vmax.f32 %v2669, 0.0
    %v2863 = vmax.f32 %v2698, 0.0
    %v2864 = vmax.f32 %v2727, 0.0
    %v2865 = vmax.f32 %v2756, 0.0
    %v2866 = vmax.f32 %v1309, 0.0
    %v2867 = vmax.f32 %v1338, 0.0
    %v2868 = vmax.f32 %v1367, 0.0
    %v2869 = vmax.f32 %v1396, 0.0
    %v2870 = vmax.f32 %v1425, 0.0
    %v2871 = vmax.f32 %v1454, 0.0
    %v2872 = vmax.f32 %v1483, 0.0
    %v2873 = vmax.f32 %v1512, 0.0
    %v2874 = vmax.f32 %v1541, 0.0
    %v2875 = vmax.f32 %v1570, 0.0
    %v2876 = vmax.f32 %v1599, 0.0
    %v2877 = vmax.f32 %v1628, 0.0
    %v2878 = vmax.f32 %v1657, 0.0
    %v2879 = vmax.f32 %v1686, 0.0
    %v2880 = vmax.f32 %v1715, 0.0
    %v2881 = vmax.f32 %v1744, 0.0
    %v2882 = vmax.f32 %v1773, 0.0
    %v2883 = vmax.f32 %v1802, 0.0
    %v2884 = vmax.f32 %v1831, 0.0
    %v2885 = vmax.f32 %v1860, 0.0
    %v2886 = vmax.f32 %v1889, 0.0
    %v2887 = vmax.f32 %v1918, 0.0
    %v2888 = vmax.f32 %v1947, 0.0
    %v2889 = vmax.f32 %v1976, 0.0
    %v2890 = vmax.f32 %v2005, 0.0
    %v2891 = vmax.f32 %v2034, 0.0
    %v2892 = vmax.f32 %v2063, 0.0
    %v2893 = vmax.f32 %v2092, 0.0
    %v2894 = vmax.f32 %v2121, 0.0
    %v2895 = vmax.f32 %v2150, 0.0
    %v2896 = vmax.f32 %v2179, 0.0
    %v2897 = vmax.f32 %v2208, 0.0
    %v2898 = vmax.f32 %v2237, 0.0
    %v2899 = vmax.f32 %v2266, 0.0
    %v2900 = vmax.f32 %v2295, 0.0
    %v2901 = vmax.f32 %v2324, 0.0
    %v2902 = vmax.f32 %v2353, 0.0
    %v2903 = vmax.f32 %v2382, 0.0
    %v2904 = vmax.f32 %v2411, 0.0
    %v2905 = vmax.f32 %v2440, 0.0
    %v2906 = vmax.f32 %v2469, 0.0
    %v2907 = vmax.f32 %v2498, 0.0
    %v2908 = vmax.f32 %v2527, 0.0
    %v2909 = vmax.f32 %v2556, 0.0
    %v2910 = vmax.f32 %v2585, 0.0
    %v2911 = vmax.f32 %v2614, 0.0
    %v2912 = vmax.f32 %v2643, 0.0
    %v2913 = vmax.f32 %v2672, 0.0
    %v2914 = vmax.f32 %v2701, 0.0
    %v2915 = vmax.f32 %v2730, 0.0
    %v2916 = vmax.f32 %v2759, 0.0
    %v2917 = vmax.f32 %v1312, 0.0
    %v2918 = vmax.f32 %v1341, 0.0
    %v2919 = vmax.f32 %v1370, 0.0
    %v2920 = vmax.f32 %v1399, 0.0
    %v2921 = vmax.f32 %v1428, 0.0
    %v2922 = vmax.f32 %v1457, 0.0
    %v2923 = vmax.f32 %v1486, 0.0
    %v2924 = vmax.f32 %v1515, 0.0
    %v2925 = vmax.f32 %v1544, 0.0
    %v2926 = vmax.f32 %v1573, 0.0
    %v2927 = vmax.f32 %v1602, 0.0
    %v2928 = vmax.f32 %v1631, 0.0
    %v2929 = vmax.f32 %v1660, 0.0
    %v2930 = vmax.f32 %v1689, 0.0
    %v2931 = vmax.f32 %v1718, 0.0
    %v2932 = vmax.f32 %v1747, 0.0
    %v2933 = vmax.f32 %v1776, 0.0
    %v2934 = vmax.f32 %v1805, 0.0
    %v2935 = vmax.f32 %v1834, 0.0
    %v2936 = vmax.f32 %v1863, 0.0
    %v2937 = vmax.f32 %v1892, 0.0
    %v2938 = vmax.f32 %v1921, 0.0
    %v2939 = vmax.f32 %v1950, 0.0
    %v2940 = vmax.f32 %v1979, 0.0
    %v2941 = vmax.f32 %v2008, 0.0
    %v2942 = vmax.f32 %v2037, 0.0
    %v2943 = vmax.f32 %v2066, 0.0
    %v2944 = vmax.f32 %v2095, 0.0
    %v2945 = vmax.f32 %v2124, 0.0
    %v2946 = vmax.f32 %v2153, 0.0
    %v2947 = vmax.f32 %v2182, 0.0
    %v2948 = vmax.f32 %v2211, 0.0
    %v2949 = vmax.f32 %v2240, 0.0
    %v2950 = vmax.f32 %v2269, 0.0
    %v2951 = vmax.f32 %v2298, 0.0
    %v2952 = vmax.f32 %v2327, 0.0
    %v2953 = vmax.f32 %v2356, 0.0
    %v2954 = vmax.f32 %v2385, 0.0
    %v2955 = vmax.f32 %v2414, 0.0
    %v2956 = vmax.f32 %v2443, 0.0
    %v2957 = vmax.f32 %v2472, 0.0
    %v2958 = vmax.f32 %v2501, 0.0
    %v2959 = vmax.f32 %v2530, 0.0
    %v2960 = vmax.f32 %v2559, 0.0
    %v2961 = vmax.f32 %v2588, 0.0
    %v2962 = vmax.f32 %v2617, 0.0
    %v2963 = vmax.f32 %v2646, 0.0
    %v2964 = vmax.f32 %v2675, 0.0
    %v2965 = vmax.f32 %v2704, 0.0
    %v2966 = vmax.f32 %v2733, 0.0
    %v2967 = vmax.f32 %v2762, 0.0
    %v2968 = vld [vmem:[%s7] sm:$0x1]
    %v2969 = vstv %s44
    %v2971 = vsel %vm1272, %v2968, 0
    %2973 = vmatpush.msra.mxu0 0.0
    %2974 = vmatpush.msra.mxu0 0.0
    %2975 = vmatpush.msra.mxu0 0.0
    %2976 = vmatpush.msra.mxu0 0.0
    %2977 = vmatpush.msra.mxu0 0.0
    %2978 = vmatpush.msra.mxu0 0.0
    %2979 = vmatpush.msra.mxu0 0.0
    %2980 = vmatpush.msra.mxu0 0.0
    %2981 = vmatpush.msra.mxu0 0.0
    %2982 = vmatpush.msra.mxu0 0.0
    %2983 = vmatpush.msra.mxu0 0.0
    %2984 = vmatpush.msra.mxu0 0.0
    %2985 = vmatpush.msra.mxu0 %v2917
    %2986 = vmatpush.msra.mxu0 %v2866
    %2987 = vmatpush.msra.mxu0 %v2815
    %2988 = vmatpush.msra.mxu0 %v2764
    %2989 = vmatmul.f32.gmra.mxu0 %v2971
    %v2990 = vpop.f32.mrf.mxu0
    %v2991 = vadd.f32 %v2969, %v2990
    %2992 = vdwg.mxu0
    %2993 = vmatpush.msra.mxu0 0.0
    %2994 = vmatpush.msra.mxu0 0.0
    %2995 = vmatpush.msra.mxu0 0.0
    %2996 = vmatpush.msra.mxu0 0.0
    %2997 = vmatpush.msra.mxu0 0.0
    %2998 = vmatpush.msra.mxu0 0.0
    %2999 = vmatpush.msra.mxu0 0.0
    %3000 = vmatpush.msra.mxu0 0.0
    %3001 = vmatpush.msra.mxu0 0.0
    %3002 = vmatpush.msra.mxu0 0.0
    %3003 = vmatpush.msra.mxu0 0.0
    %3004 = vmatpush.msra.mxu0 0.0
    %3005 = vmatpush.msra.mxu0 %v2918
    %3006 = vmatpush.msra.mxu0 %v2867
    %3007 = vmatpush.msra.mxu0 %v2816
    %3008 = vmatpush.msra.mxu0 %v2765
    %3009 = vmatmul.f32.gmra.mxu0 %v2971
    %v3010 = vpop.f32.mrf.mxu0
    %v3011 = vadd.f32 %v2969, %v3010
    %3012 = vdwg.mxu0
    %3013 = vmatpush.msra.mxu0 0.0
    %3014 = vmatpush.msra.mxu0 0.0
    %3015 = vmatpush.msra.mxu0 0.0
    %3016 = vmatpush.msra.mxu0 0.0
    %3017 = vmatpush.msra.mxu0 0.0
    %3018 = vmatpush.msra.mxu0 0.0
    %3019 = vmatpush.msra.mxu0 0.0
    %3020 = vmatpush.msra.mxu0 0.0
    %3021 = vmatpush.msra.mxu0 0.0
    %3022 = vmatpush.msra.mxu0 0.0
    %3023 = vmatpush.msra.mxu0 0.0
    %3024 = vmatpush.msra.mxu0 0.0
    %3025 = vmatpush.msra.mxu0 %v2919
    %3026 = vmatpush.msra.mxu0 %v2868
    %3027 = vmatpush.msra.mxu0 %v2817
    %3028 = vmatpush.msra.mxu0 %v2766
    %3029 = vmatmul.f32.gmra.mxu0 %v2971
    %v3030 = vpop.f32.mrf.mxu0
    %v3031 = vadd.f32 %v2969, %v3030
    %3032 = vdwg.mxu0
    %3033 = vmatpush.msra.mxu0 0.0
    %3034 = vmatpush.msra.mxu0 0.0
    %3035 = vmatpush.msra.mxu0 0.0
    %3036 = vmatpush.msra.mxu0 0.0
    %3037 = vmatpush.msra.mxu0 0.0
    %3038 = vmatpush.msra.mxu0 0.0
    %3039 = vmatpush.msra.mxu0 0.0
    %3040 = vmatpush.msra.mxu0 0.0
    %3041 = vmatpush.msra.mxu0 0.0
    %3042 = vmatpush.msra.mxu0 0.0
    %3043 = vmatpush.msra.mxu0 0.0
    %3044 = vmatpush.msra.mxu0 0.0
    %3045 = vmatpush.msra.mxu0 %v2920
    %3046 = vmatpush.msra.mxu0 %v2869
    %3047 = vmatpush.msra.mxu0 %v2818
    %3048 = vmatpush.msra.mxu0 %v2767
    %3049 = vmatmul.f32.gmra.mxu0 %v2971
    %v3050 = vpop.f32.mrf.mxu0
    %v3051 = vadd.f32 %v2969, %v3050
    %3052 = vdwg.mxu0
    %3053 = vmatpush.msra.mxu0 0.0
    %3054 = vmatpush.msra.mxu0 0.0
    %3055 = vmatpush.msra.mxu0 0.0
    %3056 = vmatpush.msra.mxu0 0.0
    %3057 = vmatpush.msra.mxu0 0.0
    %3058 = vmatpush.msra.mxu0 0.0
    %3059 = vmatpush.msra.mxu0 0.0
    %3060 = vmatpush.msra.mxu0 0.0
    %3061 = vmatpush.msra.mxu0 0.0
    %3062 = vmatpush.msra.mxu0 0.0
    %3063 = vmatpush.msra.mxu0 0.0
    %3064 = vmatpush.msra.mxu0 0.0
    %3065 = vmatpush.msra.mxu0 %v2921
    %3066 = vmatpush.msra.mxu0 %v2870
    %3067 = vmatpush.msra.mxu0 %v2819
    %3068 = vmatpush.msra.mxu0 %v2768
    %3069 = vmatmul.f32.gmra.mxu0 %v2971
    %v3070 = vpop.f32.mrf.mxu0
    %v3071 = vadd.f32 %v2969, %v3070
    %3072 = vdwg.mxu0
    %3073 = vmatpush.msra.mxu0 0.0
    %3074 = vmatpush.msra.mxu0 0.0
    %3075 = vmatpush.msra.mxu0 0.0
    %3076 = vmatpush.msra.mxu0 0.0
    %3077 = vmatpush.msra.mxu0 0.0
    %3078 = vmatpush.msra.mxu0 0.0
    %3079 = vmatpush.msra.mxu0 0.0
    %3080 = vmatpush.msra.mxu0 0.0
    %3081 = vmatpush.msra.mxu0 0.0
    %3082 = vmatpush.msra.mxu0 0.0
    %3083 = vmatpush.msra.mxu0 0.0
    %3084 = vmatpush.msra.mxu0 0.0
    %3085 = vmatpush.msra.mxu0 %v2922
    %3086 = vmatpush.msra.mxu0 %v2871
    %3087 = vmatpush.msra.mxu0 %v2820
    %3088 = vmatpush.msra.mxu0 %v2769
    %3089 = vmatmul.f32.gmra.mxu0 %v2971
    %v3090 = vpop.f32.mrf.mxu0
    %v3091 = vadd.f32 %v2969, %v3090
    %3092 = vdwg.mxu0
    %3093 = vmatpush.msra.mxu0 0.0
    %3094 = vmatpush.msra.mxu0 0.0
    %3095 = vmatpush.msra.mxu0 0.0
    %3096 = vmatpush.msra.mxu0 0.0
    %3097 = vmatpush.msra.mxu0 0.0
    %3098 = vmatpush.msra.mxu0 0.0
    %3099 = vmatpush.msra.mxu0 0.0
    %3100 = vmatpush.msra.mxu0 0.0
    %3101 = vmatpush.msra.mxu0 0.0
    %3102 = vmatpush.msra.mxu0 0.0
    %3103 = vmatpush.msra.mxu0 0.0
    %3104 = vmatpush.msra.mxu0 0.0
    %3105 = vmatpush.msra.mxu0 %v2923
    %3106 = vmatpush.msra.mxu0 %v2872
    %3107 = vmatpush.msra.mxu0 %v2821
    %3108 = vmatpush.msra.mxu0 %v2770
    %3109 = vmatmul.f32.gmra.mxu0 %v2971
    %v3110 = vpop.f32.mrf.mxu0
    %v3111 = vadd.f32 %v2969, %v3110
    %3112 = vdwg.mxu0
    %3113 = vmatpush.msra.mxu0 0.0
    %3114 = vmatpush.msra.mxu0 0.0
    %3115 = vmatpush.msra.mxu0 0.0
    %3116 = vmatpush.msra.mxu0 0.0
    %3117 = vmatpush.msra.mxu0 0.0
    %3118 = vmatpush.msra.mxu0 0.0
    %3119 = vmatpush.msra.mxu0 0.0
    %3120 = vmatpush.msra.mxu0 0.0
    %3121 = vmatpush.msra.mxu0 0.0
    %3122 = vmatpush.msra.mxu0 0.0
    %3123 = vmatpush.msra.mxu0 0.0
    %3124 = vmatpush.msra.mxu0 0.0
    %3125 = vmatpush.msra.mxu0 %v2924
    %3126 = vmatpush.msra.mxu0 %v2873
    %3127 = vmatpush.msra.mxu0 %v2822
    %3128 = vmatpush.msra.mxu0 %v2771
    %3129 = vmatmul.f32.gmra.mxu0 %v2971
    %v3130 = vpop.f32.mrf.mxu0
    %v3131 = vadd.f32 %v2969, %v3130
    %3132 = vdwg.mxu0
    %3133 = vmatpush.msra.mxu0 0.0
    %3134 = vmatpush.msra.mxu0 0.0
    %3135 = vmatpush.msra.mxu0 0.0
    %3136 = vmatpush.msra.mxu0 0.0
    %3137 = vmatpush.msra.mxu0 0.0
    %3138 = vmatpush.msra.mxu0 0.0
    %3139 = vmatpush.msra.mxu0 0.0
    %3140 = vmatpush.msra.mxu0 0.0
    %3141 = vmatpush.msra.mxu0 0.0
    %3142 = vmatpush.msra.mxu0 0.0
    %3143 = vmatpush.msra.mxu0 0.0
    %3144 = vmatpush.msra.mxu0 0.0
    %3145 = vmatpush.msra.mxu0 %v2925
    %3146 = vmatpush.msra.mxu0 %v2874
    %3147 = vmatpush.msra.mxu0 %v2823
    %3148 = vmatpush.msra.mxu0 %v2772
    %3149 = vmatmul.f32.gmra.mxu0 %v2971
    %v3150 = vpop.f32.mrf.mxu0
    %v3151 = vadd.f32 %v2969, %v3150
    %3152 = vdwg.mxu0
    %3153 = vmatpush.msra.mxu0 0.0
    %3154 = vmatpush.msra.mxu0 0.0
    %3155 = vmatpush.msra.mxu0 0.0
    %3156 = vmatpush.msra.mxu0 0.0
    %3157 = vmatpush.msra.mxu0 0.0
    %3158 = vmatpush.msra.mxu0 0.0
    %3159 = vmatpush.msra.mxu0 0.0
    %3160 = vmatpush.msra.mxu0 0.0
    %3161 = vmatpush.msra.mxu0 0.0
    %3162 = vmatpush.msra.mxu0 0.0
    %3163 = vmatpush.msra.mxu0 0.0
    %3164 = vmatpush.msra.mxu0 0.0
    %3165 = vmatpush.msra.mxu0 %v2926
    %3166 = vmatpush.msra.mxu0 %v2875
    %3167 = vmatpush.msra.mxu0 %v2824
    %3168 = vmatpush.msra.mxu0 %v2773
    %3169 = vmatmul.f32.gmra.mxu0 %v2971
    %v3170 = vpop.f32.mrf.mxu0
    %v3171 = vadd.f32 %v2969, %v3170
    %3172 = vdwg.mxu0
    %3173 = vmatpush.msra.mxu0 0.0
    %3174 = vmatpush.msra.mxu0 0.0
    %3175 = vmatpush.msra.mxu0 0.0
    %3176 = vmatpush.msra.mxu0 0.0
    %3177 = vmatpush.msra.mxu0 0.0
    %3178 = vmatpush.msra.mxu0 0.0
    %3179 = vmatpush.msra.mxu0 0.0
    %3180 = vmatpush.msra.mxu0 0.0
    %3181 = vmatpush.msra.mxu0 0.0
    %3182 = vmatpush.msra.mxu0 0.0
    %3183 = vmatpush.msra.mxu0 0.0
    %3184 = vmatpush.msra.mxu0 0.0
    %3185 = vmatpush.msra.mxu0 %v2927
    %3186 = vmatpush.msra.mxu0 %v2876
    %3187 = vmatpush.msra.mxu0 %v2825
    %3188 = vmatpush.msra.mxu0 %v2774
    %3189 = vmatmul.f32.gmra.mxu0 %v2971
    %v3190 = vpop.f32.mrf.mxu0
    %v3191 = vadd.f32 %v2969, %v3190
    %3192 = vdwg.mxu0
    %3193 = vmatpush.msra.mxu0 0.0
    %3194 = vmatpush.msra.mxu0 0.0
    %3195 = vmatpush.msra.mxu0 0.0
    %3196 = vmatpush.msra.mxu0 0.0
    %3197 = vmatpush.msra.mxu0 0.0
    %3198 = vmatpush.msra.mxu0 0.0
    %3199 = vmatpush.msra.mxu0 0.0
    %3200 = vmatpush.msra.mxu0 0.0
    %3201 = vmatpush.msra.mxu0 0.0
    %3202 = vmatpush.msra.mxu0 0.0
    %3203 = vmatpush.msra.mxu0 0.0
    %3204 = vmatpush.msra.mxu0 0.0
    %3205 = vmatpush.msra.mxu0 %v2928
    %3206 = vmatpush.msra.mxu0 %v2877
    %3207 = vmatpush.msra.mxu0 %v2826
    %3208 = vmatpush.msra.mxu0 %v2775
    %3209 = vmatmul.f32.gmra.mxu0 %v2971
    %v3210 = vpop.f32.mrf.mxu0
    %v3211 = vadd.f32 %v2969, %v3210
    %3212 = vdwg.mxu0
    %3213 = vmatpush.msra.mxu0 0.0
    %3214 = vmatpush.msra.mxu0 0.0
    %3215 = vmatpush.msra.mxu0 0.0
    %3216 = vmatpush.msra.mxu0 0.0
    %3217 = vmatpush.msra.mxu0 0.0
    %3218 = vmatpush.msra.mxu0 0.0
    %3219 = vmatpush.msra.mxu0 0.0
    %3220 = vmatpush.msra.mxu0 0.0
    %3221 = vmatpush.msra.mxu0 0.0
    %3222 = vmatpush.msra.mxu0 0.0
    %3223 = vmatpush.msra.mxu0 0.0
    %3224 = vmatpush.msra.mxu0 0.0
    %3225 = vmatpush.msra.mxu0 %v2929
    %3226 = vmatpush.msra.mxu0 %v2878
    %3227 = vmatpush.msra.mxu0 %v2827
    %3228 = vmatpush.msra.mxu0 %v2776
    %3229 = vmatmul.f32.gmra.mxu0 %v2971
    %v3230 = vpop.f32.mrf.mxu0
    %v3231 = vadd.f32 %v2969, %v3230
    %3232 = vdwg.mxu0
    %3233 = vmatpush.msra.mxu0 0.0
    %3234 = vmatpush.msra.mxu0 0.0
    %3235 = vmatpush.msra.mxu0 0.0
    %3236 = vmatpush.msra.mxu0 0.0
    %3237 = vmatpush.msra.mxu0 0.0
    %3238 = vmatpush.msra.mxu0 0.0
    %3239 = vmatpush.msra.mxu0 0.0
    %3240 = vmatpush.msra.mxu0 0.0
    %3241 = vmatpush.msra.mxu0 0.0
    %3242 = vmatpush.msra.mxu0 0.0
    %3243 = vmatpush.msra.mxu0 0.0
    %3244 = vmatpush.msra.mxu0 0.0
    %3245 = vmatpush.msra.mxu0 %v2930
    %3246 = vmatpush.msra.mxu0 %v2879
    %3247 = vmatpush.msra.mxu0 %v2828
    %3248 = vmatpush.msra.mxu0 %v2777
    %3249 = vmatmul.f32.gmra.mxu0 %v2971
    %v3250 = vpop.f32.mrf.mxu0
    %v3251 = vadd.f32 %v2969, %v3250
    %3252 = vdwg.mxu0
    %3253 = vmatpush.msra.mxu0 0.0
    %3254 = vmatpush.msra.mxu0 0.0
    %3255 = vmatpush.msra.mxu0 0.0
    %3256 = vmatpush.msra.mxu0 0.0
    %3257 = vmatpush.msra.mxu0 0.0
    %3258 = vmatpush.msra.mxu0 0.0
    %3259 = vmatpush.msra.mxu0 0.0
    %3260 = vmatpush.msra.mxu0 0.0
    %3261 = vmatpush.msra.mxu0 0.0
    %3262 = vmatpush.msra.mxu0 0.0
    %3263 = vmatpush.msra.mxu0 0.0
    %3264 = vmatpush.msra.mxu0 0.0
    %3265 = vmatpush.msra.mxu0 %v2931
    %3266 = vmatpush.msra.mxu0 %v2880
    %3267 = vmatpush.msra.mxu0 %v2829
    %3268 = vmatpush.msra.mxu0 %v2778
    %3269 = vmatmul.f32.gmra.mxu0 %v2971
    %v3270 = vpop.f32.mrf.mxu0
    %v3271 = vadd.f32 %v2969, %v3270
    %3272 = vdwg.mxu0
    %3273 = vmatpush.msra.mxu0 0.0
    %3274 = vmatpush.msra.mxu0 0.0
    %3275 = vmatpush.msra.mxu0 0.0
    %3276 = vmatpush.msra.mxu0 0.0
    %3277 = vmatpush.msra.mxu0 0.0
    %3278 = vmatpush.msra.mxu0 0.0
    %3279 = vmatpush.msra.mxu0 0.0
    %3280 = vmatpush.msra.mxu0 0.0
    %3281 = vmatpush.msra.mxu0 0.0
    %3282 = vmatpush.msra.mxu0 0.0
    %3283 = vmatpush.msra.mxu0 0.0
    %3284 = vmatpush.msra.mxu0 0.0
    %3285 = vmatpush.msra.mxu0 %v2932
    %3286 = vmatpush.msra.mxu0 %v2881
    %3287 = vmatpush.msra.mxu0 %v2830
    %3288 = vmatpush.msra.mxu0 %v2779
    %3289 = vmatmul.f32.gmra.mxu0 %v2971
    %v3290 = vpop.f32.mrf.mxu0
    %v3291 = vadd.f32 %v2969, %v3290
    %3292 = vdwg.mxu0
    %3293 = vmatpush.msra.mxu0 0.0
    %3294 = vmatpush.msra.mxu0 0.0
    %3295 = vmatpush.msra.mxu0 0.0
    %3296 = vmatpush.msra.mxu0 0.0
    %3297 = vmatpush.msra.mxu0 0.0
    %3298 = vmatpush.msra.mxu0 0.0
    %3299 = vmatpush.msra.mxu0 0.0
    %3300 = vmatpush.msra.mxu0 0.0
    %3301 = vmatpush.msra.mxu0 0.0
    %3302 = vmatpush.msra.mxu0 0.0
    %3303 = vmatpush.msra.mxu0 0.0
    %3304 = vmatpush.msra.mxu0 0.0
    %3305 = vmatpush.msra.mxu0 %v2933
    %3306 = vmatpush.msra.mxu0 %v2882
    %3307 = vmatpush.msra.mxu0 %v2831
    %3308 = vmatpush.msra.mxu0 %v2780
    %3309 = vmatmul.f32.gmra.mxu0 %v2971
    %v3310 = vpop.f32.mrf.mxu0
    %v3311 = vadd.f32 %v2969, %v3310
    %3312 = vdwg.mxu0
    %3313 = vmatpush.msra.mxu0 0.0
    %3314 = vmatpush.msra.mxu0 0.0
    %3315 = vmatpush.msra.mxu0 0.0
    %3316 = vmatpush.msra.mxu0 0.0
    %3317 = vmatpush.msra.mxu0 0.0
    %3318 = vmatpush.msra.mxu0 0.0
    %3319 = vmatpush.msra.mxu0 0.0
    %3320 = vmatpush.msra.mxu0 0.0
    %3321 = vmatpush.msra.mxu0 0.0
    %3322 = vmatpush.msra.mxu0 0.0
    %3323 = vmatpush.msra.mxu0 0.0
    %3324 = vmatpush.msra.mxu0 0.0
    %3325 = vmatpush.msra.mxu0 %v2934
    %3326 = vmatpush.msra.mxu0 %v2883
    %3327 = vmatpush.msra.mxu0 %v2832
    %3328 = vmatpush.msra.mxu0 %v2781
    %3329 = vmatmul.f32.gmra.mxu0 %v2971
    %v3330 = vpop.f32.mrf.mxu0
    %v3331 = vadd.f32 %v2969, %v3330
    %3332 = vdwg.mxu0
    %3333 = vmatpush.msra.mxu0 0.0
    %3334 = vmatpush.msra.mxu0 0.0
    %3335 = vmatpush.msra.mxu0 0.0
    %3336 = vmatpush.msra.mxu0 0.0
    %3337 = vmatpush.msra.mxu0 0.0
    %3338 = vmatpush.msra.mxu0 0.0
    %3339 = vmatpush.msra.mxu0 0.0
    %3340 = vmatpush.msra.mxu0 0.0
    %3341 = vmatpush.msra.mxu0 0.0
    %3342 = vmatpush.msra.mxu0 0.0
    %3343 = vmatpush.msra.mxu0 0.0
    %3344 = vmatpush.msra.mxu0 0.0
    %3345 = vmatpush.msra.mxu0 %v2935
    %3346 = vmatpush.msra.mxu0 %v2884
    %3347 = vmatpush.msra.mxu0 %v2833
    %3348 = vmatpush.msra.mxu0 %v2782
    %3349 = vmatmul.f32.gmra.mxu0 %v2971
    %v3350 = vpop.f32.mrf.mxu0
    %v3351 = vadd.f32 %v2969, %v3350
    %3352 = vdwg.mxu0
    %3353 = vmatpush.msra.mxu0 0.0
    %3354 = vmatpush.msra.mxu0 0.0
    %3355 = vmatpush.msra.mxu0 0.0
    %3356 = vmatpush.msra.mxu0 0.0
    %3357 = vmatpush.msra.mxu0 0.0
    %3358 = vmatpush.msra.mxu0 0.0
    %3359 = vmatpush.msra.mxu0 0.0
    %3360 = vmatpush.msra.mxu0 0.0
    %3361 = vmatpush.msra.mxu0 0.0
    %3362 = vmatpush.msra.mxu0 0.0
    %3363 = vmatpush.msra.mxu0 0.0
    %3364 = vmatpush.msra.mxu0 0.0
    %3365 = vmatpush.msra.mxu0 %v2936
    %3366 = vmatpush.msra.mxu0 %v2885
    %3367 = vmatpush.msra.mxu0 %v2834
    %3368 = vmatpush.msra.mxu0 %v2783
    %3369 = vmatmul.f32.gmra.mxu0 %v2971
    %v3370 = vpop.f32.mrf.mxu0
    %v3371 = vadd.f32 %v2969, %v3370
    %3372 = vdwg.mxu0
    %3373 = vmatpush.msra.mxu0 0.0
    %3374 = vmatpush.msra.mxu0 0.0
    %3375 = vmatpush.msra.mxu0 0.0
    %3376 = vmatpush.msra.mxu0 0.0
    %3377 = vmatpush.msra.mxu0 0.0
    %3378 = vmatpush.msra.mxu0 0.0
    %3379 = vmatpush.msra.mxu0 0.0
    %3380 = vmatpush.msra.mxu0 0.0
    %3381 = vmatpush.msra.mxu0 0.0
    %3382 = vmatpush.msra.mxu0 0.0
    %3383 = vmatpush.msra.mxu0 0.0
    %3384 = vmatpush.msra.mxu0 0.0
    %3385 = vmatpush.msra.mxu0 %v2937
    %3386 = vmatpush.msra.mxu0 %v2886
    %3387 = vmatpush.msra.mxu0 %v2835
    %3388 = vmatpush.msra.mxu0 %v2784
    %3389 = vmatmul.f32.gmra.mxu0 %v2971
    %v3390 = vpop.f32.mrf.mxu0
    %v3391 = vadd.f32 %v2969, %v3390
    %3392 = vdwg.mxu0
    %3393 = vmatpush.msra.mxu0 0.0
    %3394 = vmatpush.msra.mxu0 0.0
    %3395 = vmatpush.msra.mxu0 0.0
    %3396 = vmatpush.msra.mxu0 0.0
    %3397 = vmatpush.msra.mxu0 0.0
    %3398 = vmatpush.msra.mxu0 0.0
    %3399 = vmatpush.msra.mxu0 0.0
    %3400 = vmatpush.msra.mxu0 0.0
    %3401 = vmatpush.msra.mxu0 0.0
    %3402 = vmatpush.msra.mxu0 0.0
    %3403 = vmatpush.msra.mxu0 0.0
    %3404 = vmatpush.msra.mxu0 0.0
    %3405 = vmatpush.msra.mxu0 %v2938
    %3406 = vmatpush.msra.mxu0 %v2887
    %3407 = vmatpush.msra.mxu0 %v2836
    %3408 = vmatpush.msra.mxu0 %v2785
    %3409 = vmatmul.f32.gmra.mxu0 %v2971
    %v3410 = vpop.f32.mrf.mxu0
    %v3411 = vadd.f32 %v2969, %v3410
    %3412 = vdwg.mxu0
    %3413 = vmatpush.msra.mxu0 0.0
    %3414 = vmatpush.msra.mxu0 0.0
    %3415 = vmatpush.msra.mxu0 0.0
    %3416 = vmatpush.msra.mxu0 0.0
    %3417 = vmatpush.msra.mxu0 0.0
    %3418 = vmatpush.msra.mxu0 0.0
    %3419 = vmatpush.msra.mxu0 0.0
    %3420 = vmatpush.msra.mxu0 0.0
    %3421 = vmatpush.msra.mxu0 0.0
    %3422 = vmatpush.msra.mxu0 0.0
    %3423 = vmatpush.msra.mxu0 0.0
    %3424 = vmatpush.msra.mxu0 0.0
    %3425 = vmatpush.msra.mxu0 %v2939
    %3426 = vmatpush.msra.mxu0 %v2888
    %3427 = vmatpush.msra.mxu0 %v2837
    %3428 = vmatpush.msra.mxu0 %v2786
    %3429 = vmatmul.f32.gmra.mxu0 %v2971
    %v3430 = vpop.f32.mrf.mxu0
    %v3431 = vadd.f32 %v2969, %v3430
    %3432 = vdwg.mxu0
    %3433 = vmatpush.msra.mxu0 0.0
    %3434 = vmatpush.msra.mxu0 0.0
    %3435 = vmatpush.msra.mxu0 0.0
    %3436 = vmatpush.msra.mxu0 0.0
    %3437 = vmatpush.msra.mxu0 0.0
    %3438 = vmatpush.msra.mxu0 0.0
    %3439 = vmatpush.msra.mxu0 0.0
    %3440 = vmatpush.msra.mxu0 0.0
    %3441 = vmatpush.msra.mxu0 0.0
    %3442 = vmatpush.msra.mxu0 0.0
    %3443 = vmatpush.msra.mxu0 0.0
    %3444 = vmatpush.msra.mxu0 0.0
    %3445 = vmatpush.msra.mxu0 %v2940
    %3446 = vmatpush.msra.mxu0 %v2889
    %3447 = vmatpush.msra.mxu0 %v2838
    %3448 = vmatpush.msra.mxu0 %v2787
    %3449 = vmatmul.f32.gmra.mxu0 %v2971
    %v3450 = vpop.f32.mrf.mxu0
    %v3451 = vadd.f32 %v2969, %v3450
    %3452 = vdwg.mxu0
    %3453 = vmatpush.msra.mxu0 0.0
    %3454 = vmatpush.msra.mxu0 0.0
    %3455 = vmatpush.msra.mxu0 0.0
    %3456 = vmatpush.msra.mxu0 0.0
    %3457 = vmatpush.msra.mxu0 0.0
    %3458 = vmatpush.msra.mxu0 0.0
    %3459 = vmatpush.msra.mxu0 0.0
    %3460 = vmatpush.msra.mxu0 0.0
    %3461 = vmatpush.msra.mxu0 0.0
    %3462 = vmatpush.msra.mxu0 0.0
    %3463 = vmatpush.msra.mxu0 0.0
    %3464 = vmatpush.msra.mxu0 0.0
    %3465 = vmatpush.msra.mxu0 %v2941
    %3466 = vmatpush.msra.mxu0 %v2890
    %3467 = vmatpush.msra.mxu0 %v2839
    %3468 = vmatpush.msra.mxu0 %v2788
    %3469 = vmatmul.f32.gmra.mxu0 %v2971
    %v3470 = vpop.f32.mrf.mxu0
    %v3471 = vadd.f32 %v2969, %v3470
    %3472 = vdwg.mxu0
    %3473 = vmatpush.msra.mxu0 0.0
    %3474 = vmatpush.msra.mxu0 0.0
    %3475 = vmatpush.msra.mxu0 0.0
    %3476 = vmatpush.msra.mxu0 0.0
    %3477 = vmatpush.msra.mxu0 0.0
    %3478 = vmatpush.msra.mxu0 0.0
    %3479 = vmatpush.msra.mxu0 0.0
    %3480 = vmatpush.msra.mxu0 0.0
    %3481 = vmatpush.msra.mxu0 0.0
    %3482 = vmatpush.msra.mxu0 0.0
    %3483 = vmatpush.msra.mxu0 0.0
    %3484 = vmatpush.msra.mxu0 0.0
    %3485 = vmatpush.msra.mxu0 %v2942
    %3486 = vmatpush.msra.mxu0 %v2891
    %3487 = vmatpush.msra.mxu0 %v2840
    %3488 = vmatpush.msra.mxu0 %v2789
    %3489 = vmatmul.f32.gmra.mxu0 %v2971
    %v3490 = vpop.f32.mrf.mxu0
    %v3491 = vadd.f32 %v2969, %v3490
    %3492 = vdwg.mxu0
    %3493 = vmatpush.msra.mxu0 0.0
    %3494 = vmatpush.msra.mxu0 0.0
    %3495 = vmatpush.msra.mxu0 0.0
    %3496 = vmatpush.msra.mxu0 0.0
    %3497 = vmatpush.msra.mxu0 0.0
    %3498 = vmatpush.msra.mxu0 0.0
    %3499 = vmatpush.msra.mxu0 0.0
    %3500 = vmatpush.msra.mxu0 0.0
    %3501 = vmatpush.msra.mxu0 0.0
    %3502 = vmatpush.msra.mxu0 0.0
    %3503 = vmatpush.msra.mxu0 0.0
    %3504 = vmatpush.msra.mxu0 0.0
    %3505 = vmatpush.msra.mxu0 %v2943
    %3506 = vmatpush.msra.mxu0 %v2892
    %3507 = vmatpush.msra.mxu0 %v2841
    %3508 = vmatpush.msra.mxu0 %v2790
    %3509 = vmatmul.f32.gmra.mxu0 %v2971
    %v3510 = vpop.f32.mrf.mxu0
    %v3511 = vadd.f32 %v2969, %v3510
    %3512 = vdwg.mxu0
    %3513 = vmatpush.msra.mxu0 0.0
    %3514 = vmatpush.msra.mxu0 0.0
    %3515 = vmatpush.msra.mxu0 0.0
    %3516 = vmatpush.msra.mxu0 0.0
    %3517 = vmatpush.msra.mxu0 0.0
    %3518 = vmatpush.msra.mxu0 0.0
    %3519 = vmatpush.msra.mxu0 0.0
    %3520 = vmatpush.msra.mxu0 0.0
    %3521 = vmatpush.msra.mxu0 0.0
    %3522 = vmatpush.msra.mxu0 0.0
    %3523 = vmatpush.msra.mxu0 0.0
    %3524 = vmatpush.msra.mxu0 0.0
    %3525 = vmatpush.msra.mxu0 %v2944
    %3526 = vmatpush.msra.mxu0 %v2893
    %3527 = vmatpush.msra.mxu0 %v2842
    %3528 = vmatpush.msra.mxu0 %v2791
    %3529 = vmatmul.f32.gmra.mxu0 %v2971
    %v3530 = vpop.f32.mrf.mxu0
    %v3531 = vadd.f32 %v2969, %v3530
    %3532 = vdwg.mxu0
    %3533 = vmatpush.msra.mxu0 0.0
    %3534 = vmatpush.msra.mxu0 0.0
    %3535 = vmatpush.msra.mxu0 0.0
    %3536 = vmatpush.msra.mxu0 0.0
    %3537 = vmatpush.msra.mxu0 0.0
    %3538 = vmatpush.msra.mxu0 0.0
    %3539 = vmatpush.msra.mxu0 0.0
    %3540 = vmatpush.msra.mxu0 0.0
    %3541 = vmatpush.msra.mxu0 0.0
    %3542 = vmatpush.msra.mxu0 0.0
    %3543 = vmatpush.msra.mxu0 0.0
    %3544 = vmatpush.msra.mxu0 0.0
    %3545 = vmatpush.msra.mxu0 %v2945
    %3546 = vmatpush.msra.mxu0 %v2894
    %3547 = vmatpush.msra.mxu0 %v2843
    %3548 = vmatpush.msra.mxu0 %v2792
    %3549 = vmatmul.f32.gmra.mxu0 %v2971
    %v3550 = vpop.f32.mrf.mxu0
    %v3551 = vadd.f32 %v2969, %v3550
    %3552 = vdwg.mxu0
    %3553 = vmatpush.msra.mxu0 0.0
    %3554 = vmatpush.msra.mxu0 0.0
    %3555 = vmatpush.msra.mxu0 0.0
    %3556 = vmatpush.msra.mxu0 0.0
    %3557 = vmatpush.msra.mxu0 0.0
    %3558 = vmatpush.msra.mxu0 0.0
    %3559 = vmatpush.msra.mxu0 0.0
    %3560 = vmatpush.msra.mxu0 0.0
    %3561 = vmatpush.msra.mxu0 0.0
    %3562 = vmatpush.msra.mxu0 0.0
    %3563 = vmatpush.msra.mxu0 0.0
    %3564 = vmatpush.msra.mxu0 0.0
    %3565 = vmatpush.msra.mxu0 %v2946
    %3566 = vmatpush.msra.mxu0 %v2895
    %3567 = vmatpush.msra.mxu0 %v2844
    %3568 = vmatpush.msra.mxu0 %v2793
    %3569 = vmatmul.f32.gmra.mxu0 %v2971
    %v3570 = vpop.f32.mrf.mxu0
    %v3571 = vadd.f32 %v2969, %v3570
    %3572 = vdwg.mxu0
    %3573 = vmatpush.msra.mxu0 0.0
    %3574 = vmatpush.msra.mxu0 0.0
    %3575 = vmatpush.msra.mxu0 0.0
    %3576 = vmatpush.msra.mxu0 0.0
    %3577 = vmatpush.msra.mxu0 0.0
    %3578 = vmatpush.msra.mxu0 0.0
    %3579 = vmatpush.msra.mxu0 0.0
    %3580 = vmatpush.msra.mxu0 0.0
    %3581 = vmatpush.msra.mxu0 0.0
    %3582 = vmatpush.msra.mxu0 0.0
    %3583 = vmatpush.msra.mxu0 0.0
    %3584 = vmatpush.msra.mxu0 0.0
    %3585 = vmatpush.msra.mxu0 %v2947
    %3586 = vmatpush.msra.mxu0 %v2896
    %3587 = vmatpush.msra.mxu0 %v2845
    %3588 = vmatpush.msra.mxu0 %v2794
    %3589 = vmatmul.f32.gmra.mxu0 %v2971
    %v3590 = vpop.f32.mrf.mxu0
    %v3591 = vadd.f32 %v2969, %v3590
    %3592 = vdwg.mxu0
    %3593 = vmatpush.msra.mxu0 0.0
    %3594 = vmatpush.msra.mxu0 0.0
    %3595 = vmatpush.msra.mxu0 0.0
    %3596 = vmatpush.msra.mxu0 0.0
    %3597 = vmatpush.msra.mxu0 0.0
    %3598 = vmatpush.msra.mxu0 0.0
    %3599 = vmatpush.msra.mxu0 0.0
    %3600 = vmatpush.msra.mxu0 0.0
    %3601 = vmatpush.msra.mxu0 0.0
    %3602 = vmatpush.msra.mxu0 0.0
    %3603 = vmatpush.msra.mxu0 0.0
    %3604 = vmatpush.msra.mxu0 0.0
    %3605 = vmatpush.msra.mxu0 %v2948
    %3606 = vmatpush.msra.mxu0 %v2897
    %3607 = vmatpush.msra.mxu0 %v2846
    %3608 = vmatpush.msra.mxu0 %v2795
    %3609 = vmatmul.f32.gmra.mxu0 %v2971
    %v3610 = vpop.f32.mrf.mxu0
    %v3611 = vadd.f32 %v2969, %v3610
    %3612 = vdwg.mxu0
    %3613 = vmatpush.msra.mxu0 0.0
    %3614 = vmatpush.msra.mxu0 0.0
    %3615 = vmatpush.msra.mxu0 0.0
    %3616 = vmatpush.msra.mxu0 0.0
    %3617 = vmatpush.msra.mxu0 0.0
    %3618 = vmatpush.msra.mxu0 0.0
    %3619 = vmatpush.msra.mxu0 0.0
    %3620 = vmatpush.msra.mxu0 0.0
    %3621 = vmatpush.msra.mxu0 0.0
    %3622 = vmatpush.msra.mxu0 0.0
    %3623 = vmatpush.msra.mxu0 0.0
    %3624 = vmatpush.msra.mxu0 0.0
    %3625 = vmatpush.msra.mxu0 %v2949
    %3626 = vmatpush.msra.mxu0 %v2898
    %3627 = vmatpush.msra.mxu0 %v2847
    %3628 = vmatpush.msra.mxu0 %v2796
    %3629 = vmatmul.f32.gmra.mxu0 %v2971
    %v3630 = vpop.f32.mrf.mxu0
    %v3631 = vadd.f32 %v2969, %v3630
    %3632 = vdwg.mxu0
    %3633 = vmatpush.msra.mxu0 0.0
    %3634 = vmatpush.msra.mxu0 0.0
    %3635 = vmatpush.msra.mxu0 0.0
    %3636 = vmatpush.msra.mxu0 0.0
    %3637 = vmatpush.msra.mxu0 0.0
    %3638 = vmatpush.msra.mxu0 0.0
    %3639 = vmatpush.msra.mxu0 0.0
    %3640 = vmatpush.msra.mxu0 0.0
    %3641 = vmatpush.msra.mxu0 0.0
    %3642 = vmatpush.msra.mxu0 0.0
    %3643 = vmatpush.msra.mxu0 0.0
    %3644 = vmatpush.msra.mxu0 0.0
    %3645 = vmatpush.msra.mxu0 %v2950
    %3646 = vmatpush.msra.mxu0 %v2899
    %3647 = vmatpush.msra.mxu0 %v2848
    %3648 = vmatpush.msra.mxu0 %v2797
    %3649 = vmatmul.f32.gmra.mxu0 %v2971
    %v3650 = vpop.f32.mrf.mxu0
    %v3651 = vadd.f32 %v2969, %v3650
    %3652 = vdwg.mxu0
    %3653 = vmatpush.msra.mxu0 0.0
    %3654 = vmatpush.msra.mxu0 0.0
    %3655 = vmatpush.msra.mxu0 0.0
    %3656 = vmatpush.msra.mxu0 0.0
    %3657 = vmatpush.msra.mxu0 0.0
    %3658 = vmatpush.msra.mxu0 0.0
    %3659 = vmatpush.msra.mxu0 0.0
    %3660 = vmatpush.msra.mxu0 0.0
    %3661 = vmatpush.msra.mxu0 0.0
    %3662 = vmatpush.msra.mxu0 0.0
    %3663 = vmatpush.msra.mxu0 0.0
    %3664 = vmatpush.msra.mxu0 0.0
    %3665 = vmatpush.msra.mxu0 %v2951
    %3666 = vmatpush.msra.mxu0 %v2900
    %3667 = vmatpush.msra.mxu0 %v2849
    %3668 = vmatpush.msra.mxu0 %v2798
    %3669 = vmatmul.f32.gmra.mxu0 %v2971
    %v3670 = vpop.f32.mrf.mxu0
    %v3671 = vadd.f32 %v2969, %v3670
    %3672 = vdwg.mxu0
    %3673 = vmatpush.msra.mxu0 0.0
    %3674 = vmatpush.msra.mxu0 0.0
    %3675 = vmatpush.msra.mxu0 0.0
    %3676 = vmatpush.msra.mxu0 0.0
    %3677 = vmatpush.msra.mxu0 0.0
    %3678 = vmatpush.msra.mxu0 0.0
    %3679 = vmatpush.msra.mxu0 0.0
    %3680 = vmatpush.msra.mxu0 0.0
    %3681 = vmatpush.msra.mxu0 0.0
    %3682 = vmatpush.msra.mxu0 0.0
    %3683 = vmatpush.msra.mxu0 0.0
    %3684 = vmatpush.msra.mxu0 0.0
    %3685 = vmatpush.msra.mxu0 %v2952
    %3686 = vmatpush.msra.mxu0 %v2901
    %3687 = vmatpush.msra.mxu0 %v2850
    %3688 = vmatpush.msra.mxu0 %v2799
    %3689 = vmatmul.f32.gmra.mxu0 %v2971
    %v3690 = vpop.f32.mrf.mxu0
    %v3691 = vadd.f32 %v2969, %v3690
    %3692 = vdwg.mxu0
    %3693 = vmatpush.msra.mxu0 0.0
    %3694 = vmatpush.msra.mxu0 0.0
    %3695 = vmatpush.msra.mxu0 0.0
    %3696 = vmatpush.msra.mxu0 0.0
    %3697 = vmatpush.msra.mxu0 0.0
    %3698 = vmatpush.msra.mxu0 0.0
    %3699 = vmatpush.msra.mxu0 0.0
    %3700 = vmatpush.msra.mxu0 0.0
    %3701 = vmatpush.msra.mxu0 0.0
    %3702 = vmatpush.msra.mxu0 0.0
    %3703 = vmatpush.msra.mxu0 0.0
    %3704 = vmatpush.msra.mxu0 0.0
    %3705 = vmatpush.msra.mxu0 %v2953
    %3706 = vmatpush.msra.mxu0 %v2902
    %3707 = vmatpush.msra.mxu0 %v2851
    %3708 = vmatpush.msra.mxu0 %v2800
    %3709 = vmatmul.f32.gmra.mxu0 %v2971
    %v3710 = vpop.f32.mrf.mxu0
    %v3711 = vadd.f32 %v2969, %v3710
    %3712 = vdwg.mxu0
    %3713 = vmatpush.msra.mxu0 0.0
    %3714 = vmatpush.msra.mxu0 0.0
    %3715 = vmatpush.msra.mxu0 0.0
    %3716 = vmatpush.msra.mxu0 0.0
    %3717 = vmatpush.msra.mxu0 0.0
    %3718 = vmatpush.msra.mxu0 0.0
    %3719 = vmatpush.msra.mxu0 0.0
    %3720 = vmatpush.msra.mxu0 0.0
    %3721 = vmatpush.msra.mxu0 0.0
    %3722 = vmatpush.msra.mxu0 0.0
    %3723 = vmatpush.msra.mxu0 0.0
    %3724 = vmatpush.msra.mxu0 0.0
    %3725 = vmatpush.msra.mxu0 %v2954
    %3726 = vmatpush.msra.mxu0 %v2903
    %3727 = vmatpush.msra.mxu0 %v2852
    %3728 = vmatpush.msra.mxu0 %v2801
    %3729 = vmatmul.f32.gmra.mxu0 %v2971
    %v3730 = vpop.f32.mrf.mxu0
    %v3731 = vadd.f32 %v2969, %v3730
    %3732 = vdwg.mxu0
    %3733 = vmatpush.msra.mxu0 0.0
    %3734 = vmatpush.msra.mxu0 0.0
    %3735 = vmatpush.msra.mxu0 0.0
    %3736 = vmatpush.msra.mxu0 0.0
    %3737 = vmatpush.msra.mxu0 0.0
    %3738 = vmatpush.msra.mxu0 0.0
    %3739 = vmatpush.msra.mxu0 0.0
    %3740 = vmatpush.msra.mxu0 0.0
    %3741 = vmatpush.msra.mxu0 0.0
    %3742 = vmatpush.msra.mxu0 0.0
    %3743 = vmatpush.msra.mxu0 0.0
    %3744 = vmatpush.msra.mxu0 0.0
    %3745 = vmatpush.msra.mxu0 %v2955
    %3746 = vmatpush.msra.mxu0 %v2904
    %3747 = vmatpush.msra.mxu0 %v2853
    %3748 = vmatpush.msra.mxu0 %v2802
    %3749 = vmatmul.f32.gmra.mxu0 %v2971
    %v3750 = vpop.f32.mrf.mxu0
    %v3751 = vadd.f32 %v2969, %v3750
    %3752 = vdwg.mxu0
    %3753 = vmatpush.msra.mxu0 0.0
    %3754 = vmatpush.msra.mxu0 0.0
    %3755 = vmatpush.msra.mxu0 0.0
    %3756 = vmatpush.msra.mxu0 0.0
    %3757 = vmatpush.msra.mxu0 0.0
    %3758 = vmatpush.msra.mxu0 0.0
    %3759 = vmatpush.msra.mxu0 0.0
    %3760 = vmatpush.msra.mxu0 0.0
    %3761 = vmatpush.msra.mxu0 0.0
    %3762 = vmatpush.msra.mxu0 0.0
    %3763 = vmatpush.msra.mxu0 0.0
    %3764 = vmatpush.msra.mxu0 0.0
    %3765 = vmatpush.msra.mxu0 %v2956
    %3766 = vmatpush.msra.mxu0 %v2905
    %3767 = vmatpush.msra.mxu0 %v2854
    %3768 = vmatpush.msra.mxu0 %v2803
    %3769 = vmatmul.f32.gmra.mxu0 %v2971
    %v3770 = vpop.f32.mrf.mxu0
    %v3771 = vadd.f32 %v2969, %v3770
    %3772 = vdwg.mxu0
    %3773 = vmatpush.msra.mxu0 0.0
    %3774 = vmatpush.msra.mxu0 0.0
    %3775 = vmatpush.msra.mxu0 0.0
    %3776 = vmatpush.msra.mxu0 0.0
    %3777 = vmatpush.msra.mxu0 0.0
    %3778 = vmatpush.msra.mxu0 0.0
    %3779 = vmatpush.msra.mxu0 0.0
    %3780 = vmatpush.msra.mxu0 0.0
    %3781 = vmatpush.msra.mxu0 0.0
    %3782 = vmatpush.msra.mxu0 0.0
    %3783 = vmatpush.msra.mxu0 0.0
    %3784 = vmatpush.msra.mxu0 0.0
    %3785 = vmatpush.msra.mxu0 %v2957
    %3786 = vmatpush.msra.mxu0 %v2906
    %3787 = vmatpush.msra.mxu0 %v2855
    %3788 = vmatpush.msra.mxu0 %v2804
    %3789 = vmatmul.f32.gmra.mxu0 %v2971
    %v3790 = vpop.f32.mrf.mxu0
    %v3791 = vadd.f32 %v2969, %v3790
    %3792 = vdwg.mxu0
    %3793 = vmatpush.msra.mxu0 0.0
    %3794 = vmatpush.msra.mxu0 0.0
    %3795 = vmatpush.msra.mxu0 0.0
    %3796 = vmatpush.msra.mxu0 0.0
    %3797 = vmatpush.msra.mxu0 0.0
    %3798 = vmatpush.msra.mxu0 0.0
    %3799 = vmatpush.msra.mxu0 0.0
    %3800 = vmatpush.msra.mxu0 0.0
    %3801 = vmatpush.msra.mxu0 0.0
    %3802 = vmatpush.msra.mxu0 0.0
    %3803 = vmatpush.msra.mxu0 0.0
    %3804 = vmatpush.msra.mxu0 0.0
    %3805 = vmatpush.msra.mxu0 %v2958
    %3806 = vmatpush.msra.mxu0 %v2907
    %3807 = vmatpush.msra.mxu0 %v2856
    %3808 = vmatpush.msra.mxu0 %v2805
    %3809 = vmatmul.f32.gmra.mxu0 %v2971
    %v3810 = vpop.f32.mrf.mxu0
    %v3811 = vadd.f32 %v2969, %v3810
    %3812 = vdwg.mxu0
    %3813 = vmatpush.msra.mxu0 0.0
    %3814 = vmatpush.msra.mxu0 0.0
    %3815 = vmatpush.msra.mxu0 0.0
    %3816 = vmatpush.msra.mxu0 0.0
    %3817 = vmatpush.msra.mxu0 0.0
    %3818 = vmatpush.msra.mxu0 0.0
    %3819 = vmatpush.msra.mxu0 0.0
    %3820 = vmatpush.msra.mxu0 0.0
    %3821 = vmatpush.msra.mxu0 0.0
    %3822 = vmatpush.msra.mxu0 0.0
    %3823 = vmatpush.msra.mxu0 0.0
    %3824 = vmatpush.msra.mxu0 0.0
    %3825 = vmatpush.msra.mxu0 %v2959
    %3826 = vmatpush.msra.mxu0 %v2908
    %3827 = vmatpush.msra.mxu0 %v2857
    %3828 = vmatpush.msra.mxu0 %v2806
    %3829 = vmatmul.f32.gmra.mxu0 %v2971
    %v3830 = vpop.f32.mrf.mxu0
    %v3831 = vadd.f32 %v2969, %v3830
    %3832 = vdwg.mxu0
    %3833 = vmatpush.msra.mxu0 0.0
    %3834 = vmatpush.msra.mxu0 0.0
    %3835 = vmatpush.msra.mxu0 0.0
    %3836 = vmatpush.msra.mxu0 0.0
    %3837 = vmatpush.msra.mxu0 0.0
    %3838 = vmatpush.msra.mxu0 0.0
    %3839 = vmatpush.msra.mxu0 0.0
    %3840 = vmatpush.msra.mxu0 0.0
    %3841 = vmatpush.msra.mxu0 0.0
    %3842 = vmatpush.msra.mxu0 0.0
    %3843 = vmatpush.msra.mxu0 0.0
    %3844 = vmatpush.msra.mxu0 0.0
    %3845 = vmatpush.msra.mxu0 %v2960
    %3846 = vmatpush.msra.mxu0 %v2909
    %3847 = vmatpush.msra.mxu0 %v2858
    %3848 = vmatpush.msra.mxu0 %v2807
    %3849 = vmatmul.f32.gmra.mxu0 %v2971
    %v3850 = vpop.f32.mrf.mxu0
    %v3851 = vadd.f32 %v2969, %v3850
    %3852 = vdwg.mxu0
    %3853 = vmatpush.msra.mxu0 0.0
    %3854 = vmatpush.msra.mxu0 0.0
    %3855 = vmatpush.msra.mxu0 0.0
    %3856 = vmatpush.msra.mxu0 0.0
    %3857 = vmatpush.msra.mxu0 0.0
    %3858 = vmatpush.msra.mxu0 0.0
    %3859 = vmatpush.msra.mxu0 0.0
    %3860 = vmatpush.msra.mxu0 0.0
    %3861 = vmatpush.msra.mxu0 0.0
    %3862 = vmatpush.msra.mxu0 0.0
    %3863 = vmatpush.msra.mxu0 0.0
    %3864 = vmatpush.msra.mxu0 0.0
    %3865 = vmatpush.msra.mxu0 %v2961
    %3866 = vmatpush.msra.mxu0 %v2910
    %3867 = vmatpush.msra.mxu0 %v2859
    %3868 = vmatpush.msra.mxu0 %v2808
    %3869 = vmatmul.f32.gmra.mxu0 %v2971
    %v3870 = vpop.f32.mrf.mxu0
    %v3871 = vadd.f32 %v2969, %v3870
    %3872 = vdwg.mxu0
    %3873 = vmatpush.msra.mxu0 0.0
    %3874 = vmatpush.msra.mxu0 0.0
    %3875 = vmatpush.msra.mxu0 0.0
    %3876 = vmatpush.msra.mxu0 0.0
    %3877 = vmatpush.msra.mxu0 0.0
    %3878 = vmatpush.msra.mxu0 0.0
    %3879 = vmatpush.msra.mxu0 0.0
    %3880 = vmatpush.msra.mxu0 0.0
    %3881 = vmatpush.msra.mxu0 0.0
    %3882 = vmatpush.msra.mxu0 0.0
    %3883 = vmatpush.msra.mxu0 0.0
    %3884 = vmatpush.msra.mxu0 0.0
    %3885 = vmatpush.msra.mxu0 %v2962
    %3886 = vmatpush.msra.mxu0 %v2911
    %3887 = vmatpush.msra.mxu0 %v2860
    %3888 = vmatpush.msra.mxu0 %v2809
    %3889 = vmatmul.f32.gmra.mxu0 %v2971
    %v3890 = vpop.f32.mrf.mxu0
    %v3891 = vadd.f32 %v2969, %v3890
    %3892 = vdwg.mxu0
    %3893 = vmatpush.msra.mxu0 0.0
    %3894 = vmatpush.msra.mxu0 0.0
    %3895 = vmatpush.msra.mxu0 0.0
    %3896 = vmatpush.msra.mxu0 0.0
    %3897 = vmatpush.msra.mxu0 0.0
    %3898 = vmatpush.msra.mxu0 0.0
    %3899 = vmatpush.msra.mxu0 0.0
    %3900 = vmatpush.msra.mxu0 0.0
    %3901 = vmatpush.msra.mxu0 0.0
    %3902 = vmatpush.msra.mxu0 0.0
    %3903 = vmatpush.msra.mxu0 0.0
    %3904 = vmatpush.msra.mxu0 0.0
    %3905 = vmatpush.msra.mxu0 %v2963
    %3906 = vmatpush.msra.mxu0 %v2912
    %3907 = vmatpush.msra.mxu0 %v2861
    %3908 = vmatpush.msra.mxu0 %v2810
    %3909 = vmatmul.f32.gmra.mxu0 %v2971
    %v3910 = vpop.f32.mrf.mxu0
    %v3911 = vadd.f32 %v2969, %v3910
    %3912 = vdwg.mxu0
    %3913 = vmatpush.msra.mxu0 0.0
    %3914 = vmatpush.msra.mxu0 0.0
    %3915 = vmatpush.msra.mxu0 0.0
    %3916 = vmatpush.msra.mxu0 0.0
    %3917 = vmatpush.msra.mxu0 0.0
    %3918 = vmatpush.msra.mxu0 0.0
    %3919 = vmatpush.msra.mxu0 0.0
    %3920 = vmatpush.msra.mxu0 0.0
    %3921 = vmatpush.msra.mxu0 0.0
    %3922 = vmatpush.msra.mxu0 0.0
    %3923 = vmatpush.msra.mxu0 0.0
    %3924 = vmatpush.msra.mxu0 0.0
    %3925 = vmatpush.msra.mxu0 %v2964
    %3926 = vmatpush.msra.mxu0 %v2913
    %3927 = vmatpush.msra.mxu0 %v2862
    %3928 = vmatpush.msra.mxu0 %v2811
    %3929 = vmatmul.f32.gmra.mxu0 %v2971
    %v3930 = vpop.f32.mrf.mxu0
    %v3931 = vadd.f32 %v2969, %v3930
    %3932 = vdwg.mxu0
    %3933 = vmatpush.msra.mxu0 0.0
    %3934 = vmatpush.msra.mxu0 0.0
    %3935 = vmatpush.msra.mxu0 0.0
    %3936 = vmatpush.msra.mxu0 0.0
    %3937 = vmatpush.msra.mxu0 0.0
    %3938 = vmatpush.msra.mxu0 0.0
    %3939 = vmatpush.msra.mxu0 0.0
    %3940 = vmatpush.msra.mxu0 0.0
    %3941 = vmatpush.msra.mxu0 0.0
    %3942 = vmatpush.msra.mxu0 0.0
    %3943 = vmatpush.msra.mxu0 0.0
    %3944 = vmatpush.msra.mxu0 0.0
    %3945 = vmatpush.msra.mxu0 %v2965
    %3946 = vmatpush.msra.mxu0 %v2914
    %3947 = vmatpush.msra.mxu0 %v2863
    %3948 = vmatpush.msra.mxu0 %v2812
    %3949 = vmatmul.f32.gmra.mxu0 %v2971
    %v3950 = vpop.f32.mrf.mxu0
    %v3951 = vadd.f32 %v2969, %v3950
    %3952 = vdwg.mxu0
    %3953 = vmatpush.msra.mxu0 0.0
    %3954 = vmatpush.msra.mxu0 0.0
    %3955 = vmatpush.msra.mxu0 0.0
    %3956 = vmatpush.msra.mxu0 0.0
    %3957 = vmatpush.msra.mxu0 0.0
    %3958 = vmatpush.msra.mxu0 0.0
    %3959 = vmatpush.msra.mxu0 0.0
    %3960 = vmatpush.msra.mxu0 0.0
    %3961 = vmatpush.msra.mxu0 0.0
    %3962 = vmatpush.msra.mxu0 0.0
    %3963 = vmatpush.msra.mxu0 0.0
    %3964 = vmatpush.msra.mxu0 0.0
    %3965 = vmatpush.msra.mxu0 %v2966
    %3966 = vmatpush.msra.mxu0 %v2915
    %3967 = vmatpush.msra.mxu0 %v2864
    %3968 = vmatpush.msra.mxu0 %v2813
    %3969 = vmatmul.f32.gmra.mxu0 %v2971
    %v3970 = vpop.f32.mrf.mxu0
    %v3971 = vadd.f32 %v2969, %v3970
    %3972 = vdwg.mxu0
    %3973 = vmatpush.msra.mxu0 0.0
    %3974 = vmatpush.msra.mxu0 0.0
    %3975 = vmatpush.msra.mxu0 0.0
    %3976 = vmatpush.msra.mxu0 0.0
    %3977 = vmatpush.msra.mxu0 0.0
    %3978 = vmatpush.msra.mxu0 0.0
    %3979 = vmatpush.msra.mxu0 0.0
    %3980 = vmatpush.msra.mxu0 0.0
    %3981 = vmatpush.msra.mxu0 0.0
    %3982 = vmatpush.msra.mxu0 0.0
    %3983 = vmatpush.msra.mxu0 0.0
    %3984 = vmatpush.msra.mxu0 0.0
    %3985 = vmatpush.msra.mxu0 %v2967
    %3986 = vmatpush.msra.mxu0 %v2916
    %3987 = vmatpush.msra.mxu0 %v2865
    %3988 = vmatpush.msra.mxu0 %v2814
    %3989 = vmatmul.f32.gmra.mxu0 %v2971
    %v3990 = vpop.f32.mrf.mxu0
    %v3991 = vadd.f32 %v2969, %v3990
    %3992 = vdwg.mxu0
    %vm3993 = vcmp.gt.f32.partialorder %v2991, 0.0
    %vm3994 = vcmp.gt.f32.partialorder %v3011, 0.0
    %vm3995 = vcmp.gt.f32.partialorder %v3031, 0.0
    %vm3996 = vcmp.gt.f32.partialorder %v3051, 0.0
    %vm3997 = vcmp.gt.f32.partialorder %v3071, 0.0
    %vm3998 = vcmp.gt.f32.partialorder %v3091, 0.0
    %vm3999 = vcmp.gt.f32.partialorder %v3111, 0.0
    %vm4000 = vcmp.gt.f32.partialorder %v3131, 0.0
    %vm4001 = vcmp.gt.f32.partialorder %v3151, 0.0
    %vm4002 = vcmp.gt.f32.partialorder %v3171, 0.0
    %vm4003 = vcmp.gt.f32.partialorder %v3191, 0.0
    %vm4004 = vcmp.gt.f32.partialorder %v3211, 0.0
    %vm4005 = vcmp.gt.f32.partialorder %v3231, 0.0
    %vm4006 = vcmp.gt.f32.partialorder %v3251, 0.0
    %vm4007 = vcmp.gt.f32.partialorder %v3271, 0.0
    %vm4008 = vcmp.gt.f32.partialorder %v3291, 0.0
    %vm4009 = vcmp.gt.f32.partialorder %v3311, 0.0
    %vm4010 = vcmp.gt.f32.partialorder %v3331, 0.0
    %vm4011 = vcmp.gt.f32.partialorder %v3351, 0.0
    %vm4012 = vcmp.gt.f32.partialorder %v3371, 0.0
    %vm4013 = vcmp.gt.f32.partialorder %v3391, 0.0
    %vm4014 = vcmp.gt.f32.partialorder %v3411, 0.0
    %vm4015 = vcmp.gt.f32.partialorder %v3431, 0.0
    %vm4016 = vcmp.gt.f32.partialorder %v3451, 0.0
    %vm4017 = vcmp.gt.f32.partialorder %v3471, 0.0
    %vm4018 = vcmp.gt.f32.partialorder %v3491, 0.0
    %vm4019 = vcmp.gt.f32.partialorder %v3511, 0.0
    %vm4020 = vcmp.gt.f32.partialorder %v3531, 0.0
    %vm4021 = vcmp.gt.f32.partialorder %v3551, 0.0
    %vm4022 = vcmp.gt.f32.partialorder %v3571, 0.0
    %vm4023 = vcmp.gt.f32.partialorder %v3591, 0.0
    %vm4024 = vcmp.gt.f32.partialorder %v3611, 0.0
    %vm4025 = vcmp.gt.f32.partialorder %v3631, 0.0
    %vm4026 = vcmp.gt.f32.partialorder %v3651, 0.0
    %vm4027 = vcmp.gt.f32.partialorder %v3671, 0.0
    %vm4028 = vcmp.gt.f32.partialorder %v3691, 0.0
    %vm4029 = vcmp.gt.f32.partialorder %v3711, 0.0
    %vm4030 = vcmp.gt.f32.partialorder %v3731, 0.0
    %vm4031 = vcmp.gt.f32.partialorder %v3751, 0.0
    %vm4032 = vcmp.gt.f32.partialorder %v3771, 0.0
    %vm4033 = vcmp.gt.f32.partialorder %v3791, 0.0
    %vm4034 = vcmp.gt.f32.partialorder %v3811, 0.0
    %vm4035 = vcmp.gt.f32.partialorder %v3831, 0.0
    %vm4036 = vcmp.gt.f32.partialorder %v3851, 0.0
    %vm4037 = vcmp.gt.f32.partialorder %v3871, 0.0
    %vm4038 = vcmp.gt.f32.partialorder %v3891, 0.0
    %vm4039 = vcmp.gt.f32.partialorder %v3911, 0.0
    %vm4040 = vcmp.gt.f32.partialorder %v3931, 0.0
    %vm4041 = vcmp.gt.f32.partialorder %v3951, 0.0
    %vm4042 = vcmp.gt.f32.partialorder %v3971, 0.0
    %vm4043 = vcmp.gt.f32.partialorder %v3991, 0.0
    %v4044 = vmin.f32 %v2991, 0.0
    %v4045 = vmin.f32 %v3011, 0.0
    %v4046 = vmin.f32 %v3031, 0.0
    %v4047 = vmin.f32 %v3051, 0.0
    %v4048 = vmin.f32 %v3071, 0.0
    %v4049 = vmin.f32 %v3091, 0.0
    %v4050 = vmin.f32 %v3111, 0.0
    %v4051 = vmin.f32 %v3131, 0.0
    %v4052 = vmin.f32 %v3151, 0.0
    %v4053 = vmin.f32 %v3171, 0.0
    %v4054 = vmin.f32 %v3191, 0.0
    %v4055 = vmin.f32 %v3211, 0.0
    %v4056 = vmin.f32 %v3231, 0.0
    %v4057 = vmin.f32 %v3251, 0.0
    %v4058 = vmin.f32 %v3271, 0.0
    %v4059 = vmin.f32 %v3291, 0.0
    %v4060 = vmin.f32 %v3311, 0.0
    %v4061 = vmin.f32 %v3331, 0.0
    %v4062 = vmin.f32 %v3351, 0.0
    %v4063 = vmin.f32 %v3371, 0.0
    %v4064 = vmin.f32 %v3391, 0.0
    %v4065 = vmin.f32 %v3411, 0.0
    %v4066 = vmin.f32 %v3431, 0.0
    %v4067 = vmin.f32 %v3451, 0.0
    %v4068 = vmin.f32 %v3471, 0.0
    %v4069 = vmin.f32 %v3491, 0.0
    %v4070 = vmin.f32 %v3511, 0.0
    %v4071 = vmin.f32 %v3531, 0.0
    %v4072 = vmin.f32 %v3551, 0.0
    %v4073 = vmin.f32 %v3571, 0.0
    %v4074 = vmin.f32 %v3591, 0.0
    %v4075 = vmin.f32 %v3611, 0.0
    %v4076 = vmin.f32 %v3631, 0.0
    %v4077 = vmin.f32 %v3651, 0.0
    %v4078 = vmin.f32 %v3671, 0.0
    %v4079 = vmin.f32 %v3691, 0.0
    %v4080 = vmin.f32 %v3711, 0.0
    %v4081 = vmin.f32 %v3731, 0.0
    %v4082 = vmin.f32 %v3751, 0.0
    %v4083 = vmin.f32 %v3771, 0.0
    %v4084 = vmin.f32 %v3791, 0.0
    %v4085 = vmin.f32 %v3811, 0.0
    %v4086 = vmin.f32 %v3831, 0.0
    %v4087 = vmin.f32 %v3851, 0.0
    %v4088 = vmin.f32 %v3871, 0.0
    %v4089 = vmin.f32 %v3891, 0.0
    %v4090 = vmin.f32 %v3911, 0.0
    %v4091 = vmin.f32 %v3931, 0.0
    %v4092 = vmin.f32 %v3951, 0.0
    %v4093 = vmin.f32 %v3971, 0.0
    %v4094 = vmin.f32 %v3991, 0.0
    %v4095 = vmul.f32 %v4044, 1.442695
    %v4096 = vpow.pop %v4095
    %v4097 = vmul.f32 %v4045, 1.442695
    %v4098 = vpow.pop %v4097
    %v4099 = vmul.f32 %v4046, 1.442695
    %v4100 = vpow.pop %v4099
    %v4101 = vmul.f32 %v4047, 1.442695
    %v4102 = vpow.pop %v4101
    %v4103 = vmul.f32 %v4048, 1.442695
    %v4104 = vpow.pop %v4103
    %v4105 = vmul.f32 %v4049, 1.442695
    %v4106 = vpow.pop %v4105
    %v4107 = vmul.f32 %v4050, 1.442695
    %v4108 = vpow.pop %v4107
    %v4109 = vmul.f32 %v4051, 1.442695
    %v4110 = vpow.pop %v4109
    %v4111 = vmul.f32 %v4052, 1.442695
    %v4112 = vpow.pop %v4111
    %v4113 = vmul.f32 %v4053, 1.442695
    %v4114 = vpow.pop %v4113
    %v4115 = vmul.f32 %v4054, 1.442695
    %v4116 = vpow.pop %v4115
    %v4117 = vmul.f32 %v4055, 1.442695
    %v4118 = vpow.pop %v4117
    %v4119 = vmul.f32 %v4056, 1.442695
    %v4120 = vpow.pop %v4119
    %v4121 = vmul.f32 %v4057, 1.442695
    %v4122 = vpow.pop %v4121
    %v4123 = vmul.f32 %v4058, 1.442695
    %v4124 = vpow.pop %v4123
    %v4125 = vmul.f32 %v4059, 1.442695
    %v4126 = vpow.pop %v4125
    %v4127 = vmul.f32 %v4060, 1.442695
    %v4128 = vpow.pop %v4127
    %v4129 = vmul.f32 %v4061, 1.442695
    %v4130 = vpow.pop %v4129
    %v4131 = vmul.f32 %v4062, 1.442695
    %v4132 = vpow.pop %v4131
    %v4133 = vmul.f32 %v4063, 1.442695
    %v4134 = vpow.pop %v4133
    %v4135 = vmul.f32 %v4064, 1.442695
    %v4136 = vpow.pop %v4135
    %v4137 = vmul.f32 %v4065, 1.442695
    %v4138 = vpow.pop %v4137
    %v4139 = vmul.f32 %v4066, 1.442695
    %v4140 = vpow.pop %v4139
    %v4141 = vmul.f32 %v4067, 1.442695
    %v4142 = vpow.pop %v4141
    %v4143 = vmul.f32 %v4068, 1.442695
    %v4144 = vpow.pop %v4143
    %v4145 = vmul.f32 %v4069, 1.442695
    %v4146 = vpow.pop %v4145
    %v4147 = vmul.f32 %v4070, 1.442695
    %v4148 = vpow.pop %v4147
    %v4149 = vmul.f32 %v4071, 1.442695
    %v4150 = vpow.pop %v4149
    %v4151 = vmul.f32 %v4072, 1.442695
    %v4152 = vpow.pop %v4151
    %v4153 = vmul.f32 %v4073, 1.442695
    %v4154 = vpow.pop %v4153
    %v4155 = vmul.f32 %v4074, 1.442695
    %v4156 = vpow.pop %v4155
    %v4157 = vmul.f32 %v4075, 1.442695
    %v4158 = vpow.pop %v4157
    %v4159 = vmul.f32 %v4076, 1.442695
    %v4160 = vpow.pop %v4159
    %v4161 = vmul.f32 %v4077, 1.442695
    %v4162 = vpow.pop %v4161
    %v4163 = vmul.f32 %v4078, 1.442695
    %v4164 = vpow.pop %v4163
    %v4165 = vmul.f32 %v4079, 1.442695
    %v4166 = vpow.pop %v4165
    %v4167 = vmul.f32 %v4080, 1.442695
    %v4168 = vpow.pop %v4167
    %v4169 = vmul.f32 %v4081, 1.442695
    %v4170 = vpow.pop %v4169
    %v4171 = vmul.f32 %v4082, 1.442695
    %v4172 = vpow.pop %v4171
    %v4173 = vmul.f32 %v4083, 1.442695
    %v4174 = vpow.pop %v4173
    %v4175 = vmul.f32 %v4084, 1.442695
    %v4176 = vpow.pop %v4175
    %v4177 = vmul.f32 %v4085, 1.442695
    %v4178 = vpow.pop %v4177
    %v4179 = vmul.f32 %v4086, 1.442695
    %v4180 = vpow.pop %v4179
    %v4181 = vmul.f32 %v4087, 1.442695
    %v4182 = vpow.pop %v4181
    %v4183 = vmul.f32 %v4088, 1.442695
    %v4184 = vpow.pop %v4183
    %v4185 = vmul.f32 %v4089, 1.442695
    %v4186 = vpow.pop %v4185
    %v4187 = vmul.f32 %v4090, 1.442695
    %v4188 = vpow.pop %v4187
    %v4189 = vmul.f32 %v4091, 1.442695
    %v4190 = vpow.pop %v4189
    %v4191 = vmul.f32 %v4092, 1.442695
    %v4192 = vpow.pop %v4191
    %v4193 = vmul.f32 %v4093, 1.442695
    %v4194 = vpow.pop %v4193
    %v4195 = vmul.f32 %v4094, 1.442695
    %v4196 = vpow.pop %v4195
    %v4197 = vsub.f32 %v4096, 1.0
    %v4198 = vsub.f32 %v4098, 1.0
    %v4199 = vsub.f32 %v4100, 1.0
    %v4200 = vsub.f32 %v4102, 1.0
    %v4201 = vsub.f32 %v4104, 1.0
    %v4202 = vsub.f32 %v4106, 1.0
    %v4203 = vsub.f32 %v4108, 1.0
    %v4204 = vsub.f32 %v4110, 1.0
    %v4205 = vsub.f32 %v4112, 1.0
    %v4206 = vsub.f32 %v4114, 1.0
    %v4207 = vsub.f32 %v4116, 1.0
    %v4208 = vsub.f32 %v4118, 1.0
    %v4209 = vsub.f32 %v4120, 1.0
    %v4210 = vsub.f32 %v4122, 1.0
    %v4211 = vsub.f32 %v4124, 1.0
    %v4212 = vsub.f32 %v4126, 1.0
    %v4213 = vsub.f32 %v4128, 1.0
    %v4214 = vsub.f32 %v4130, 1.0
    %v4215 = vsub.f32 %v4132, 1.0
    %v4216 = vsub.f32 %v4134, 1.0
    %v4217 = vsub.f32 %v4136, 1.0
    %v4218 = vsub.f32 %v4138, 1.0
    %v4219 = vsub.f32 %v4140, 1.0
    %v4220 = vsub.f32 %v4142, 1.0
    %v4221 = vsub.f32 %v4144, 1.0
    %v4222 = vsub.f32 %v4146, 1.0
    %v4223 = vsub.f32 %v4148, 1.0
    %v4224 = vsub.f32 %v4150, 1.0
    %v4225 = vsub.f32 %v4152, 1.0
    %v4226 = vsub.f32 %v4154, 1.0
    %v4227 = vsub.f32 %v4156, 1.0
    %v4228 = vsub.f32 %v4158, 1.0
    %v4229 = vsub.f32 %v4160, 1.0
    %v4230 = vsub.f32 %v4162, 1.0
    %v4231 = vsub.f32 %v4164, 1.0
    %v4232 = vsub.f32 %v4166, 1.0
    %v4233 = vsub.f32 %v4168, 1.0
    %v4234 = vsub.f32 %v4170, 1.0
    %v4235 = vsub.f32 %v4172, 1.0
    %v4236 = vsub.f32 %v4174, 1.0
    %v4237 = vsub.f32 %v4176, 1.0
    %v4238 = vsub.f32 %v4178, 1.0
    %v4239 = vsub.f32 %v4180, 1.0
    %v4240 = vsub.f32 %v4182, 1.0
    %v4241 = vsub.f32 %v4184, 1.0
    %v4242 = vsub.f32 %v4186, 1.0
    %v4243 = vsub.f32 %v4188, 1.0
    %v4244 = vsub.f32 %v4190, 1.0
    %v4245 = vsub.f32 %v4192, 1.0
    %v4246 = vsub.f32 %v4194, 1.0
    %v4247 = vsub.f32 %v4196, 1.0
    %v4248 = vsel %vm3993, %v2991, %v4197
    %v4249 = vsel %vm3994, %v3011, %v4198
    %v4250 = vsel %vm3995, %v3031, %v4199
    %v4251 = vsel %vm3996, %v3051, %v4200
    %v4252 = vsel %vm3997, %v3071, %v4201
    %v4253 = vsel %vm3998, %v3091, %v4202
    %v4254 = vsel %vm3999, %v3111, %v4203
    %v4255 = vsel %vm4000, %v3131, %v4204
    %v4256 = vsel %vm4001, %v3151, %v4205
    %v4257 = vsel %vm4002, %v3171, %v4206
    %v4258 = vsel %vm4003, %v3191, %v4207
    %v4259 = vsel %vm4004, %v3211, %v4208
    %v4260 = vsel %vm4005, %v3231, %v4209
    %v4261 = vsel %vm4006, %v3251, %v4210
    %v4262 = vsel %vm4007, %v3271, %v4211
    %v4263 = vsel %vm4008, %v3291, %v4212
    %v4264 = vsel %vm4009, %v3311, %v4213
    %v4265 = vsel %vm4010, %v3331, %v4214
    %v4266 = vsel %vm4011, %v3351, %v4215
    %v4267 = vsel %vm4012, %v3371, %v4216
    %v4268 = vsel %vm4013, %v3391, %v4217
    %v4269 = vsel %vm4014, %v3411, %v4218
    %v4270 = vsel %vm4015, %v3431, %v4219
    %v4271 = vsel %vm4016, %v3451, %v4220
    %v4272 = vsel %vm4017, %v3471, %v4221
    %v4273 = vsel %vm4018, %v3491, %v4222
    %v4274 = vsel %vm4019, %v3511, %v4223
    %v4275 = vsel %vm4020, %v3531, %v4224
    %v4276 = vsel %vm4021, %v3551, %v4225
    %v4277 = vsel %vm4022, %v3571, %v4226
    %v4278 = vsel %vm4023, %v3591, %v4227
    %v4279 = vsel %vm4024, %v3611, %v4228
    %v4280 = vsel %vm4025, %v3631, %v4229
    %v4281 = vsel %vm4026, %v3651, %v4230
    %v4282 = vsel %vm4027, %v3671, %v4231
    %v4283 = vsel %vm4028, %v3691, %v4232
    %v4284 = vsel %vm4029, %v3711, %v4233
    %v4285 = vsel %vm4030, %v3731, %v4234
    %v4286 = vsel %vm4031, %v3751, %v4235
    %v4287 = vsel %vm4032, %v3771, %v4236
    %v4288 = vsel %vm4033, %v3791, %v4237
    %v4289 = vsel %vm4034, %v3811, %v4238
    %v4290 = vsel %vm4035, %v3831, %v4239
    %v4291 = vsel %vm4036, %v3851, %v4240
    %v4292 = vsel %vm4037, %v3871, %v4241
    %v4293 = vsel %vm4038, %v3891, %v4242
    %v4294 = vsel %vm4039, %v3911, %v4243
    %v4295 = vsel %vm4040, %v3931, %v4244
    %v4296 = vsel %vm4041, %v3951, %v4245
    %v4297 = vsel %vm4042, %v3971, %v4246
    %v4298 = vsel %vm4043, %v3991, %v4247
    %v4299 = vadd.f32 %v4248, 1.0
    %v4300 = vadd.f32 %v4249, 1.0
    %v4301 = vadd.f32 %v4250, 1.0
    %v4302 = vadd.f32 %v4251, 1.0
    %v4303 = vadd.f32 %v4252, 1.0
    %v4304 = vadd.f32 %v4253, 1.0
    %v4305 = vadd.f32 %v4254, 1.0
    %v4306 = vadd.f32 %v4255, 1.0
    %v4307 = vadd.f32 %v4256, 1.0
    %v4308 = vadd.f32 %v4257, 1.0
    %v4309 = vadd.f32 %v4258, 1.0
    %v4310 = vadd.f32 %v4259, 1.0
    %v4311 = vadd.f32 %v4260, 1.0
    %v4312 = vadd.f32 %v4261, 1.0
    %v4313 = vadd.f32 %v4262, 1.0
    %v4314 = vadd.f32 %v4263, 1.0
    %v4315 = vadd.f32 %v4264, 1.0
    %v4316 = vadd.f32 %v4265, 1.0
    %v4317 = vadd.f32 %v4266, 1.0
    %v4318 = vadd.f32 %v4267, 1.0
    %v4319 = vadd.f32 %v4268, 1.0
    %v4320 = vadd.f32 %v4269, 1.0
    %v4321 = vadd.f32 %v4270, 1.0
    %v4322 = vadd.f32 %v4271, 1.0
    %v4323 = vadd.f32 %v4272, 1.0
    %v4324 = vadd.f32 %v4273, 1.0
    %v4325 = vadd.f32 %v4274, 1.0
    %v4326 = vadd.f32 %v4275, 1.0
    %v4327 = vadd.f32 %v4276, 1.0
    %v4328 = vadd.f32 %v4277, 1.0
    %v4329 = vadd.f32 %v4278, 1.0
    %v4330 = vadd.f32 %v4279, 1.0
    %v4331 = vadd.f32 %v4280, 1.0
    %v4332 = vadd.f32 %v4281, 1.0
    %v4333 = vadd.f32 %v4282, 1.0
    %v4334 = vadd.f32 %v4283, 1.0
    %v4335 = vadd.f32 %v4284, 1.0
    %v4336 = vadd.f32 %v4285, 1.0
    %v4337 = vadd.f32 %v4286, 1.0
    %v4338 = vadd.f32 %v4287, 1.0
    %v4339 = vadd.f32 %v4288, 1.0
    %v4340 = vadd.f32 %v4289, 1.0
    %v4341 = vadd.f32 %v4290, 1.0
    %v4342 = vadd.f32 %v4291, 1.0
    %v4343 = vadd.f32 %v4292, 1.0
    %v4344 = vadd.f32 %v4293, 1.0
    %v4345 = vadd.f32 %v4294, 1.0
    %v4346 = vadd.f32 %v4295, 1.0
    %v4347 = vadd.f32 %v4296, 1.0
    %v4348 = vadd.f32 %v4297, 1.0
    %v4349 = vadd.f32 %v4298, 1.0
    %v4350 = vmul.f32 %v4299, 0.00039215686
    %v4351 = vadd.f32 %v4350, 0.0
    %v4352 = vmul.f32 %v4300, 0.003867576
    %v4353 = vadd.f32 %v4351, %v4352
    %v4354 = vmul.f32 %v4301, 0.007891871
    %v4355 = vadd.f32 %v4353, %v4354
    %v4356 = vmul.f32 %v4302, 0.0117731765
    %v4357 = vadd.f32 %v4355, %v4356
    %v4358 = vmul.f32 %v4303, 0.015619337
    %v4359 = vadd.f32 %v4357, %v4358
    %v4360 = vmul.f32 %v4304, 0.019425694
    %v4361 = vadd.f32 %v4359, %v4360
    %v4362 = vmul.f32 %v4305, 0.023118526
    %v4363 = vadd.f32 %v4361, %v4362
    %v4364 = vmul.f32 %v4306, 0.026765052
    %v4365 = vadd.f32 %v4363, %v4364
    %v4366 = vmul.f32 %v4307, 0.030256184
    %v4367 = vadd.f32 %v4365, %v4366
    %v4368 = vmul.f32 %v4308, 0.033680797
    %v4369 = vadd.f32 %v4367, %v4368
    %v4370 = vmul.f32 %v4309, 0.036917467
    %v4371 = vadd.f32 %v4369, %v4370
    %v4372 = vmul.f32 %v4310, 0.040064972
    %v4373 = vadd.f32 %v4371, %v4372
    %v4374 = vmul.f32 %v4311, 0.042996716
    %v4375 = vadd.f32 %v4373, %v4374
    %v4376 = vmul.f32 %v4312, 0.045817256
    %v4377 = vadd.f32 %v4375, %v4376
    %v4378 = vmul.f32 %v4313, 0.048397843
    %v4379 = vadd.f32 %v4377, %v4378
    %v4380 = vmul.f32 %v4314, 0.05084707
    %v4381 = vadd.f32 %v4379, %v4380
    %v4382 = vmul.f32 %v4315, 0.053035576
    %v4383 = vadd.f32 %v4381, %v4382
    %v4384 = vmul.f32 %v4316, 0.055075146
    %v4385 = vadd.f32 %v4383, %v4384
    %v4386 = vmul.f32 %v4317, 0.056836735
    %v4387 = vadd.f32 %v4385, %v4386
    %v4388 = vmul.f32 %v4318, 0.058434848
    %v4389 = vadd.f32 %v4387, %v4388
    %v4390 = vmul.f32 %v4319, 0.059741344
    %v4391 = vadd.f32 %v4389, %v4390
    %v4392 = vmul.f32 %v4320, 0.0608732
    %v4393 = vadd.f32 %v4391, %v4392
    %v4394 = vmul.f32 %v4321, 0.061703585
    %v4395 = vadd.f32 %v4393, %v4394
    %v4396 = vmul.f32 %v4322, 0.062351763
    %v4397 = vadd.f32 %v4395, %v4396
    %v4398 = vmul.f32 %v4323, 0.0626925
    %v4399 = vadd.f32 %v4397, %v4398
    %v4400 = vmul.f32 %v4324, 0.06284722
    %v4401 = vadd.f32 %v4399, %v4400
    %v4402 = vmul.f32 %v4325, 0.0626925
    %v4403 = vadd.f32 %v4401, %v4402
    %v4404 = vmul.f32 %v4326, 0.062351763
    %v4405 = vadd.f32 %v4403, %v4404
    %v4406 = vmul.f32 %v4327, 0.061703585
    %v4407 = vadd.f32 %v4405, %v4406
    %v4408 = vmul.f32 %v4328, 0.0608732
    %v4409 = vadd.f32 %v4407, %v4408
    %v4410 = vmul.f32 %v4329, 0.059741344
    %v4411 = vadd.f32 %v4409, %v4410
    %v4412 = vmul.f32 %v4330, 0.058434848
    %v4413 = vadd.f32 %v4411, %v4412
    %v4414 = vmul.f32 %v4331, 0.056836735
    %v4415 = vadd.f32 %v4413, %v4414
    %v4416 = vmul.f32 %v4332, 0.055075146
    %v4417 = vadd.f32 %v4415, %v4416
    %v4418 = vmul.f32 %v4333, 0.053035576
    %v4419 = vadd.f32 %v4417, %v4418
    %v4420 = vmul.f32 %v4334, 0.05084707
    %v4421 = vadd.f32 %v4419, %v4420
    %v4422 = vmul.f32 %v4335, 0.048397843
    %v4423 = vadd.f32 %v4421, %v4422
    %v4424 = vmul.f32 %v4336, 0.045817256
    %v4425 = vadd.f32 %v4423, %v4424
    %v4426 = vmul.f32 %v4337, 0.042996716
    %v4427 = vadd.f32 %v4425, %v4426
    %v4428 = vmul.f32 %v4338, 0.040064972
    %v4429 = vadd.f32 %v4427, %v4428
    %v4430 = vmul.f32 %v4339, 0.036917467
    %v4431 = vadd.f32 %v4429, %v4430
    %v4432 = vmul.f32 %v4340, 0.033680797
    %v4433 = vadd.f32 %v4431, %v4432
    %v4434 = vmul.f32 %v4341, 0.030256184
    %v4435 = vadd.f32 %v4433, %v4434
    %v4436 = vmul.f32 %v4342, 0.026765052
    %v4437 = vadd.f32 %v4435, %v4436
    %v4438 = vmul.f32 %v4343, 0.023118526
    %v4439 = vadd.f32 %v4437, %v4438
    %v4440 = vmul.f32 %v4344, 0.019425694
    %v4441 = vadd.f32 %v4439, %v4440
    %v4442 = vmul.f32 %v4345, 0.015619337
    %v4443 = vadd.f32 %v4441, %v4442
    %v4444 = vmul.f32 %v4346, 0.0117731765
    %v4445 = vadd.f32 %v4443, %v4444
    %v4446 = vmul.f32 %v4347, 0.007891871
    %v4447 = vadd.f32 %v4445, %v4446
    %v4448 = vmul.f32 %v4348, 0.003867576
    %v4449 = vadd.f32 %v4447, %v4448
    %v4450 = vmul.f32 %v4349, 0.00039215686
    %v4451 = vadd.f32 %v4449, %v4450
    %v4452 = vmul.f32 %v73, %v4451
    %v4453 = vstv %s46
    %v4454 = vmul.f32 %v4452, %v4453
    %v4455 = vstv %s45
    %v4456 = vadd.f32 %v4454, %v4455
    %4457 = vst [vmem:[#allocation6] sm:$0x1] %v4456
    // Predicated region
    $region38: #{tpu_custom_call.1} parent=1 // pred_check
      _
    $region39: #{tpu_custom_call.1} parent=1 // pred_check_branch
      %4459 = sbr.rel (0) target = $region41
    $region40: #{tpu_custom_call.1} parent=1 // pred_region
      %4461 = vsyncadd [#allocation4], 0
      %s4463 = sshll.u32 [#allocation6], 4
      %s4464 = int_to_ptr.vmem [resolvable:$true] %s4463
      %s4465 = sshll.u32 %s8, 4
      %s4466 = int_to_ptr.hbm [resolvable:$true] %s4465
      %4468 = dma.vmem_to_hbm [thread:$0]  %s4464, 16, %s4466, [#allocation4]
    $region41: #{tpu_custom_call.1} parent=1 // pred_fallthru
      _
    // Predicated region
    $region42: #{tpu_custom_call.1} parent=1 // pred_check
      _
    $region43: #{tpu_custom_call.1} parent=1 // pred_check_branch
      %4470 = sbr.rel (0) target = $region45
    $region44: #{tpu_custom_call.1} parent=1 // pred_region
      %4472 = dma.done [#allocation4], 16
    $region45: #{tpu_custom_call.1} parent=1 // pred_fallthru
      _
    %4473 = vsyncpa [#allocation4], 1
    %4474 = vsyncpa [#allocation5], 1

</llo_original>
